<compile_context>
chip_gen: v6e
topology: v6e:2x2x1
jax: 0.10.0
libtpu: 0.0.40
codegen_flags: <defaults>
</compile_context>

<pallas_src>
import functools

import jax
import jax.numpy as jnp
from jax.experimental import pallas as pl
from jax.experimental.pallas import tpu as pltpu

LANE = 128
_EPS = 1e-8
_VMEM_LIMIT = 48 * 1024 * 1024   # stay under v7x's 64 MiB physical VMEM; fine on v5e/v6e


def _round_up(x, m):
    return ((x + m - 1) // m) * m


# ----------------------------- in-kernel helpers -----------------------------

def _prelu(x, alpha):
    return jnp.where(x >= 0.0, x, x * alpha)


def _gln(x, gamma, beta, c_true, eps=_EPS):
    """GroupNorm(num_groups=1) over the whole (frames, channels) slab.

    Channels >= c_true are zero-padded lanes (inputs/gamma/beta are zero there), so
    plain sums equal sums over the true channels; divide by the true count.  The affine
    is folded into a single scale/shift row -> 2 VPU ops per element.
    """
    cnt = x.shape[0] * c_true
    s1 = jnp.sum(x, axis=(0, 1), keepdims=True)
    s2 = jnp.sum(x * x, axis=(0, 1), keepdims=True)
    mean = s1 / cnt
    var = jnp.maximum(s2 / cnt - mean * mean, 0.0)
    scale = jax.lax.rsqrt(var + eps) * gamma          # (1, C)
    shift = beta - mean * scale                       # (1, C)
    return x * scale + shift


# ------------------------------- Pallas kernels -------------------------------

def _input_stage_kernel(frames_ref, enc_w_ref, rect_a_ref, g_ref, b_ref,
                        w_in_ref, b_in_ref, feats_ref, state_ref, *, n_true):
    """Encoder matmul + Rectifier(PReLU) + gLN + bottleneck 1x1 (one batch element)."""
    feats = jnp.dot(frames_ref[0], enc_w_ref[...],
                    preferred_element_type=jnp.float32)              # (F, Np) f32
    feats = _prelu(feats, rect_a_ref[...])
    feats_ref[0] = feats.astype(jnp.bfloat16)                        # bf16 to HBM
    y = _gln(feats, g_ref[...], b_ref[...], n_true)
    # Bottleneck projection lands in the left half of the [h | skip_sum] state.
    state_ref[0] = jnp.dot(y.astype(jnp.bfloat16), w_in_ref[...],
                           preferred_element_type=jnp.float32) + b_in_ref[...]


def _tcn_stack_kernel(dil_ref, pad_ref, state_in_ref,
                      w1_ref, b1_ref, a1_ref, n1g_ref, n1b_ref,
                      dw_w_ref, dw_b_ref, a2_ref, n2g_ref, n2b_ref,
                      wrs_ref, brs_ref, out_ref, zp_ref,
                      *, bp, h_true, ksize, max_pad):
    """One grid step = one TCN block; out_ref holds the VMEM-resident [h | skip_sum]."""
    k = pl.program_id(1)
    n_frames = out_ref.shape[1]
    hp = zp_ref.shape[1]

    @pl.when(k == 0)
    def _():
        # Initialize the resident accumulator for this batch element and zero the
        # static halo regions of the depthwise scratch once (never overwritten).
        out_ref[...] = state_in_ref[...]
        zp_ref[:max_pad, :] = jnp.zeros((max_pad, hp), jnp.float32)
        zp_ref[max_pad + n_frames:, :] = jnp.zeros((max_pad, hp), jnp.float32)

    state = out_ref[0]                                               # (F, Bp+Sp) f32
    h = state[:, :bp]                                                # residual path

    z = jnp.dot(h.astype(jnp.bfloat16), w1_ref[0],
                preferred_element_type=jnp.float32) + b1_ref[0]
    z = _prelu(z, a1_ref[0])
    z = _gln(z, n1g_ref[0], n1b_ref[0], h_true)

    # Dilated depthwise conv along frames: stage z once at a sublane-aligned offset,
    # then read the K taps back at dilation-dependent offsets (dilation from SMEM).
    zp_ref[max_pad:max_pad + n_frames, :] = z
    d = dil_ref[k]
    pad = pad_ref[k]
    acc = jnp.zeros_like(z)
    for p in range(ksize):                                           # static unroll
        off = max_pad - pad + p * d
        acc = acc + zp_ref[pl.ds(off, n_frames), :] * dw_w_ref[0, p:p + 1, :]
    acc = _prelu(acc + dw_b_ref[0], a2_ref[0])
    acc = _gln(acc, n2g_ref[0], n2b_ref[0], h_true)

    # Concatenated residual|skip projection: residual add + skip accumulation fused.
    proj = jnp.dot(acc.astype(jnp.bfloat16), wrs_ref[0],
                   preferred_element_type=jnp.float32) + brs_ref[0]
    out_ref[0] = state + proj


def _output_stage_kernel(state_ref, feats_ref, out_a_ref, out_w_ref, out_b_ref,
                         dec_w_ref, bal_ref, out_ref, *, bp, min_val, max_val):
    """PReLU + mask 1x1 + sigmoid + masking + decoder 1x1 + rebalance + Hardtanh."""
    skip = state_ref[0][:, bp:]                                      # (F, Sp) f32
    s = _prelu(skip, out_a_ref[...])
    logits = jnp.dot(s.astype(jnp.bfloat16), out_w_ref[...],
                     preferred_element_type=jnp.float32) + out_b_ref[...]
    mask = jax.nn.sigmoid(logits)                                    # (F, Np)
    masked = feats_ref[0].astype(jnp.float32) * mask
    # Lane-dense decoder: (F, Np) @ (Np, Mp) -> (F, Mp); transpose of the tiny
    # M-channel result happens outside the kernel.
    y = jnp.dot(masked.astype(jnp.bfloat16), dec_w_ref[...],
                preferred_element_type=jnp.float32)
    y = y * bal_ref[...]                                             # ChannelRebalancer
    out_ref[0] = jnp.clip(y, min_val, max_val)                       # Hardtanh


# --------------------------------- wrappers ----------------------------------

def _weight_spec(shape):
    nd = len(shape)
    return pl.BlockSpec(shape, lambda b: (0,) * nd)   # constant block -> DMA'd once


def input_stage(frames, pp, *, n_true):
    bsz, f, l = frames.shape
    np_ = pp["enc_w"].shape[1]
    bsp = pp["mg_in_w"].shape[1]
    return pl.pallas_call(
        functools.partial(_input_stage_kernel, n_true=n_true),
        out_shape=(jax.ShapeDtypeStruct((bsz, f, np_), jnp.bfloat16),
                   jax.ShapeDtypeStruct((bsz, f, bsp), jnp.float32)),
        grid=(bsz,),
        in_specs=[
            pl.BlockSpec((1, f, l), lambda b: (b, 0, 0)),
            _weight_spec(pp["enc_w"].shape),
            _weight_spec(pp["rect_alpha"].shape),
            _weight_spec(pp["mg_norm_g"].shape),
            _weight_spec(pp["mg_norm_b"].shape),
            _weight_spec(pp["mg_in_w"].shape),
            _weight_spec(pp["mg_in_b"].shape),
        ],
        out_specs=(pl.BlockSpec((1, f, np_), lambda b: (b, 0, 0)),
                   pl.BlockSpec((1, f, bsp), lambda b: (b, 0, 0))),
        compiler_params=pltpu.CompilerParams(
            dimension_semantics=("parallel",), vmem_limit_bytes=_VMEM_LIMIT),
    )(frames, pp["enc_w"], pp["rect_alpha"], pp["mg_norm_g"], pp["mg_norm_b"],
      pp["mg_in_w"], pp["mg_in_b"])


_STACK_KEYS = ("w1", "b1", "a1", "n1g", "n1b",
               "dw_w", "dw_b", "a2", "n2g", "n2b", "wrs", "brs")


def tcn_stack(state, tcn, *, ksize, bp, h_true, max_pad):
    bsz, f, bsp = state.shape
    nb = tcn["w1"].shape[0]
    hp = tcn["w1"].shape[2]
    grid_spec = pltpu.PrefetchScalarGridSpec(
        num_scalar_prefetch=2,                      # dilation + pad tables (SMEM)
        grid=(bsz, nb),
        in_specs=[pl.BlockSpec((1, f, bsp), lambda b, k, dil, pad: (b, 0, 0))]
                + [pl.BlockSpec((1,) + tcn[key].shape[1:],
                                lambda b, k, dil, pad: (k, 0, 0))
                   for key in _STACK_KEYS],
        out_specs=pl.BlockSpec((1, f, bsp), lambda b, k, dil, pad: (b, 0, 0)),
        scratch_shapes=[pltpu.VMEM((f + 2 * max_pad, hp), jnp.float32)],
    )
    return pl.pallas_call(
        functools.partial(_tcn_stack_kernel, bp=bp, h_true=h_true,
                          ksize=ksize, max_pad=max_pad),
        out_shape=jax.ShapeDtypeStruct((bsz, f, bsp), jnp.float32),
        grid_spec=grid_spec,
        compiler_params=pltpu.CompilerParams(
            dimension_semantics=("parallel", "arbitrary"),
            vmem_limit_bytes=_VMEM_LIMIT),
    )(tcn["dil"], tcn["pad"], state, *(tcn[k] for k in _STACK_KEYS))


def output_stage(state, feats, pp, *, bp):
    bsz, f, bsp = state.shape
    np_ = feats.shape[2]
    mp = pp["dec_w"].shape[1]
    return pl.pallas_call(
        functools.partial(_output_stage_kernel, bp=bp, min_val=1e-6, max_val=1.0),
        out_shape=jax.ShapeDtypeStruct((bsz, f, mp), jnp.float32),
        grid=(bsz,),
        in_specs=[
            pl.BlockSpec((1, f, bsp), lambda b: (b, 0, 0)),
            pl.BlockSpec((1, f, np_), lambda b: (b, 0, 0)),
            _weight_spec(pp["out_alpha"].shape),
            _weight_spec(pp["out_w"].shape),
            _weight_spec(pp["out_b"].shape),
            _weight_spec(pp["dec_w"].shape),
            _weight_spec(pp["balance"].shape),
        ],
        out_specs=pl.BlockSpec((1, f, mp), lambda b: (b, 0, 0)),
        compiler_params=pltpu.CompilerParams(
            dimension_semantics=("parallel",), vmem_limit_bytes=_VMEM_LIMIT),
    )(state, feats, pp["out_alpha"], pp["out_w"], pp["out_b"],
      pp["dec_w"], pp["balance"])


# --------------------------- parameters / forward ---------------------------

def init_params(key, *, L, N, P, B, S, H, X, R, M):
    keys = jax.random.split(key, 16 + 12 * R * X)
    counter = [0]

    def nrm(shape, scale=0.1):
        k = keys[counter[0]]
        counter[0] += 1
        return scale * jax.random.normal(k, shape, jnp.float32)

    params = {
        "enc_w": nrm((L, N)),                      # Conv1d(1, N, L, bias=False)
        "rect_alpha": jnp.full((N,), 0.25, jnp.float32),
        "mg_norm_g": jnp.ones((N,), jnp.float32),
        "mg_norm_b": jnp.zeros((N,), jnp.float32),
        "mg_in_w": nrm((N, B)),
        "mg_in_b": nrm((B,), 0.01),
        "out_alpha": jnp.full((S,), 0.25, jnp.float32),
        "out_w": nrm((S, N)),
        "out_b": nrm((N,), 0.01),
        "dec_w": nrm((N, M)),                      # ConvTranspose1d(N, M, 1, bias=False)
        "balance_scale": 1.0 + nrm((M,), 0.05),
        "blocks": [],
    }
    for _ in range(R * X):
        blk = {
            "w1": nrm((B, H)), "b1": nrm((H,), 0.01),
            "a1": jnp.full((H,), 0.25, jnp.float32),
            "n1g": jnp.ones((H,), jnp.float32), "n1b": jnp.zeros((H,), jnp.float32),
            "dw_w": nrm((P, H)), "dw_b": nrm((H,), 0.01),
            "a2": jnp.full((H,), 0.25, jnp.float32),
            "n2g": jnp.ones((H,), jnp.float32), "n2b": jnp.zeros((H,), jnp.float32),
            "wres": nrm((H, B)), "bres": nrm((B,), 0.01),
            "wskip": nrm((H, S)), "bskip": nrm((S,), 0.01),
        }
        params["blocks"].append(blk)
    return params


def prepare_params(params, *, L, N, P, B, S, H, X, R, M):
    """Pad channel dims to the 128-lane width, pre-cast matmul weights to bf16 once,
    and stack the per-block TCN weights along a leading block axis."""
    np_ = _round_up(N, LANE)
    bp = _round_up(B, LANE)
    sp = _round_up(S, LANE)
    hp = _round_up(H, LANE)
    mp = _round_up(M, LANE)
    bsp = bp + sp
    nb = R * X

    def pad_mat(a, r, c, dtype=jnp.bfloat16):
        out = jnp.zeros((r, c), jnp.float32).at[:a.shape[0], :a.shape[1]].set(a)
        return out.astype(dtype)

    def pad_row(v, c):
        return jnp.zeros((1, c), jnp.float32).at[0, :v.shape[0]].set(v)

    pp = {
        "enc_w": pad_mat(params["enc_w"], L, np_),
        "rect_alpha": pad_row(params["rect_alpha"], np_),
        "mg_norm_g": pad_row(params["mg_norm_g"], np_),
        "mg_norm_b": pad_row(params["mg_norm_b"], np_),
        # Bottleneck projects straight into the [h | skip_sum] state (skip half zero).
        "mg_in_w": pad_mat(params["mg_in_w"], np_, bsp),
        "mg_in_b": pad_row(params["mg_in_b"], bsp),
        "out_alpha": pad_row(params["out_alpha"], sp),
        "out_w": pad_mat(params["out_w"], sp, np_),
        "out_b": pad_row(params["out_b"], np_),
        "dec_w": pad_mat(params["dec_w"], np_, mp),        # (Np, Mp) lane-dense decoder
        "balance": pad_row(params["balance_scale"], mp),
    }

    stack = {k: [] for k in _STACK_KEYS}
    for blk in params["blocks"]:
        wrs = jnp.zeros((hp, bsp), jnp.float32)
        wrs = wrs.at[:H, :B].set(blk["wres"])
        wrs = wrs.at[:H, bp:bp + S].set(blk["wskip"])
        brs = jnp.zeros((1, bsp), jnp.float32)
        brs = brs.at[0, :B].set(blk["bres"])
        brs = brs.at[0, bp:bp + S].set(blk["bskip"])
        stack["w1"].append(pad_mat(blk["w1"], bp, hp))
        stack["b1"].append(pad_row(blk["b1"], hp))
        stack["a1"].append(pad_row(blk["a1"], hp))
        stack["n1g"].append(pad_row(blk["n1g"], hp))
        stack["n1b"].append(pad_row(blk["n1b"], hp))
        stack["dw_w"].append(pad_mat(blk["dw_w"], P, hp, dtype=jnp.float32))
        stack["dw_b"].append(pad_row(blk["dw_b"], hp))
        stack["a2"].append(pad_row(blk["a2"], hp))
        stack["n2g"].append(pad_row(blk["n2g"], hp))
        stack["n2b"].append(pad_row(blk["n2b"], hp))
        stack["wrs"].append(wrs.astype(jnp.bfloat16))      # concat(res | skip)
        stack["brs"].append(brs)
    tcn = {k: jnp.stack(v, axis=0) for k, v in stack.items()}
    dil = jnp.array([2 ** (i % X) for i in range(nb)], dtype=jnp.int32)
    tcn["dil"] = dil
    tcn["pad"] = (dil * (P - 1)) // 2
    pp["tcn"] = tcn
    return pp


def deepace_forward(pp, x, *, L, N, P, B, S, H, X, R, M):
    if x.ndim != 3 or x.shape[1] != 1:
        raise ValueError(f"Expected (batch, 1, frames), got {x.shape}")
    stride = L // 2
    bsz, _, t0 = x.shape
    sig = x[:, 0, :].astype(jnp.float32)

    # pad_signal (rest + aux padding), then the encoder Conv1d's own padding=stride.
    rest = L - (stride + t0 % L) % L
    if rest > 0:
        sig = jnp.pad(sig, ((0, 0), (0, rest)))
    sig = jnp.pad(sig, ((0, 0), (stride, stride)))   # pad_signal aux pad
    sig = jnp.pad(sig, ((0, 0), (stride, stride)))   # encoder conv padding=stride

    t_eff = sig.shape[1]
    f = (t_eff - L) // stride + 1
    idx = jnp.arange(f)[:, None] * stride + jnp.arange(L)[None, :]
    frames = sig[:, idx].astype(jnp.bfloat16)        # (bsz, f, L) strided framing (XLA glue)

    bp = _round_up(B, LANE)
    max_pad = _round_up(max((2 ** (X - 1)) * (P - 1) // 2, 1), 8)

    # Encoder + Rectifier + input gLN + bottleneck, fused.
    feats, state = input_stage(frames, pp, n_true=N)

    # Whole TCN stack as one pallas_call; state carries [h | skip_sum] in VMEM.
    state = tcn_stack(state, pp["tcn"], ksize=P, bp=bp, h_true=H, max_pad=max_pad)

    # Mask head + masking + decoder + rebalance + Hardtanh, fused, lane-dense (F, Mp).
    out_full = output_stage(state, feats, pp, bp=bp)

    # Tiny transpose + trim on the small final result (XLA glue).
    out = jnp.transpose(out_full[:, :, :M], (0, 2, 1))       # (bsz, M, F)
    frames_left = L // stride
    frames_right = -(-(rest + stride) // stride)
    if frames_right > 0:
        out = out[..., frames_left:f - frames_right]
    else:
        out = out[..., frames_left:]
    return out


# ----------------------------------- main -----------------------------------

if __name__ == "__main__":
    # Small hyperparameters consistent with the module's __init__ signature.
    L, N, P, Bf, S, H, X, R, M = 16, 64, 3, 32, 32, 64, 2, 2, 16

    params = init_params(jax.random.PRNGKey(0),
                         L=L, N=N, P=P, B=Bf, S=S, H=H, X=X, R=R, M=M)
    pp = prepare_params(params, L=L, N=N, P=P, B=Bf, S=S, H=H, X=X, R=R, M=M)
    x = jax.random.normal(jax.random.PRNGKey(1), (2, 1, 128), jnp.float32)

    fwd = jax.jit(functools.partial(deepace_forward,
                                    L=L, N=N, P=P, B=Bf, S=S, H=H, X=X, R=R, M=M))
    out = jax.block_until_ready(fwd(pp, x))

    assert out.shape == (2, M, 16), out.shape
    assert bool(jnp.all(jnp.isfinite(out)))
    assert bool(jnp.all(out >= 1e-6)) and bool(jnp.all(out <= 1.0))
    print("KERNEL_OK")
</pallas_src>

<mosaic_0001>
module attributes {stable_mosaic.version = 11 : i64} {
  func.func @_input_stage_kernel(%arg0: i32, %arg1: memref<1x20x16xbf16, #tpu.memory_space<vmem>>, %arg2: memref<16x128xbf16, #tpu.memory_space<vmem>>, %arg3: memref<1x128xf32, #tpu.memory_space<vmem>>, %arg4: memref<1x128xf32, #tpu.memory_space<vmem>>, %arg5: memref<1x128xf32, #tpu.memory_space<vmem>>, %arg6: memref<128x256xbf16, #tpu.memory_space<vmem>>, %arg7: memref<1x256xf32, #tpu.memory_space<vmem>>, %arg8: memref<1x20x128xbf16, #tpu.memory_space<vmem>>, %arg9: memref<1x20x256xf32, #tpu.memory_space<vmem>>) attributes {dimension_semantics = [#tpu.dimension_semantics<parallel>], iteration_bounds = array<i64: 2>, scalar_prefetch = 0 : i64, scratch_operands = 0 : i64, tpu.core_type = #tpu.core_type<tc>, window_params = [{transform_indices = @transform_0, window_bounds = array<i64: 1, 20, 16>}, {pipeline_mode = #tpu.pipeline_mode<synchronous>, transform_indices = @transform_1, window_bounds = array<i64: 16, 128>}, {pipeline_mode = #tpu.pipeline_mode<synchronous>, transform_indices = @transform_2, window_bounds = array<i64: 1, 128>}, {pipeline_mode = #tpu.pipeline_mode<synchronous>, transform_indices = @transform_3, window_bounds = array<i64: 1, 128>}, {pipeline_mode = #tpu.pipeline_mode<synchronous>, transform_indices = @transform_4, window_bounds = array<i64: 1, 128>}, {pipeline_mode = #tpu.pipeline_mode<synchronous>, transform_indices = @transform_5, window_bounds = array<i64: 128, 256>}, {pipeline_mode = #tpu.pipeline_mode<synchronous>, transform_indices = @transform_6, window_bounds = array<i64: 1, 256>}, {transform_indices = @transform_7, window_bounds = array<i64: 1, 20, 128>}, {transform_indices = @transform_8, window_bounds = array<i64: 1, 20, 256>}]} {
    %c0 = arith.constant 0 : index
    %c0_0 = arith.constant 0 : index
    %c0_1 = arith.constant 0 : index
    %0 = vector.load %arg1[%c0, %c0_0, %c0_1] : memref<1x20x16xbf16, #tpu.memory_space<vmem>>, vector<1x20x16xbf16>
    %1 = vector.shape_cast %0 : vector<1x20x16xbf16> to vector<20x16xbf16>
    %c0_2 = arith.constant 0 : index
    %c0_3 = arith.constant 0 : index
    %2 = vector.load %arg2[%c0_2, %c0_3] : memref<16x128xbf16, #tpu.memory_space<vmem>>, vector<16x128xbf16>
    %cst = arith.constant dense<0.000000e+00> : vector<20x128xf32>
    %3 = tpu.matmul %1, %2, %cst {dimension_numbers = #tpu.dot_dimension_numbers<[1], [0], [0], [1], [0, 0, 1, 1], [], []>} : vector<20x16xbf16>, vector<16x128xbf16>, vector<20x128xf32> -> vector<20x128xf32>
    %c0_4 = arith.constant 0 : index
    %c0_5 = arith.constant 0 : index
    %4 = vector.load %arg3[%c0_4, %c0_5] : memref<1x128xf32, #tpu.memory_space<vmem>>, vector<1x128xf32>
    %cst_6 = arith.constant 0.000000e+00 : f32
    %5 = vector.broadcast %cst_6 : f32 to vector<20x128xf32>
    %6 = arith.cmpf oge, %3, %5 : vector<20x128xf32>
    %7 = vector.broadcast %4 : vector<1x128xf32> to vector<20x128xf32>
    %8 = arith.mulf %3, %7 : vector<20x128xf32>
    %9 = arith.select %6, %3, %8 : vector<20x128xi1>, vector<20x128xf32>
    %10 = arith.truncf %9 : vector<20x128xf32> to vector<20x128xbf16>
    %c0_7 = arith.constant 0 : index
    %c0_8 = arith.constant 0 : index
    %c0_9 = arith.constant 0 : index
    %11 = vector.load %arg8[%c0_7, %c0_8, %c0_9] : memref<1x20x128xbf16, #tpu.memory_space<vmem>>, vector<1x20x128xbf16>
    %12 = vector.shape_cast %11 : vector<1x20x128xbf16> to vector<20x128xbf16>
    %13 = vector.shape_cast %10 : vector<20x128xbf16> to vector<1x20x128xbf16>
    tpu.vector_store %arg8[%c0_7, %c0_8, %c0_9], %13 {strides = array<i32>} : memref<1x20x128xbf16, #tpu.memory_space<vmem>>, vector<1x20x128xbf16>,
    %c0_10 = arith.constant 0 : index
    %c0_11 = arith.constant 0 : index
    %14 = vector.load %arg4[%c0_10, %c0_11] : memref<1x128xf32, #tpu.memory_space<vmem>>, vector<1x128xf32>
    %c0_12 = arith.constant 0 : index
    %c0_13 = arith.constant 0 : index
    %15 = vector.load %arg5[%c0_12, %c0_13] : memref<1x128xf32, #tpu.memory_space<vmem>>, vector<1x128xf32>
    %16 = vector.shape_cast %9 : vector<20x128xf32> to vector<1x20x128xf32>
    %cst_14 = arith.constant dense<0.000000e+00> : vector<1xf32>
    %17 = vector.multi_reduction <add>, %16, %cst_14 [1, 2] : vector<1x20x128xf32> to vector<1xf32>
    %18 = vector.shape_cast %17 : vector<1xf32> to vector<1x1x1xf32>
    %19 = vector.extract %18[0, 0, 0] : f32 from vector<1x1x1xf32>
    %20 = vector.broadcast %19 : f32 to vector<1x1xf32>
    %21 = arith.mulf %9, %9 : vector<20x128xf32>
    %22 = vector.shape_cast %21 : vector<20x128xf32> to vector<1x20x128xf32>
    %cst_15 = arith.constant dense<0.000000e+00> : vector<1xf32>
    %23 = vector.multi_reduction <add>, %22, %cst_15 [1, 2] : vector<1x20x128xf32> to vector<1xf32>
    %24 = vector.shape_cast %23 : vector<1xf32> to vector<1x1x1xf32>
    %25 = vector.extract %24[0, 0, 0] : f32 from vector<1x1x1xf32>
    %26 = vector.broadcast %25 : f32 to vector<1x1xf32>
    %cst_16 = arith.constant 1.280000e+03 : f32
    %27 = vector.broadcast %cst_16 : f32 to vector<1x1xf32>
    %28 = arith.divf %20, %27 : vector<1x1xf32>
    %cst_17 = arith.constant 1.280000e+03 : f32
    %29 = vector.broadcast %cst_17 : f32 to vector<1x1xf32>
    %30 = arith.divf %26, %29 : vector<1x1xf32>
    %31 = arith.mulf %28, %28 : vector<1x1xf32>
    %32 = arith.subf %30, %31 : vector<1x1xf32>
    %cst_18 = arith.constant 0.000000e+00 : f32
    %33 = vector.broadcast %cst_18 : f32 to vector<1x1xf32>
    %34 = arith.maximumf %32, %33 : vector<1x1xf32>
    %cst_19 = arith.constant 9.99999993E-9 : f32
    %35 = vector.broadcast %cst_19 : f32 to vector<1x1xf32>
    %36 = arith.addf %34, %35 : vector<1x1xf32>
    %37 = math.rsqrt %36 : vector<1x1xf32>
    %38 = vector.broadcast %37 : vector<1x1xf32> to vector<1x128xf32>
    %39 = arith.mulf %38, %14 : vector<1x128xf32>
    %40 = vector.broadcast %28 : vector<1x1xf32> to vector<1x128xf32>
    %41 = arith.mulf %40, %39 : vector<1x128xf32>
    %42 = arith.subf %15, %41 : vector<1x128xf32>
    %43 = vector.broadcast %39 : vector<1x128xf32> to vector<20x128xf32>
    %44 = arith.mulf %9, %43 : vector<20x128xf32>
    %45 = vector.broadcast %42 : vector<1x128xf32> to vector<20x128xf32>
    %46 = arith.addf %44, %45 : vector<20x128xf32>
    %47 = arith.truncf %46 : vector<20x128xf32> to vector<20x128xbf16>
    %c0_20 = arith.constant 0 : index
    %c0_21 = arith.constant 0 : index
    %48 = vector.load %arg6[%c0_20, %c0_21] : memref<128x256xbf16, #tpu.memory_space<vmem>>, vector<128x256xbf16>
    %cst_22 = arith.constant dense<0.000000e+00> : vector<20x256xf32>
    %49 = tpu.matmul %47, %48, %cst_22 {dimension_numbers = #tpu.dot_dimension_numbers<[1], [0], [0], [1], [0, 0, 1, 1], [], []>} : vector<20x128xbf16>, vector<128x256xbf16>, vector<20x256xf32> -> vector<20x256xf32>
    %c0_23 = arith.constant 0 : index
    %c0_24 = arith.constant 0 : index
    %50 = vector.load %arg7[%c0_23, %c0_24] : memref<1x256xf32, #tpu.memory_space<vmem>>, vector<1x256xf32>
    %51 = vector.broadcast %50 : vector<1x256xf32> to vector<20x256xf32>
    %52 = arith.addf %49, %51 : vector<20x256xf32>
    %c0_25 = arith.constant 0 : index
    %c0_26 = arith.constant 0 : index
    %c0_27 = arith.constant 0 : index
    %53 = vector.load %arg9[%c0_25, %c0_26, %c0_27] : memref<1x20x256xf32, #tpu.memory_space<vmem>>, vector<1x20x256xf32>
    %54 = vector.shape_cast %53 : vector<1x20x256xf32> to vector<20x256xf32>
    %55 = vector.shape_cast %52 : vector<20x256xf32> to vector<1x20x256xf32>
    tpu.vector_store %arg9[%c0_25, %c0_26, %c0_27], %55 {strides = array<i32>} : memref<1x20x256xf32, #tpu.memory_space<vmem>>, vector<1x20x256xf32>,
    return
  }
  func.func @transform_0(%arg0: i32) -> (i32, i32, i32) {
    %c0_i32 = arith.constant 0 : i32
    %c0_i32_0 = arith.constant 0 : i32
    %c0_i32_1 = arith.constant 0 : i32
    return %arg0, %c0_i32, %c0_i32_0 : i32, i32, i32
  }
  func.func @transform_1(%arg0: i32) -> (i32, i32) {
    %c0_i32 = arith.constant 0 : i32
    %c0_i32_0 = arith.constant 0 : i32
    %c0_i32_1 = arith.constant 0 : i32
    return %c0_i32, %c0_i32_0 : i32, i32
  }
  func.func @transform_2(%arg0: i32) -> (i32, i32) {
    %c0_i32 = arith.constant 0 : i32
    %c0_i32_0 = arith.constant 0 : i32
    %c0_i32_1 = arith.constant 0 : i32
    return %c0_i32, %c0_i32_0 : i32, i32
  }
  func.func @transform_3(%arg0: i32) -> (i32, i32) {
    %c0_i32 = arith.constant 0 : i32
    %c0_i32_0 = arith.constant 0 : i32
    %c0_i32_1 = arith.constant 0 : i32
    return %c0_i32, %c0_i32_0 : i32, i32
  }
  func.func @transform_4(%arg0: i32) -> (i32, i32) {
    %c0_i32 = arith.constant 0 : i32
    %c0_i32_0 = arith.constant 0 : i32
    %c0_i32_1 = arith.constant 0 : i32
    return %c0_i32, %c0_i32_0 : i32, i32
  }
  func.func @transform_5(%arg0: i32) -> (i32, i32) {
    %c0_i32 = arith.constant 0 : i32
    %c0_i32_0 = arith.constant 0 : i32
    %c0_i32_1 = arith.constant 0 : i32
    return %c0_i32, %c0_i32_0 : i32, i32
  }
  func.func @transform_6(%arg0: i32) -> (i32, i32) {
    %c0_i32 = arith.constant 0 : i32
    %c0_i32_0 = arith.constant 0 : i32
    %c0_i32_1 = arith.constant 0 : i32
    return %c0_i32, %c0_i32_0 : i32, i32
  }
  func.func @transform_7(%arg0: i32) -> (i32, i32, i32) {
    %c0_i32 = arith.constant 0 : i32
    %c0_i32_0 = arith.constant 0 : i32
    %c0_i32_1 = arith.constant 0 : i32
    return %arg0, %c0_i32, %c0_i32_0 : i32, i32, i32
  }
  func.func @transform_8(%arg0: i32) -> (i32, i32, i32) {
    %c0_i32 = arith.constant 0 : i32
    %c0_i32_0 = arith.constant 0 : i32
    %c0_i32_1 = arith.constant 0 : i32
    return %arg0, %c0_i32, %c0_i32_0 : i32, i32, i32
  }
}

module attributes {stable_mosaic.version = 11 : i64} {
  func.func @_tcn_stack_kernel(%arg0: i32, %arg1: i32, %arg2: memref<4xi32, #tpu.memory_space<smem>>, %arg3: memref<4xi32, #tpu.memory_space<smem>>, %arg4: memref<1x20x256xf32, #tpu.memory_space<vmem>>, %arg5: memref<1x128x128xbf16, #tpu.memory_space<vmem>>, %arg6: memref<1x1x128xf32, #tpu.memory_space<vmem>>, %arg7: memref<1x1x128xf32, #tpu.memory_space<vmem>>, %arg8: memref<1x1x128xf32, #tpu.memory_space<vmem>>, %arg9: memref<1x1x128xf32, #tpu.memory_space<vmem>>, %arg10: memref<1x3x128xf32, #tpu.memory_space<vmem>>, %arg11: memref<1x1x128xf32, #tpu.memory_space<vmem>>, %arg12: memref<1x1x128xf32, #tpu.memory_space<vmem>>, %arg13: memref<1x1x128xf32, #tpu.memory_space<vmem>>, %arg14: memref<1x1x128xf32, #tpu.memory_space<vmem>>, %arg15: memref<1x128x256xbf16, #tpu.memory_space<vmem>>, %arg16: memref<1x1x256xf32, #tpu.memory_space<vmem>>, %arg17: memref<1x20x256xf32, #tpu.memory_space<vmem>>, %arg18: memref<36x128xf32, #tpu.memory_space<vmem>>) attributes {dimension_semantics = [#tpu.dimension_semantics<parallel>, #tpu.dimension_semantics<arbitrary>], iteration_bounds = array<i64: 2, 4>, scalar_prefetch = 2 : i64, scratch_operands = 1 : i64, tpu.core_type = #tpu.core_type<tc>, window_params = [{transform_indices = @transform_0, window_bounds = array<i64: 1, 20, 256>}, {transform_indices = @transform_1, window_bounds = array<i64: 1, 128, 128>}, {transform_indices = @transform_2, window_bounds = array<i64: 1, 1, 128>}, {transform_indices = @transform_3, window_bounds = array<i64: 1, 1, 128>}, {transform_indices = @transform_4, window_bounds = array<i64: 1, 1, 128>}, {transform_indices = @transform_5, window_bounds = array<i64: 1, 1, 128>}, {transform_indices = @transform_6, window_bounds = array<i64: 1, 3, 128>}, {transform_indices = @transform_7, window_bounds = array<i64: 1, 1, 128>}, {transform_indices = @transform_8, window_bounds = array<i64: 1, 1, 128>}, {transform_indices = @transform_9, window_bounds = array<i64: 1, 1, 128>}, {transform_indices = @transform_10, window_bounds = array<i64: 1, 1, 128>}, {transform_indices = @transform_11, window_bounds = array<i64: 1, 128, 256>}, {transform_indices = @transform_12, window_bounds = array<i64: 1, 1, 256>}, {transform_indices = @transform_13, window_bounds = array<i64: 1, 20, 256>}]} {
    %c0_i32 = arith.constant 0 : i32
    %0 = arith.cmpi eq, %arg1, %c0_i32 : i32
    %1 = arith.extui %0 : i1 to i32
    %c0_i32_0 = arith.constant 0 : i32
    %2 = arith.cmpi ne, %1, %c0_i32_0 : i32
    scf.if %2 {
      %c0_69 = arith.constant 0 : index
      %c0_70 = arith.constant 0 : index
      %c0_71 = arith.constant 0 : index
      %150 = vector.load %arg4[%c0_69, %c0_70, %c0_71] : memref<1x20x256xf32, #tpu.memory_space<vmem>>, vector<1x20x256xf32>
      %c0_72 = arith.constant 0 : index
      %c0_73 = arith.constant 0 : index
      %c0_74 = arith.constant 0 : index
      %151 = vector.load %arg17[%c0_72, %c0_73, %c0_74] : memref<1x20x256xf32, #tpu.memory_space<vmem>>, vector<1x20x256xf32>
      tpu.vector_store %arg17[%c0_72, %c0_73, %c0_74], %150 {strides = array<i32>} : memref<1x20x256xf32, #tpu.memory_space<vmem>>, vector<1x20x256xf32>,
      %cst_75 = arith.constant 0.000000e+00 : f32
      %152 = vector.broadcast %cst_75 : f32 to vector<8x128xf32>
      %c0_76 = arith.constant 0 : index
      %c0_77 = arith.constant 0 : index
      %153 = vector.load %arg18[%c0_76, %c0_77] : memref<36x128xf32, #tpu.memory_space<vmem>>, vector<8x128xf32>
      tpu.vector_store %arg18[%c0_76, %c0_77], %152 {strides = array<i32>} : memref<36x128xf32, #tpu.memory_space<vmem>>, vector<8x128xf32>,
      %cst_78 = arith.constant 0.000000e+00 : f32
      %154 = vector.broadcast %cst_78 : f32 to vector<8x128xf32>
      %c28 = arith.constant 28 : index
      %c0_79 = arith.constant 0 : index
      %155 = vector.load %arg18[%c28, %c0_79] : memref<36x128xf32, #tpu.memory_space<vmem>>, vector<8x128xf32>
      tpu.vector_store %arg18[%c28, %c0_79], %154 {strides = array<i32>} : memref<36x128xf32, #tpu.memory_space<vmem>>, vector<8x128xf32>,
    } else {
    }
    %c0 = arith.constant 0 : index
    %c0_1 = arith.constant 0 : index
    %c0_2 = arith.constant 0 : index
    %3 = vector.load %arg17[%c0, %c0_1, %c0_2] : memref<1x20x256xf32, #tpu.memory_space<vmem>>, vector<1x20x256xf32>
    %4 = vector.shape_cast %3 : vector<1x20x256xf32> to vector<20x256xf32>
    %5 = vector.extract_strided_slice %4 {offsets = [0, 0], sizes = [20, 128], strides = [1, 1]} : vector<20x256xf32> to vector<20x128xf32>
    %6 = arith.truncf %5 : vector<20x128xf32> to vector<20x128xbf16>
    %c0_3 = arith.constant 0 : index
    %c0_4 = arith.constant 0 : index
    %c0_5 = arith.constant 0 : index
    %7 = vector.load %arg5[%c0_3, %c0_4, %c0_5] : memref<1x128x128xbf16, #tpu.memory_space<vmem>>, vector<1x128x128xbf16>
    %8 = vector.shape_cast %7 : vector<1x128x128xbf16> to vector<128x128xbf16>
    %cst = arith.constant dense<0.000000e+00> : vector<20x128xf32>
    %9 = tpu.matmul %6, %8, %cst {dimension_numbers = #tpu.dot_dimension_numbers<[1], [0], [0], [1], [0, 0, 1, 1], [], []>} : vector<20x128xbf16>, vector<128x128xbf16>, vector<20x128xf32> -> vector<20x128xf32>
    %c0_6 = arith.constant 0 : index
    %c0_7 = arith.constant 0 : index
    %c0_8 = arith.constant 0 : index
    %10 = vector.load %arg6[%c0_6, %c0_7, %c0_8] : memref<1x1x128xf32, #tpu.memory_space<vmem>>, vector<1x1x128xf32>
    %11 = vector.shape_cast %10 : vector<1x1x128xf32> to vector<1x128xf32>
    %12 = vector.broadcast %11 : vector<1x128xf32> to vector<20x128xf32>
    %13 = arith.addf %9, %12 : vector<20x128xf32>
    %c0_9 = arith.constant 0 : index
    %c0_10 = arith.constant 0 : index
    %c0_11 = arith.constant 0 : index
    %14 = vector.load %arg7[%c0_9, %c0_10, %c0_11] : memref<1x1x128xf32, #tpu.memory_space<vmem>>, vector<1x1x128xf32>
    %15 = vector.shape_cast %14 : vector<1x1x128xf32> to vector<1x128xf32>
    %cst_12 = arith.constant 0.000000e+00 : f32
    %16 = vector.broadcast %cst_12 : f32 to vector<20x128xf32>
    %17 = arith.cmpf oge, %13, %16 : vector<20x128xf32>
    %18 = vector.broadcast %15 : vector<1x128xf32> to vector<20x128xf32>
    %19 = arith.mulf %13, %18 : vector<20x128xf32>
    %20 = arith.select %17, %13, %19 : vector<20x128xi1>, vector<20x128xf32>
    %c0_13 = arith.constant 0 : index
    %c0_14 = arith.constant 0 : index
    %c0_15 = arith.constant 0 : index
    %21 = vector.load %arg8[%c0_13, %c0_14, %c0_15] : memref<1x1x128xf32, #tpu.memory_space<vmem>>, vector<1x1x128xf32>
    %22 = vector.shape_cast %21 : vector<1x1x128xf32> to vector<1x128xf32>
    %c0_16 = arith.constant 0 : index
    %c0_17 = arith.constant 0 : index
    %c0_18 = arith.constant 0 : index
    %23 = vector.load %arg9[%c0_16, %c0_17, %c0_18] : memref<1x1x128xf32, #tpu.memory_space<vmem>>, vector<1x1x128xf32>
    %24 = vector.shape_cast %23 : vector<1x1x128xf32> to vector<1x128xf32>
    %25 = vector.shape_cast %20 : vector<20x128xf32> to vector<1x20x128xf32>
    %cst_19 = arith.constant dense<0.000000e+00> : vector<1xf32>
    %26 = vector.multi_reduction <add>, %25, %cst_19 [1, 2] : vector<1x20x128xf32> to vector<1xf32>
    %27 = vector.shape_cast %26 : vector<1xf32> to vector<1x1x1xf32>
    %28 = vector.extract %27[0, 0, 0] : f32 from vector<1x1x1xf32>
    %29 = vector.broadcast %28 : f32 to vector<1x1xf32>
    %30 = arith.mulf %20, %20 : vector<20x128xf32>
    %31 = vector.shape_cast %30 : vector<20x128xf32> to vector<1x20x128xf32>
    %cst_20 = arith.constant dense<0.000000e+00> : vector<1xf32>
    %32 = vector.multi_reduction <add>, %31, %cst_20 [1, 2] : vector<1x20x128xf32> to vector<1xf32>
    %33 = vector.shape_cast %32 : vector<1xf32> to vector<1x1x1xf32>
    %34 = vector.extract %33[0, 0, 0] : f32 from vector<1x1x1xf32>
    %35 = vector.broadcast %34 : f32 to vector<1x1xf32>
    %cst_21 = arith.constant 1.280000e+03 : f32
    %36 = vector.broadcast %cst_21 : f32 to vector<1x1xf32>
    %37 = arith.divf %29, %36 : vector<1x1xf32>
    %cst_22 = arith.constant 1.280000e+03 : f32
    %38 = vector.broadcast %cst_22 : f32 to vector<1x1xf32>
    %39 = arith.divf %35, %38 : vector<1x1xf32>
    %40 = arith.mulf %37, %37 : vector<1x1xf32>
    %41 = arith.subf %39, %40 : vector<1x1xf32>
    %cst_23 = arith.constant 0.000000e+00 : f32
    %42 = vector.broadcast %cst_23 : f32 to vector<1x1xf32>
    %43 = arith.maximumf %41, %42 : vector<1x1xf32>
    %cst_24 = arith.constant 9.99999993E-9 : f32
    %44 = vector.broadcast %cst_24 : f32 to vector<1x1xf32>
    %45 = arith.addf %43, %44 : vector<1x1xf32>
    %46 = math.rsqrt %45 : vector<1x1xf32>
    %47 = vector.broadcast %46 : vector<1x1xf32> to vector<1x128xf32>
    %48 = arith.mulf %47, %22 : vector<1x128xf32>
    %49 = vector.broadcast %37 : vector<1x1xf32> to vector<1x128xf32>
    %50 = arith.mulf %49, %48 : vector<1x128xf32>
    %51 = arith.subf %24, %50 : vector<1x128xf32>
    %52 = vector.broadcast %48 : vector<1x128xf32> to vector<20x128xf32>
    %53 = arith.mulf %20, %52 : vector<20x128xf32>
    %54 = vector.broadcast %51 : vector<1x128xf32> to vector<20x128xf32>
    %55 = arith.addf %53, %54 : vector<20x128xf32>
    %c8 = arith.constant 8 : index
    %c0_25 = arith.constant 0 : index
    %56 = vector.load %arg18[%c8, %c0_25] : memref<36x128xf32, #tpu.memory_space<vmem>>, vector<20x128xf32>
    tpu.vector_store %arg18[%c8, %c0_25], %55 {strides = array<i32>} : memref<36x128xf32, #tpu.memory_space<vmem>>, vector<20x128xf32>,
    %57 = arith.index_cast %arg1 : i32 to index
    %58 = memref.load %arg2[%57] : memref<4xi32, #tpu.memory_space<smem>>
    %59 = arith.index_cast %arg1 : i32 to index
    %60 = memref.load %arg3[%59] : memref<4xi32, #tpu.memory_space<smem>>
    %cst_26 = arith.constant 0.000000e+00 : f32
    %61 = vector.broadcast %cst_26 : f32 to vector<20x128xf32>
    %c8_i32 = arith.constant 8 : i32
    %62 = arith.subi %c8_i32, %60 : i32
    %c0_i32_27 = arith.constant 0 : i32
    %63 = arith.muli %c0_i32_27, %58 : i32
    %64 = arith.addi %62, %63 : i32
    %65 = arith.index_cast %64 : i32 to index
    %c0_28 = arith.constant 0 : index
    %66 = vector.load %arg18[%65, %c0_28] : memref<36x128xf32, #tpu.memory_space<vmem>>, vector<20x128xf32>
    %c0_29 = arith.constant 0 : index
    %c0_30 = arith.constant 0 : index
    %c0_31 = arith.constant 0 : index
    %67 = vector.load %arg10[%c0_29, %c0_30, %c0_31] : memref<1x3x128xf32, #tpu.memory_space<vmem>>, vector<1x1x128xf32>
    %68 = vector.shape_cast %67 : vector<1x1x128xf32> to vector<1x128xf32>
    %69 = vector.broadcast %68 : vector<1x128xf32> to vector<20x128xf32>
    %70 = arith.mulf %66, %69 : vector<20x128xf32>
    %71 = arith.addf %61, %70 : vector<20x128xf32>
    %c8_i32_32 = arith.constant 8 : i32
    %72 = arith.subi %c8_i32_32, %60 : i32
    %c1_i32 = arith.constant 1 : i32
    %73 = arith.muli %c1_i32, %58 : i32
    %74 = arith.addi %72, %73 : i32
    %75 = arith.index_cast %74 : i32 to index
    %c0_33 = arith.constant 0 : index
    %76 = vector.load %arg18[%75, %c0_33] : memref<36x128xf32, #tpu.memory_space<vmem>>, vector<20x128xf32>
    %c0_34 = arith.constant 0 : index
    %c1 = arith.constant 1 : index
    %c0_35 = arith.constant 0 : index
    %77 = vector.load %arg10[%c0_34, %c1, %c0_35] : memref<1x3x128xf32, #tpu.memory_space<vmem>>, vector<1x1x128xf32>
    %78 = vector.shape_cast %77 : vector<1x1x128xf32> to vector<1x128xf32>
    %79 = vector.broadcast %78 : vector<1x128xf32> to vector<20x128xf32>
    %80 = arith.mulf %76, %79 : vector<20x128xf32>
    %81 = arith.addf %71, %80 : vector<20x128xf32>
    %c8_i32_36 = arith.constant 8 : i32
    %82 = arith.subi %c8_i32_36, %60 : i32
    %c2_i32 = arith.constant 2 : i32
    %83 = arith.muli %c2_i32, %58 : i32
    %84 = arith.addi %82, %83 : i32
    %85 = arith.index_cast %84 : i32 to index
    %c0_37 = arith.constant 0 : index
    %86 = vector.load %arg18[%85, %c0_37] : memref<36x128xf32, #tpu.memory_space<vmem>>, vector<20x128xf32>
    %c0_38 = arith.constant 0 : index
    %c2 = arith.constant 2 : index
    %c0_39 = arith.constant 0 : index
    %87 = vector.load %arg10[%c0_38, %c2, %c0_39] : memref<1x3x128xf32, #tpu.memory_space<vmem>>, vector<1x1x128xf32>
    %88 = vector.shape_cast %87 : vector<1x1x128xf32> to vector<1x128xf32>
    %89 = vector.broadcast %88 : vector<1x128xf32> to vector<20x128xf32>
    %90 = arith.mulf %86, %89 : vector<20x128xf32>
    %91 = arith.addf %81, %90 : vector<20x128xf32>
    %c0_40 = arith.constant 0 : index
    %c0_41 = arith.constant 0 : index
    %c0_42 = arith.constant 0 : index
    %92 = vector.load %arg11[%c0_40, %c0_41, %c0_42] : memref<1x1x128xf32, #tpu.memory_space<vmem>>, vector<1x1x128xf32>
    %93 = vector.shape_cast %92 : vector<1x1x128xf32> to vector<1x128xf32>
    %94 = vector.broadcast %93 : vector<1x128xf32> to vector<20x128xf32>
    %95 = arith.addf %91, %94 : vector<20x128xf32>
    %c0_43 = arith.constant 0 : index
    %c0_44 = arith.constant 0 : index
    %c0_45 = arith.constant 0 : index
    %96 = vector.load %arg12[%c0_43, %c0_44, %c0_45] : memref<1x1x128xf32, #tpu.memory_space<vmem>>, vector<1x1x128xf32>
    %97 = vector.shape_cast %96 : vector<1x1x128xf32> to vector<1x128xf32>
    %cst_46 = arith.constant 0.000000e+00 : f32
    %98 = vector.broadcast %cst_46 : f32 to vector<20x128xf32>
    %99 = arith.cmpf oge, %95, %98 : vector<20x128xf32>
    %100 = vector.broadcast %97 : vector<1x128xf32> to vector<20x128xf32>
    %101 = arith.mulf %95, %100 : vector<20x128xf32>
    %102 = arith.select %99, %95, %101 : vector<20x128xi1>, vector<20x128xf32>
    %c0_47 = arith.constant 0 : index
    %c0_48 = arith.constant 0 : index
    %c0_49 = arith.constant 0 : index
    %103 = vector.load %arg13[%c0_47, %c0_48, %c0_49] : memref<1x1x128xf32, #tpu.memory_space<vmem>>, vector<1x1x128xf32>
    %104 = vector.shape_cast %103 : vector<1x1x128xf32> to vector<1x128xf32>
    %c0_50 = arith.constant 0 : index
    %c0_51 = arith.constant 0 : index
    %c0_52 = arith.constant 0 : index
    %105 = vector.load %arg14[%c0_50, %c0_51, %c0_52] : memref<1x1x128xf32, #tpu.memory_space<vmem>>, vector<1x1x128xf32>
    %106 = vector.shape_cast %105 : vector<1x1x128xf32> to vector<1x128xf32>
    %107 = vector.shape_cast %102 : vector<20x128xf32> to vector<1x20x128xf32>
    %cst_53 = arith.constant dense<0.000000e+00> : vector<1xf32>
    %108 = vector.multi_reduction <add>, %107, %cst_53 [1, 2] : vector<1x20x128xf32> to vector<1xf32>
    %109 = vector.shape_cast %108 : vector<1xf32> to vector<1x1x1xf32>
    %110 = vector.extract %109[0, 0, 0] : f32 from vector<1x1x1xf32>
    %111 = vector.broadcast %110 : f32 to vector<1x1xf32>
    %112 = arith.mulf %102, %102 : vector<20x128xf32>
    %113 = vector.shape_cast %112 : vector<20x128xf32> to vector<1x20x128xf32>
    %cst_54 = arith.constant dense<0.000000e+00> : vector<1xf32>
    %114 = vector.multi_reduction <add>, %113, %cst_54 [1, 2] : vector<1x20x128xf32> to vector<1xf32>
    %115 = vector.shape_cast %114 : vector<1xf32> to vector<1x1x1xf32>
    %116 = vector.extract %115[0, 0, 0] : f32 from vector<1x1x1xf32>
    %117 = vector.broadcast %116 : f32 to vector<1x1xf32>
    %cst_55 = arith.constant 1.280000e+03 : f32
    %118 = vector.broadcast %cst_55 : f32 to vector<1x1xf32>
    %119 = arith.divf %111, %118 : vector<1x1xf32>
    %cst_56 = arith.constant 1.280000e+03 : f32
    %120 = vector.broadcast %cst_56 : f32 to vector<1x1xf32>
    %121 = arith.divf %117, %120 : vector<1x1xf32>
    %122 = arith.mulf %119, %119 : vector<1x1xf32>
    %123 = arith.subf %121, %122 : vector<1x1xf32>
    %cst_57 = arith.constant 0.000000e+00 : f32
    %124 = vector.broadcast %cst_57 : f32 to vector<1x1xf32>
    %125 = arith.maximumf %123, %124 : vector<1x1xf32>
    %cst_58 = arith.constant 9.99999993E-9 : f32
    %126 = vector.broadcast %cst_58 : f32 to vector<1x1xf32>
    %127 = arith.addf %125, %126 : vector<1x1xf32>
    %128 = math.rsqrt %127 : vector<1x1xf32>
    %129 = vector.broadcast %128 : vector<1x1xf32> to vector<1x128xf32>
    %130 = arith.mulf %129, %104 : vector<1x128xf32>
    %131 = vector.broadcast %119 : vector<1x1xf32> to vector<1x128xf32>
    %132 = arith.mulf %131, %130 : vector<1x128xf32>
    %133 = arith.subf %106, %132 : vector<1x128xf32>
    %134 = vector.broadcast %130 : vector<1x128xf32> to vector<20x128xf32>
    %135 = arith.mulf %102, %134 : vector<20x128xf32>
    %136 = vector.broadcast %133 : vector<1x128xf32> to vector<20x128xf32>
    %137 = arith.addf %135, %136 : vector<20x128xf32>
    %138 = arith.truncf %137 : vector<20x128xf32> to vector<20x128xbf16>
    %c0_59 = arith.constant 0 : index
    %c0_60 = arith.constant 0 : index
    %c0_61 = arith.constant 0 : index
    %139 = vector.load %arg15[%c0_59, %c0_60, %c0_61] : memref<1x128x256xbf16, #tpu.memory_space<vmem>>, vector<1x128x256xbf16>
    %140 = vector.shape_cast %139 : vector<1x128x256xbf16> to vector<128x256xbf16>
    %cst_62 = arith.constant dense<0.000000e+00> : vector<20x256xf32>
    %141 = tpu.matmul %138, %140, %cst_62 {dimension_numbers = #tpu.dot_dimension_numbers<[1], [0], [0], [1], [0, 0, 1, 1], [], []>} : vector<20x128xbf16>, vector<128x256xbf16>, vector<20x256xf32> -> vector<20x256xf32>
    %c0_63 = arith.constant 0 : index
    %c0_64 = arith.constant 0 : index
    %c0_65 = arith.constant 0 : index
    %142 = vector.load %arg16[%c0_63, %c0_64, %c0_65] : memref<1x1x256xf32, #tpu.memory_space<vmem>>, vector<1x1x256xf32>
    %143 = vector.shape_cast %142 : vector<1x1x256xf32> to vector<1x256xf32>
    %144 = vector.broadcast %143 : vector<1x256xf32> to vector<20x256xf32>
    %145 = arith.addf %141, %144 : vector<20x256xf32>
    %146 = arith.addf %4, %145 : vector<20x256xf32>
    %c0_66 = arith.constant 0 : index
    %c0_67 = arith.constant 0 : index
    %c0_68 = arith.constant 0 : index
    %147 = vector.load %arg17[%c0_66, %c0_67, %c0_68] : memref<1x20x256xf32, #tpu.memory_space<vmem>>, vector<1x20x256xf32>
    %148 = vector.shape_cast %147 : vector<1x20x256xf32> to vector<20x256xf32>
    %149 = vector.shape_cast %146 : vector<20x256xf32> to vector<1x20x256xf32>
    tpu.vector_store %arg17[%c0_66, %c0_67, %c0_68], %149 {strides = array<i32>} : memref<1x20x256xf32, #tpu.memory_space<vmem>>, vector<1x20x256xf32>,
    return
  }
  func.func @transform_0(%arg0: i32, %arg1: i32, %arg2: memref<4xi32, #tpu.memory_space<smem>>, %arg3: memref<4xi32, #tpu.memory_space<smem>>) -> (i32, i32, i32) {
    %c0_i32 = arith.constant 0 : i32
    %c0_i32_0 = arith.constant 0 : i32
    %c0_i32_1 = arith.constant 0 : i32
    return %arg0, %c0_i32, %c0_i32_0 : i32, i32, i32
  }
  func.func @transform_1(%arg0: i32, %arg1: i32, %arg2: memref<4xi32, #tpu.memory_space<smem>>, %arg3: memref<4xi32, #tpu.memory_space<smem>>) -> (i32, i32, i32) {
    %c0_i32 = arith.constant 0 : i32
    %c0_i32_0 = arith.constant 0 : i32
    %c0_i32_1 = arith.constant 0 : i32
    return %arg1, %c0_i32, %c0_i32_0 : i32, i32, i32
  }
  func.func @transform_2(%arg0: i32, %arg1: i32, %arg2: memref<4xi32, #tpu.memory_space<smem>>, %arg3: memref<4xi32, #tpu.memory_space<smem>>) -> (i32, i32, i32) {
    %c0_i32 = arith.constant 0 : i32
    %c0_i32_0 = arith.constant 0 : i32
    %c0_i32_1 = arith.constant 0 : i32
    return %arg1, %c0_i32, %c0_i32_0 : i32, i32, i32
  }
  func.func @transform_3(%arg0: i32, %arg1: i32, %arg2: memref<4xi32, #tpu.memory_space<smem>>, %arg3: memref<4xi32, #tpu.memory_space<smem>>) -> (i32, i32, i32) {
    %c0_i32 = arith.constant 0 : i32
    %c0_i32_0 = arith.constant 0 : i32
    %c0_i32_1 = arith.constant 0 : i32
    return %arg1, %c0_i32, %c0_i32_0 : i32, i32, i32
  }
  func.func @transform_4(%arg0: i32, %arg1: i32, %arg2: memref<4xi32, #tpu.memory_space<smem>>, %arg3: memref<4xi32, #tpu.memory_space<smem>>) -> (i32, i32, i32) {
    %c0_i32 = arith.constant 0 : i32
    %c0_i32_0 = arith.constant 0 : i32
    %c0_i32_1 = arith.constant 0 : i32
    return %arg1, %c0_i32, %c0_i32_0 : i32, i32, i32
  }
  func.func @transform_5(%arg0: i32, %arg1: i32, %arg2: memref<4xi32, #tpu.memory_space<smem>>, %arg3: memref<4xi32, #tpu.memory_space<smem>>) -> (i32, i32, i32) {
    %c0_i32 = arith.constant 0 : i32
    %c0_i32_0 = arith.constant 0 : i32
    %c0_i32_1 = arith.constant 0 : i32
    return %arg1, %c0_i32, %c0_i32_0 : i32, i32, i32
  }
  func.func @transform_6(%arg0: i32, %arg1: i32, %arg2: memref<4xi32, #tpu.memory_space<smem>>, %arg3: memref<4xi32, #tpu.memory_space<smem>>) -> (i32, i32, i32) {
    %c0_i32 = arith.constant 0 : i32
    %c0_i32_0 = arith.constant 0 : i32
    %c0_i32_1 = arith.constant 0 : i32
    return %arg1, %c0_i32, %c0_i32_0 : i32, i32, i32
  }
  func.func @transform_7(%arg0: i32, %arg1: i32, %arg2: memref<4xi32, #tpu.memory_space<smem>>, %arg3: memref<4xi32, #tpu.memory_space<smem>>) -> (i32, i32, i32) {
    %c0_i32 = arith.constant 0 : i32
    %c0_i32_0 = arith.constant 0 : i32
    %c0_i32_1 = arith.constant 0 : i32
    return %arg1, %c0_i32, %c0_i32_0 : i32, i32, i32
  }
  func.func @transform_8(%arg0: i32, %arg1: i32, %arg2: memref<4xi32, #tpu.memory_space<smem>>, %arg3: memref<4xi32, #tpu.memory_space<smem>>) -> (i32, i32, i32) {
    %c0_i32 = arith.constant 0 : i32
    %c0_i32_0 = arith.constant 0 : i32
    %c0_i32_1 = arith.constant 0 : i32
    return %arg1, %c0_i32, %c0_i32_0 : i32, i32, i32
  }
  func.func @transform_9(%arg0: i32, %arg1: i32, %arg2: memref<4xi32, #tpu.memory_space<smem>>, %arg3: memref<4xi32, #tpu.memory_space<smem>>) -> (i32, i32, i32) {
    %c0_i32 = arith.constant 0 : i32
    %c0_i32_0 = arith.constant 0 : i32
    %c0_i32_1 = arith.constant 0 : i32
    return %arg1, %c0_i32, %c0_i32_0 : i32, i32, i32
  }
  func.func @transform_10(%arg0: i32, %arg1: i32, %arg2: memref<4xi32, #tpu.memory_space<smem>>, %arg3: memref<4xi32, #tpu.memory_space<smem>>) -> (i32, i32, i32) {
    %c0_i32 = arith.constant 0 : i32
    %c0_i32_0 = arith.constant 0 : i32
    %c0_i32_1 = arith.constant 0 : i32
    return %arg1, %c0_i32, %c0_i32_0 : i32, i32, i32
  }
  func.func @transform_11(%arg0: i32, %arg1: i32, %arg2: memref<4xi32, #tpu.memory_space<smem>>, %arg3: memref<4xi32, #tpu.memory_space<smem>>) -> (i32, i32, i32) {
    %c0_i32 = arith.constant 0 : i32
    %c0_i32_0 = arith.constant 0 : i32
    %c0_i32_1 = arith.constant 0 : i32
    return %arg1, %c0_i32, %c0_i32_0 : i32, i32, i32
  }
  func.func @transform_12(%arg0: i32, %arg1: i32, %arg2: memref<4xi32, #tpu.memory_space<smem>>, %arg3: memref<4xi32, #tpu.memory_space<smem>>) -> (i32, i32, i32) {
    %c0_i32 = arith.constant 0 : i32
    %c0_i32_0 = arith.constant 0 : i32
    %c0_i32_1 = arith.constant 0 : i32
    return %arg1, %c0_i32, %c0_i32_0 : i32, i32, i32
  }
  func.func @transform_13(%arg0: i32, %arg1: i32, %arg2: memref<4xi32, #tpu.memory_space<smem>>, %arg3: memref<4xi32, #tpu.memory_space<smem>>) -> (i32, i32, i32) {
    %c0_i32 = arith.constant 0 : i32
    %c0_i32_0 = arith.constant 0 : i32
    %c0_i32_1 = arith.constant 0 : i32
    return %arg0, %c0_i32, %c0_i32_0 : i32, i32, i32
  }
}

module attributes {stable_mosaic.version = 11 : i64} {
  func.func @_output_stage_kernel(%arg0: i32, %arg1: memref<1x20x256xf32, #tpu.memory_space<vmem>>, %arg2: memref<1x20x128xbf16, #tpu.memory_space<vmem>>, %arg3: memref<1x128xf32, #tpu.memory_space<vmem>>, %arg4: memref<128x128xbf16, #tpu.memory_space<vmem>>, %arg5: memref<1x128xf32, #tpu.memory_space<vmem>>, %arg6: memref<128x128xbf16, #tpu.memory_space<vmem>>, %arg7: memref<1x128xf32, #tpu.memory_space<vmem>>, %arg8: memref<1x20x128xf32, #tpu.memory_space<vmem>>) attributes {dimension_semantics = [#tpu.dimension_semantics<parallel>], iteration_bounds = array<i64: 2>, scalar_prefetch = 0 : i64, scratch_operands = 0 : i64, tpu.core_type = #tpu.core_type<tc>, window_params = [{transform_indices = @transform_0, window_bounds = array<i64: 1, 20, 256>}, {transform_indices = @transform_1, window_bounds = array<i64: 1, 20, 128>}, {pipeline_mode = #tpu.pipeline_mode<synchronous>, transform_indices = @transform_2, window_bounds = array<i64: 1, 128>}, {pipeline_mode = #tpu.pipeline_mode<synchronous>, transform_indices = @transform_3, window_bounds = array<i64: 128, 128>}, {pipeline_mode = #tpu.pipeline_mode<synchronous>, transform_indices = @transform_4, window_bounds = array<i64: 1, 128>}, {pipeline_mode = #tpu.pipeline_mode<synchronous>, transform_indices = @transform_5, window_bounds = array<i64: 128, 128>}, {pipeline_mode = #tpu.pipeline_mode<synchronous>, transform_indices = @transform_6, window_bounds = array<i64: 1, 128>}, {transform_indices = @transform_7, window_bounds = array<i64: 1, 20, 128>}]} {
    %c0 = arith.constant 0 : index
    %c0_0 = arith.constant 0 : index
    %c0_1 = arith.constant 0 : index
    %0 = vector.load %arg1[%c0, %c0_0, %c0_1] : memref<1x20x256xf32, #tpu.memory_space<vmem>>, vector<1x20x256xf32>
    %1 = vector.shape_cast %0 : vector<1x20x256xf32> to vector<20x256xf32>
    %2 = vector.extract_strided_slice %1 {offsets = [0, 128], sizes = [20, 128], strides = [1, 1]} : vector<20x256xf32> to vector<20x128xf32>
    %c0_2 = arith.constant 0 : index
    %c0_3 = arith.constant 0 : index
    %3 = vector.load %arg3[%c0_2, %c0_3] : memref<1x128xf32, #tpu.memory_space<vmem>>, vector<1x128xf32>
    %cst = arith.constant 0.000000e+00 : f32
    %4 = vector.broadcast %cst : f32 to vector<20x128xf32>
    %5 = arith.cmpf oge, %2, %4 : vector<20x128xf32>
    %6 = vector.broadcast %3 : vector<1x128xf32> to vector<20x128xf32>
    %7 = arith.mulf %2, %6 : vector<20x128xf32>
    %8 = arith.select %5, %2, %7 : vector<20x128xi1>, vector<20x128xf32>
    %9 = arith.truncf %8 : vector<20x128xf32> to vector<20x128xbf16>
    %c0_4 = arith.constant 0 : index
    %c0_5 = arith.constant 0 : index
    %10 = vector.load %arg4[%c0_4, %c0_5] : memref<128x128xbf16, #tpu.memory_space<vmem>>, vector<128x128xbf16>
    %cst_6 = arith.constant dense<0.000000e+00> : vector<20x128xf32>
    %11 = tpu.matmul %9, %10, %cst_6 {dimension_numbers = #tpu.dot_dimension_numbers<[1], [0], [0], [1], [0, 0, 1, 1], [], []>} : vector<20x128xbf16>, vector<128x128xbf16>, vector<20x128xf32> -> vector<20x128xf32>
    %c0_7 = arith.constant 0 : index
    %c0_8 = arith.constant 0 : index
    %12 = vector.load %arg5[%c0_7, %c0_8] : memref<1x128xf32, #tpu.memory_space<vmem>>, vector<1x128xf32>
    %13 = vector.broadcast %12 : vector<1x128xf32> to vector<20x128xf32>
    %14 = arith.addf %11, %13 : vector<20x128xf32>
    %15 = arith.negf %14 : vector<20x128xf32>
    %16 = math.exp %15 : vector<20x128xf32>
    %cst_9 = arith.constant 1.000000e+00 : f32
    %17 = vector.broadcast %cst_9 : f32 to vector<20x128xf32>
    %18 = arith.addf %17, %16 : vector<20x128xf32>
    %19 = arith.divf %17, %18 : vector<20x128xf32>
    %c0_10 = arith.constant 0 : index
    %c0_11 = arith.constant 0 : index
    %c0_12 = arith.constant 0 : index
    %20 = vector.load %arg2[%c0_10, %c0_11, %c0_12] : memref<1x20x128xbf16, #tpu.memory_space<vmem>>, vector<1x20x128xbf16>
    %21 = vector.shape_cast %20 : vector<1x20x128xbf16> to vector<20x128xbf16>
    %22 = arith.extf %21 : vector<20x128xbf16> to vector<20x128xf32>
    %23 = arith.mulf %22, %19 : vector<20x128xf32>
    %24 = arith.truncf %23 : vector<20x128xf32> to vector<20x128xbf16>
    %c0_13 = arith.constant 0 : index
    %c0_14 = arith.constant 0 : index
    %25 = vector.load %arg6[%c0_13, %c0_14] : memref<128x128xbf16, #tpu.memory_space<vmem>>, vector<128x128xbf16>
    %cst_15 = arith.constant dense<0.000000e+00> : vector<20x128xf32>
    %26 = tpu.matmul %24, %25, %cst_15 {dimension_numbers = #tpu.dot_dimension_numbers<[1], [0], [0], [1], [0, 0, 1, 1], [], []>} : vector<20x128xbf16>, vector<128x128xbf16>, vector<20x128xf32> -> vector<20x128xf32>
    %c0_16 = arith.constant 0 : index
    %c0_17 = arith.constant 0 : index
    %27 = vector.load %arg7[%c0_16, %c0_17] : memref<1x128xf32, #tpu.memory_space<vmem>>, vector<1x128xf32>
    %28 = vector.broadcast %27 : vector<1x128xf32> to vector<20x128xf32>
    %29 = arith.mulf %26, %28 : vector<20x128xf32>
    %cst_18 = arith.constant 9.99999997E-7 : f32
    %cst_19 = arith.constant 1.000000e+00 : f32
    %30 = vector.broadcast %cst_18 : f32 to vector<20x128xf32>
    %31 = arith.maximumf %30, %29 : vector<20x128xf32>
    %32 = vector.broadcast %cst_19 : f32 to vector<20x128xf32>
    %33 = arith.minimumf %32, %31 : vector<20x128xf32>
    %c0_20 = arith.constant 0 : index
    %c0_21 = arith.constant 0 : index
    %c0_22 = arith.constant 0 : index
    %34 = vector.load %arg8[%c0_20, %c0_21, %c0_22] : memref<1x20x128xf32, #tpu.memory_space<vmem>>, vector<1x20x128xf32>
    %35 = vector.shape_cast %34 : vector<1x20x128xf32> to vector<20x128xf32>
    %36 = vector.shape_cast %33 : vector<20x128xf32> to vector<1x20x128xf32>
    tpu.vector_store %arg8[%c0_20, %c0_21, %c0_22], %36 {strides = array<i32>} : memref<1x20x128xf32, #tpu.memory_space<vmem>>, vector<1x20x128xf32>,
    return
  }
  func.func @transform_0(%arg0: i32) -> (i32, i32, i32) {
    %c0_i32 = arith.constant 0 : i32
    %c0_i32_0 = arith.constant 0 : i32
    %c0_i32_1 = arith.constant 0 : i32
    return %arg0, %c0_i32, %c0_i32_0 : i32, i32, i32
  }
  func.func @transform_1(%arg0: i32) -> (i32, i32, i32) {
    %c0_i32 = arith.constant 0 : i32
    %c0_i32_0 = arith.constant 0 : i32
    %c0_i32_1 = arith.constant 0 : i32
    return %arg0, %c0_i32, %c0_i32_0 : i32, i32, i32
  }
  func.func @transform_2(%arg0: i32) -> (i32, i32) {
    %c0_i32 = arith.constant 0 : i32
    %c0_i32_0 = arith.constant 0 : i32
    %c0_i32_1 = arith.constant 0 : i32
    return %c0_i32, %c0_i32_0 : i32, i32
  }
  func.func @transform_3(%arg0: i32) -> (i32, i32) {
    %c0_i32 = arith.constant 0 : i32
    %c0_i32_0 = arith.constant 0 : i32
    %c0_i32_1 = arith.constant 0 : i32
    return %c0_i32, %c0_i32_0 : i32, i32
  }
  func.func @transform_4(%arg0: i32) -> (i32, i32) {
    %c0_i32 = arith.constant 0 : i32
    %c0_i32_0 = arith.constant 0 : i32
    %c0_i32_1 = arith.constant 0 : i32
    return %c0_i32, %c0_i32_0 : i32, i32
  }
  func.func @transform_5(%arg0: i32) -> (i32, i32) {
    %c0_i32 = arith.constant 0 : i32
    %c0_i32_0 = arith.constant 0 : i32
    %c0_i32_1 = arith.constant 0 : i32
    return %c0_i32, %c0_i32_0 : i32, i32
  }
  func.func @transform_6(%arg0: i32) -> (i32, i32) {
    %c0_i32 = arith.constant 0 : i32
    %c0_i32_0 = arith.constant 0 : i32
    %c0_i32_1 = arith.constant 0 : i32
    return %c0_i32, %c0_i32_0 : i32, i32
  }
  func.func @transform_7(%arg0: i32) -> (i32, i32, i32) {
    %c0_i32 = arith.constant 0 : i32
    %c0_i32_0 = arith.constant 0 : i32
    %c0_i32_1 = arith.constant 0 : i32
    return %arg0, %c0_i32, %c0_i32_0 : i32, i32, i32
  }
}

</mosaic_0001>

<llo_original>
// kernel: deepace_forward.3
$region0: #{deepace_forward.3}
  #allocation0 [shape = 'u32[]', space=smem, size = 0x4, offset = 0x4, fixed_abs, tag = 'smem constant byte address 0x4 - core index']
  #allocation1 [shape = 'u32[144,128]{1,0:T(1,128)}', space=vmem, size = 0x12000, scoped, tag = 'internal scratch']
  %s0 = inlined_call_operand.vmem [shape: bf16[2,20,16], index: 0, kind: input, shape index: {}]
  %s1 = inlined_call_operand.vmem [shape: bf16[16,128], index: 1, kind: input, shape index: {}]
  %s2 = inlined_call_operand.vmem [shape: f32[1,128], index: 2, kind: input, shape index: {}]
  %s3 = inlined_call_operand.vmem [shape: f32[1,128], index: 3, kind: input, shape index: {}]
  %s4 = inlined_call_operand.vmem [shape: f32[1,128], index: 4, kind: input, shape index: {}]
  %s5 = inlined_call_operand.vmem [shape: bf16[128,256], index: 5, kind: input, shape index: {}]
  %s6 = inlined_call_operand.vmem [shape: f32[1,256], index: 6, kind: input, shape index: {}]
  %s7 = inlined_call_operand.vmem [shape: bf16[2,20,128], index: 7, kind: output, shape index: {0}]
  %s8 = inlined_call_operand.vmem [shape: f32[2,20,256], index: 8, kind: output, shape index: {1}]
  %9 = xla_tuple %s7, %s8
  %s10 = sld [smem:[#allocation0]]
  $region69: #{deepace_forward.3} parent=0
    _
  %s12 = ssub.s32 1, %s10
  %s13 = scalar_select 0, %s12, %s10
  loop: start=0, step=1, limit=4
  $region2: #{deepace_forward.3} parent=0 // loop_pre_header
    _
  $region3: #{deepace_forward.3} parent=0 // loop_header
    %s15 = sphi 0, %s19
    %p16 = scmp.ge.s32.totalorder %s15, 4
    %s25 = sphi 0, %s27
    %s28 = sphi 0, %s25
    %s29 = sphi 0, %s28
    %s45 = sphi 0, %s29
    %s49 = sphi 0, %s49
    %s51 = sphi 0, %s49
    %s52 = sphi 0, %s51
    %s66 = sphi 0, %s52
    %s70 = sphi 0, %s70
    %s72 = sphi 0, %s70
    %s73 = sphi 0, %s72
    %s87 = sphi 0, %s73
    %s91 = sphi 0, %s91
    %s93 = sphi 0, %s91
    %s94 = sphi 0, %s93
    %s108 = sphi 0, %s94
    %s112 = sphi 0, %s112
    %s114 = sphi 0, %s112
    %s115 = sphi 0, %s114
    %s129 = sphi 0, %s115
    %s133 = sphi 0, %s133
    %s135 = sphi 0, %s133
    %s136 = sphi 0, %s135
    %s150 = sphi 0, %s136
    %s154 = sphi 0, %s154
    %s156 = sphi 0, %s154
    %s157 = sphi 0, %s156
    %s171 = sphi 0, %s157
    %s177 = sphi 0, %s179
    %s180 = sphi 0, %s177
    %s181 = sphi 0, %s180
    %s197 = sphi 0, %s181
    %s203 = sphi 0, %s205
    %s206 = sphi 0, %s203
    %s207 = sphi 0, %s206
    %s223 = sphi 0, %s207
  $region4: #{deepace_forward.3} parent=0 // loop_header_branch
    %18 = sbr.rel (%p16) target = $region8
  $region5: #{deepace_forward.3} parent=0 // loop_body
    %s20 = ssub.s32 %s15, 1
    %s21 = ssub.s32 %s15, 2
    %s22 = sadd.s32 %s15, 1
    %s23 = ssub.s32 %s15, %s22
    %p24 = scmp.eq.s32.totalorder %s23, 0
    %s26 = sadd.s32 %s25, 1
    %s27 = scalar_select %p24, %s25, %s26
    %p30 = pneg %p24
    %p31 = scmp.eq.s32.totalorder %s15, 1
    %p32 = por %p30, %p31
    %p33 = scmp.ne.s32.totalorder %s25, %s28
    %p34 = scmp.eq.s32.totalorder %s15, 0
    %p35 = por %p33, %p34
    %p36 = scmp.ne.s32.totalorder %s25, %s28
    %p37 = scmp.eq.s32.totalorder %s20, 1
    %p38 = por %p36, %p37
    %p39 = scmp.ne.s32.totalorder %s28, %s29
    %p40 = scmp.eq.s32.totalorder %s20, 0
    %p41 = por %p39, %p40
    %p42 = scmp.ne.s32.totalorder %s28, %s29
    %p43 = scmp.eq.s32.totalorder %s21, 1
    %p44 = por %p42, %p43
    %p46 = scmp.ne.s32.totalorder %s29, %s45
    %p47 = scmp.eq.s32.totalorder %s21, 0
    %p48 = por %p46, %p47
    %s50 = sadd.s32 %s49, 1
    %p53 = scmp.eq.s32.totalorder %s15, 1
    %p54 = scmp.ne.s32.totalorder %s49, %s51
    %p55 = scmp.eq.s32.totalorder %s15, 0
    %p56 = por %p54, %p55
    %p57 = scmp.ne.s32.totalorder %s49, %s51
    %p58 = scmp.eq.s32.totalorder %s20, 1
    %p59 = por %p57, %p58
    %p60 = scmp.ne.s32.totalorder %s51, %s52
    %p61 = scmp.eq.s32.totalorder %s20, 0
    %p62 = por %p60, %p61
    %p63 = scmp.ne.s32.totalorder %s51, %s52
    %p64 = scmp.eq.s32.totalorder %s21, 1
    %p65 = por %p63, %p64
    %p67 = scmp.ne.s32.totalorder %s52, %s66
    %p68 = scmp.eq.s32.totalorder %s21, 0
    %p69 = por %p67, %p68
    %s71 = sadd.s32 %s70, 1
    %p74 = scmp.eq.s32.totalorder %s15, 1
    %p75 = scmp.ne.s32.totalorder %s70, %s72
    %p76 = scmp.eq.s32.totalorder %s15, 0
    %p77 = por %p75, %p76
    %p78 = scmp.ne.s32.totalorder %s70, %s72
    %p79 = scmp.eq.s32.totalorder %s20, 1
    %p80 = por %p78, %p79
    %p81 = scmp.ne.s32.totalorder %s72, %s73
    %p82 = scmp.eq.s32.totalorder %s20, 0
    %p83 = por %p81, %p82
    %p84 = scmp.ne.s32.totalorder %s72, %s73
    %p85 = scmp.eq.s32.totalorder %s21, 1
    %p86 = por %p84, %p85
    %p88 = scmp.ne.s32.totalorder %s73, %s87
    %p89 = scmp.eq.s32.totalorder %s21, 0
    %p90 = por %p88, %p89
    %s92 = sadd.s32 %s91, 1
    %p95 = scmp.eq.s32.totalorder %s15, 1
    %p96 = scmp.ne.s32.totalorder %s91, %s93
    %p97 = scmp.eq.s32.totalorder %s15, 0
    %p98 = por %p96, %p97
    %p99 = scmp.ne.s32.totalorder %s91, %s93
    %p100 = scmp.eq.s32.totalorder %s20, 1
    %p101 = por %p99, %p100
    %p102 = scmp.ne.s32.totalorder %s93, %s94
    %p103 = scmp.eq.s32.totalorder %s20, 0
    %p104 = por %p102, %p103
    %p105 = scmp.ne.s32.totalorder %s93, %s94
    %p106 = scmp.eq.s32.totalorder %s21, 1
    %p107 = por %p105, %p106
    %p109 = scmp.ne.s32.totalorder %s94, %s108
    %p110 = scmp.eq.s32.totalorder %s21, 0
    %p111 = por %p109, %p110
    %s113 = sadd.s32 %s112, 1
    %p116 = scmp.eq.s32.totalorder %s15, 1
    %p117 = scmp.ne.s32.totalorder %s112, %s114
    %p118 = scmp.eq.s32.totalorder %s15, 0
    %p119 = por %p117, %p118
    %p120 = scmp.ne.s32.totalorder %s112, %s114
    %p121 = scmp.eq.s32.totalorder %s20, 1
    %p122 = por %p120, %p121
    %p123 = scmp.ne.s32.totalorder %s114, %s115
    %p124 = scmp.eq.s32.totalorder %s20, 0
    %p125 = por %p123, %p124
    %p126 = scmp.ne.s32.totalorder %s114, %s115
    %p127 = scmp.eq.s32.totalorder %s21, 1
    %p128 = por %p126, %p127
    %p130 = scmp.ne.s32.totalorder %s115, %s129
    %p131 = scmp.eq.s32.totalorder %s21, 0
    %p132 = por %p130, %p131
    %s134 = sadd.s32 %s133, 1
    %p137 = scmp.eq.s32.totalorder %s15, 1
    %p138 = scmp.ne.s32.totalorder %s133, %s135
    %p139 = scmp.eq.s32.totalorder %s15, 0
    %p140 = por %p138, %p139
    %p141 = scmp.ne.s32.totalorder %s133, %s135
    %p142 = scmp.eq.s32.totalorder %s20, 1
    %p143 = por %p141, %p142
    %p144 = scmp.ne.s32.totalorder %s135, %s136
    %p145 = scmp.eq.s32.totalorder %s20, 0
    %p146 = por %p144, %p145
    %p147 = scmp.ne.s32.totalorder %s135, %s136
    %p148 = scmp.eq.s32.totalorder %s21, 1
    %p149 = por %p147, %p148
    %p151 = scmp.ne.s32.totalorder %s136, %s150
    %p152 = scmp.eq.s32.totalorder %s21, 0
    %p153 = por %p151, %p152
    %s155 = sadd.s32 %s154, 1
    %p158 = scmp.eq.s32.totalorder %s15, 1
    %p159 = scmp.ne.s32.totalorder %s154, %s156
    %p160 = scmp.eq.s32.totalorder %s15, 0
    %p161 = por %p159, %p160
    %p162 = scmp.ne.s32.totalorder %s154, %s156
    %p163 = scmp.eq.s32.totalorder %s20, 1
    %p164 = por %p162, %p163
    %p165 = scmp.ne.s32.totalorder %s156, %s157
    %p166 = scmp.eq.s32.totalorder %s20, 0
    %p167 = por %p165, %p166
    %p168 = scmp.ne.s32.totalorder %s156, %s157
    %p169 = scmp.eq.s32.totalorder %s21, 1
    %p170 = por %p168, %p169
    %p172 = scmp.ne.s32.totalorder %s157, %s171
    %p173 = scmp.eq.s32.totalorder %s21, 0
    %p174 = por %p172, %p173
    %s175 = ssub.s32 %s15, %s22
    %p176 = scmp.eq.s32.totalorder %s175, 0
    %s178 = sadd.s32 %s177, 1
    %s179 = scalar_select %p176, %s177, %s178
    %p182 = pneg %p176
    %p183 = scmp.eq.s32.totalorder %s15, 1
    %p184 = por %p182, %p183
    %p185 = scmp.ne.s32.totalorder %s177, %s180
    %p186 = scmp.eq.s32.totalorder %s15, 0
    %p187 = por %p185, %p186
    %p188 = scmp.ne.s32.totalorder %s177, %s180
    %p189 = scmp.eq.s32.totalorder %s20, 1
    %p190 = por %p188, %p189
    %p191 = scmp.ne.s32.totalorder %s180, %s181
    %p192 = scmp.eq.s32.totalorder %s20, 0
    %p193 = por %p191, %p192
    %p194 = scmp.ne.s32.totalorder %s180, %s181
    %p195 = scmp.eq.s32.totalorder %s21, 1
    %p196 = por %p194, %p195
    %p198 = scmp.ne.s32.totalorder %s181, %s197
    %p199 = scmp.eq.s32.totalorder %s21, 0
    %p200 = por %p198, %p199
    %s201 = ssub.s32 %s15, %s22
    %p202 = scmp.eq.s32.totalorder %s201, 0
    %s204 = sadd.s32 %s203, 1
    %s205 = scalar_select %p202, %s203, %s204
    %p208 = pneg %p202
    %p209 = scmp.eq.s32.totalorder %s15, 1
    %p210 = por %p208, %p209
    %p211 = scmp.ne.s32.totalorder %s203, %s206
    %p212 = scmp.eq.s32.totalorder %s15, 0
    %p213 = por %p211, %p212
    %p214 = scmp.ne.s32.totalorder %s203, %s206
    %p215 = scmp.eq.s32.totalorder %s20, 1
    %p216 = por %p214, %p215
    %p217 = scmp.ne.s32.totalorder %s206, %s207
    %p218 = scmp.eq.s32.totalorder %s20, 0
    %p219 = por %p217, %p218
    %p220 = scmp.ne.s32.totalorder %s206, %s207
    %p221 = scmp.eq.s32.totalorder %s21, 1
    %p222 = por %p220, %p221
    %p224 = scmp.ne.s32.totalorder %s207, %s223
    %p225 = scmp.eq.s32.totalorder %s21, 0
    %p226 = por %p224, %p225
    %p227 = scmp.le.s32.totalorder 1, %s15
    %p228 = scmp.lt.s32.totalorder %s15, 3
    %p229 = pnand %p227, %p228
    %p230 = pneg %p229
    // Predicated region
    $region9: #{deepace_forward.3} parent=5 // pred_check
      _
    $region10: #{deepace_forward.3} parent=5 // pred_check_branch
      %232 = sbr.rel (%p229) target = $region12
    $region11: #{deepace_forward.3} parent=5 // pred_region
      %s233 = ssub.s32 %s15, 1
      // Predicated region
      $region13: #{deepace_forward.3} parent=11 // pred_check
        %p234 = pneg %p62
      $region14: #{deepace_forward.3} parent=11 // pred_check_branch
        %236 = sbr.rel (%p234) target = $region16
      $region15: #{deepace_forward.3} parent=11 // pred_region
        _
      $region16: #{deepace_forward.3} parent=11 // pred_fallthru
        _
      // Predicated region
      $region17: #{deepace_forward.3} parent=11 // pred_check
        %p237 = pneg %p83
      $region18: #{deepace_forward.3} parent=11 // pred_check_branch
        %239 = sbr.rel (%p237) target = $region20
      $region19: #{deepace_forward.3} parent=11 // pred_region
        _
      $region20: #{deepace_forward.3} parent=11 // pred_fallthru
        _
      // Predicated region
      $region21: #{deepace_forward.3} parent=11 // pred_check
        %p240 = pneg %p104
      $region22: #{deepace_forward.3} parent=11 // pred_check_branch
        %242 = sbr.rel (%p240) target = $region24
      $region23: #{deepace_forward.3} parent=11 // pred_region
        _
      $region24: #{deepace_forward.3} parent=11 // pred_fallthru
        _
      // Predicated region
      $region25: #{deepace_forward.3} parent=11 // pred_check
        %p243 = pneg %p125
      $region26: #{deepace_forward.3} parent=11 // pred_check_branch
        %245 = sbr.rel (%p243) target = $region28
      $region27: #{deepace_forward.3} parent=11 // pred_region
        _
      $region28: #{deepace_forward.3} parent=11 // pred_fallthru
        _
      // Predicated region
      $region29: #{deepace_forward.3} parent=11 // pred_check
        %p246 = pneg %p146
      $region30: #{deepace_forward.3} parent=11 // pred_check_branch
        %248 = sbr.rel (%p246) target = $region32
      $region31: #{deepace_forward.3} parent=11 // pred_region
        _
      $region32: #{deepace_forward.3} parent=11 // pred_fallthru
        _
      // Predicated region
      $region33: #{deepace_forward.3} parent=11 // pred_check
        %p249 = pneg %p167
      $region34: #{deepace_forward.3} parent=11 // pred_check_branch
        %251 = sbr.rel (%p249) target = $region36
      $region35: #{deepace_forward.3} parent=11 // pred_region
        _
      $region36: #{deepace_forward.3} parent=11 // pred_fallthru
        _
    $region12: #{deepace_forward.3} parent=5 // pred_fallthru
      _
    %p252 = scmp.lt.s32.totalorder %s15, 2
    // Predicated region
    $region37: #{deepace_forward.3} parent=5 // pred_check
      %p253 = pneg %p252
    $region38: #{deepace_forward.3} parent=5 // pred_check_branch
      %255 = sbr.rel (%p253) target = $region40
    $region39: #{deepace_forward.3} parent=5 // pred_region
      // Predicated region
      $region41: #{deepace_forward.3} parent=39 // pred_check
        %p256 = pneg %p35
      $region42: #{deepace_forward.3} parent=39 // pred_check_branch
        %258 = sbr.rel (%p256) target = $region44
      $region43: #{deepace_forward.3} parent=39 // pred_region
        %p259 = scmp.lt.s32.totalorder %s15, 1
        %s260 = scalar_select %p259, %s15, 1
        %s261 = smul.addr %s260, 3
        %s262 = smul.addr %s261, 4
        %s263 = scalar_lea.vmem %s0, %s262
      $region44: #{deepace_forward.3} parent=39 // pred_fallthru
        _
    $region40: #{deepace_forward.3} parent=5 // pred_fallthru
      _
    %p264 = scmp.le.s32.totalorder 1, %s15
    %p265 = scmp.lt.s32.totalorder %s15, 3
    %p266 = pnand %p264, %p265
    %p267 = pneg %p266
    // Predicated region
    $region45: #{deepace_forward.3} parent=5 // pred_check
      _
    $region46: #{deepace_forward.3} parent=5 // pred_check_branch
      %269 = sbr.rel (%p266) target = $region48
    $region47: #{deepace_forward.3} parent=5 // pred_region
      %s270 = ssub.s32 %s15, 1
      %p271 = scmp.lt.s32.totalorder %s20, 1
      %s272 = scalar_select %p271, %s20, 1
      %s273 = smul.addr %s272, 3
      %s274 = smul.addr %s273, 4
      %s275 = scalar_lea.vmem %s0, %s274
      %p276 = pneg %p41
      %p277 = pneg %p38
      %p278 = pneg %p62
      %p279 = pneg %p59
      %p280 = pneg %p83
      %p281 = pneg %p80
      %p282 = pneg %p104
      %p283 = pneg %p101
      %p284 = pneg %p125
      %p285 = pneg %p122
      %p286 = pneg %p146
      %p287 = pneg %p143
      %p288 = pneg %p167
      %p289 = pneg %p164
      %p290 = pneg %p193
      %p291 = pneg %p190
      %p292 = scmp.lt.s32.totalorder %s20, 1
      %s293 = scalar_select %p292, %s20, 1
      %s294 = smul.addr %s293, 3
      %s295 = smul.addr %s294, 4
      %s296 = scalar_lea.vmem %s7, %s295
      %p297 = pneg %p219
      %p298 = pneg %p216
      %p299 = scmp.lt.s32.totalorder %s20, 1
      %s300 = scalar_select %p299, %s20, 1
      %s301 = smul.addr %s300, 6
      %s302 = smul.addr %s301, 8
      %s303 = scalar_lea.vmem %s8, %s302
      %p304 = scmp.lt.s32.totalorder %s20, 1
      %s305 = scalar_select %p304, %s20, 1
      %s306 = smul.addr %s305, 3
      %s307 = smul.addr %s306, 4
      %s308 = scalar_lea.vmem %s0, %s307
      %p309 = scmp.lt.s32.totalorder %s20, 1
      %s310 = scalar_select %p309, %s20, 1
      %s311 = smul.addr %s310, 3
      %s312 = smul.addr %s311, 4
      %s313 = scalar_lea.vmem %s7, %s312
      %p314 = scmp.lt.s32.totalorder %s20, 1
      %s315 = scalar_select %p314, %s20, 1
      %s316 = smul.addr %s315, 6
      %s317 = smul.addr %s316, 8
      %s318 = scalar_lea.vmem %s8, %s317
      %v320 = vld [vmem:[%s308] sm:$0xf]
      %v321 = vld [vmem:[%s308 + $0x4] sm:$0xf]
      %v322 = vld [vmem:[%s308 + $0x8] sm:$0x3]
      %v323 = vld [vmem:[%s1] sm:$0xf]
      %v324 = vld [vmem:[%s1 + $0x4] sm:$0xf]
      %v328 = vunpack.c.l.b16 %v320
      %v329 = vunpack.c.l.b16 %v321
      %v330 = vunpack.c.l.b16 %v322
      %v331 = vpack.c.b16 %v329, %v328
      %v332 = vpack.c.b16 %v330, %v330
      %v335 = vunpack.c.l.b16 %v323
      %v336 = vunpack.c.l.b16 %v324
      %v337 = vpack.c.b16 %v336, %v335
      %vm339 = vcmask 130048
      %v341 = vsel %vm339, %v331, 0
      %v344 = vsel %vm339, %v332, 0
      %346 = vmatprep.subr.bf16.mxu0 0
      %347 = vmatpush1.bf16.msra.mxu0 0
      %348 = vmatprep.subr.bf16.mxu0 0
      %349 = vmatpush1.bf16.msra.mxu0 0
      %350 = vmatprep.subr.bf16.mxu0 0
      %351 = vmatpush1.bf16.msra.mxu0 0
      %352 = vmatprep.subr.bf16.mxu0 0
      %353 = vmatpush1.bf16.msra.mxu0 0
      %354 = vmatprep.subr.bf16.mxu0 0
      %355 = vmatpush1.bf16.msra.mxu0 0
      %356 = vmatprep.subr.bf16.mxu0 0
      %357 = vmatpush1.bf16.msra.mxu0 0
      %358 = vmatprep.subr.bf16.mxu0 0
      %359 = vmatpush1.bf16.msra.mxu0 0
      %360 = vmatprep.subr.bf16.mxu0 0
      %361 = vmatpush1.bf16.msra.mxu0 %v337
      %362 = vmatprep.subr.bf16.mxu0 0
      %363 = vmatpush2.bf16.msra.mxu0 0
      %364 = vmatprep.subr.bf16.mxu0 0
      %365 = vmatpush2.bf16.msra.mxu0 0
      %366 = vmatprep.subr.bf16.mxu0 0
      %367 = vmatpush2.bf16.msra.mxu0 0
      %368 = vmatprep.subr.bf16.mxu0 0
      %369 = vmatpush2.bf16.msra.mxu0 0
      %370 = vmatprep.subr.bf16.mxu0 0
      %371 = vmatpush2.bf16.msra.mxu0 0
      %372 = vmatprep.subr.bf16.mxu0 0
      %373 = vmatpush2.bf16.msra.mxu0 0
      %374 = vmatprep.subr.bf16.mxu0 0
      %375 = vmatpush2.bf16.msra.mxu0 0
      %376 = vmatprep.subr.bf16.mxu0 0
      %377 = vmatpush2.bf16.msra.mxu0 0
      %378 = vmatprep.mubr.bf16.mxu0 0
      %379 = vmatmul.mubr.bf16.gmra.mxu0 %v341
      %v380 = vpop.f32.mrf.mxu0
      %v381 = vadd.f32 0.0, %v380
      %v382 = vpop.f32.mrf.mxu0
      %v383 = vpop.f32.mrf.mxu0
      %v384 = vadd.f32 0.0, %v383
      %v385 = vpop.f32.mrf.mxu0
      %386 = vmatprep.mubr.bf16.mxu0 0
      %387 = vmatmul.mubr.bf16.gmra.mxu0 %v344
      %v388 = vpop.f32.mrf.mxu0
      %v389 = vadd.f32 0.0, %v388
      %v390 = vpop.f32.mrf.mxu0
      %v391 = vpop.f32.mrf.mxu0
      %v392 = vpop.f32.mrf.mxu0
      %393 = vdwg.mxu0
      %v394 = vld [vmem:[%s2] sm:$0x1]
      %vm395 = vcmp.ge.f32.partialorder %v381, 0.0
      %vm396 = vcmp.ge.f32.partialorder %v384, 0.0
      %vm397 = vcmp.ge.f32.partialorder %v389, 0.0
      %v399 = vlaneseq
      %v400 = vshrl.u32 %v399, 7
      %v401 = vsub.s32 0, %v400
      %v402 = vrot.slane %v394, %v401
      %v404 = vmul.f32 %v381, %v402
      %v405 = vmul.f32 %v384, %v402
      %v406 = vmul.f32 %v389, %v402
      %v407 = vsel %vm395, %v381, %v404
      %v408 = vsel %vm396, %v384, %v405
      %v409 = vsel %vm397, %v389, %v406
      %v410 = vpack.c.bf16 %v408, %v407
      %v411 = vpack.c.bf16 %v409, %v409
      %v414 = vunpack.c.l.b16 %v410
      %v415 = vunpack.c.h.b16 %v410
      %v416 = vunpack.c.l.b16 %v411
      %v417 = vpack.c.b16 %v414, %v414
      %v418 = vpack.c.b16 %v415, %v415
      %v419 = vpack.c.b16 %v416, %v416
      %423 = vst [vmem:[%s313] sm:$0xf] %v417
      %424 = vst [vmem:[%s313 + $0x4] sm:$0xf] %v418
      %425 = vst [vmem:[%s313 + $0x8] sm:$0x3] %v419
      %v426 = vld [vmem:[%s3] sm:$0x1]
      %v427 = vld [vmem:[%s4] sm:$0x1]
      %v428 = vadd.f32 %v407, %v408
      %vm429 = vcmask 1043456
      %v430 = vsel %vm429, %v409, 0.0
      %v431 = vadd.f32 %v428, %v430
      %432 = vadd.xlane.f32.xlu0 %v431
      %v433 = vpop.xlane.xlu0 %432
      %v434 = vrot.slane %v433, 4
      %v435 = vadd.f32 %v433, %v434
      %v436 = vrot.slane %v435, 2
      %v437 = vadd.f32 %v435, %v436
      %v438 = vrot.slane %v437, 1
      %v439 = vadd.f32 %v437, %v438
      %s440 = vtos %v439
      %v441 = vstv %s440
      %v442 = vmul.f32 %v407, %v407
      %v443 = vmul.f32 %v408, %v408
      %v444 = vmul.f32 %v409, %v409
      %v445 = vadd.f32 %v442, %v443
      %v446 = vsel %vm429, %v444, 0.0
      %v447 = vadd.f32 %v445, %v446
      %448 = vadd.xlane.f32.xlu0 %v447
      %v449 = vpop.xlane.xlu0 %448
      %v450 = vrot.slane %v449, 4
      %v451 = vadd.f32 %v449, %v450
      %v452 = vrot.slane %v451, 2
      %v453 = vadd.f32 %v451, %v452
      %v454 = vrot.slane %v453, 1
      %v455 = vadd.f32 %v453, %v454
      %s456 = vtos %v455
      %v457 = vstv %s456
      %v458 = vrcp.pop 1280.0
      %v459 = vmul.f32 %v441, %v458
      %v460 = vmul.f32 %v457, %v458
      %v461 = vmul.f32 %v459, %v459
      %v462 = vsub.f32 %v460, %v461
      %v463 = vmax.f32 %v462, 0.0
      %v464 = vadd.f32 %v463, 1e-08
      %v465 = vrsqrt.pop %v464
      %v466 = vmul.f32 %v465, %v426
      %v467 = vmul.f32 %v459, %v466
      %v468 = vsub.f32 %v427, %v467
      %v470 = vlaneseq
      %v471 = vshrl.u32 %v470, 7
      %v472 = vsub.s32 0, %v471
      %v473 = vrot.slane %v466, %v472
      %v475 = vmul.f32 %v407, %v473
      %v476 = vmul.f32 %v408, %v473
      %v477 = vmul.f32 %v409, %v473
      %v479 = vlaneseq
      %v480 = vshrl.u32 %v479, 7
      %v481 = vsub.s32 0, %v480
      %v482 = vrot.slane %v468, %v481
      %v484 = vadd.f32 %v475, %v482
      %v485 = vadd.f32 %v476, %v482
      %v486 = vadd.f32 %v477, %v482
      %v487 = vpack.c.bf16 %v485, %v484
      %v488 = vpack.c.bf16 %v486, %v486
      %v489 = vld [vmem:[%s5] sm:$0xff]
      %v490 = vld [vmem:[%s5 + $0x8] sm:$0xff]
      %v491 = vld [vmem:[%s5 + $0x10] sm:$0xff]
      %v492 = vld [vmem:[%s5 + $0x18] sm:$0xff]
      %v493 = vld [vmem:[%s5 + $0x20] sm:$0xff]
      %v494 = vld [vmem:[%s5 + $0x28] sm:$0xff]
      %v495 = vld [vmem:[%s5 + $0x30] sm:$0xff]
      %v496 = vld [vmem:[%s5 + $0x38] sm:$0xff]
      %v497 = vld [vmem:[%s5 + $0x40] sm:$0xff]
      %v498 = vld [vmem:[%s5 + $0x48] sm:$0xff]
      %v499 = vld [vmem:[%s5 + $0x50] sm:$0xff]
      %v500 = vld [vmem:[%s5 + $0x58] sm:$0xff]
      %v501 = vld [vmem:[%s5 + $0x60] sm:$0xff]
      %v502 = vld [vmem:[%s5 + $0x68] sm:$0xff]
      %v503 = vld [vmem:[%s5 + $0x70] sm:$0xff]
      %v504 = vld [vmem:[%s5 + $0x78] sm:$0xff]
      %v505 = vld [vmem:[%s6] sm:$0x3]
      %v507 = vlaneseq
      %v508 = vshrl.u32 %v507, 7
      %v509 = vsub.s32 0, %v508
      %v510 = vrot.slane %v505, %v509
      %v511 = vlaneseq
      %v512 = vshrl.u32 %v511, 7
      %v513 = vsub.s32 1, %v512
      %v514 = vrot.slane %v505, %v513
      %v533 = vunpack.c.l.b16 %v489
      %v534 = vunpack.c.h.b16 %v489
      %v535 = vunpack.c.l.b16 %v490
      %v536 = vunpack.c.h.b16 %v490
      %v537 = vunpack.c.l.b16 %v491
      %v538 = vunpack.c.h.b16 %v491
      %v539 = vunpack.c.l.b16 %v492
      %v540 = vunpack.c.h.b16 %v492
      %v541 = vunpack.c.l.b16 %v493
      %v542 = vunpack.c.h.b16 %v493
      %v543 = vunpack.c.l.b16 %v494
      %v544 = vunpack.c.h.b16 %v494
      %v545 = vunpack.c.l.b16 %v495
      %v546 = vunpack.c.h.b16 %v495
      %v547 = vunpack.c.l.b16 %v496
      %v548 = vunpack.c.h.b16 %v496
      %v549 = vunpack.c.l.b16 %v497
      %v550 = vunpack.c.h.b16 %v497
      %v551 = vunpack.c.l.b16 %v498
      %v552 = vunpack.c.h.b16 %v498
      %v553 = vunpack.c.l.b16 %v499
      %v554 = vunpack.c.h.b16 %v499
      %v555 = vunpack.c.l.b16 %v500
      %v556 = vunpack.c.h.b16 %v500
      %v557 = vunpack.c.l.b16 %v501
      %v558 = vunpack.c.h.b16 %v501
      %v559 = vunpack.c.l.b16 %v502
      %v560 = vunpack.c.h.b16 %v502
      %v561 = vunpack.c.l.b16 %v503
      %v562 = vunpack.c.h.b16 %v503
      %v563 = vunpack.c.l.b16 %v504
      %v564 = vunpack.c.h.b16 %v504
      %v565 = vpack.c.b16 %v535, %v533
      %v566 = vpack.c.b16 %v536, %v534
      %v567 = vpack.c.b16 %v539, %v537
      %v568 = vpack.c.b16 %v540, %v538
      %v569 = vpack.c.b16 %v543, %v541
      %v570 = vpack.c.b16 %v544, %v542
      %v571 = vpack.c.b16 %v547, %v545
      %v572 = vpack.c.b16 %v548, %v546
      %v573 = vpack.c.b16 %v551, %v549
      %v574 = vpack.c.b16 %v552, %v550
      %v575 = vpack.c.b16 %v555, %v553
      %v576 = vpack.c.b16 %v556, %v554
      %v577 = vpack.c.b16 %v559, %v557
      %v578 = vpack.c.b16 %v560, %v558
      %v579 = vpack.c.b16 %v563, %v561
      %v580 = vpack.c.b16 %v564, %v562
      %597 = vmatprep.subr.bf16.mxu0 %v580
      %598 = vmatpush1.bf16.msra.mxu0 %v579
      %599 = vmatprep.subr.bf16.mxu0 %v578
      %600 = vmatpush1.bf16.msra.mxu0 %v577
      %601 = vmatprep.subr.bf16.mxu0 %v576
      %602 = vmatpush1.bf16.msra.mxu0 %v575
      %603 = vmatprep.subr.bf16.mxu0 %v574
      %604 = vmatpush1.bf16.msra.mxu0 %v573
      %605 = vmatprep.subr.bf16.mxu0 %v572
      %606 = vmatpush1.bf16.msra.mxu0 %v571
      %607 = vmatprep.subr.bf16.mxu0 %v570
      %608 = vmatpush1.bf16.msra.mxu0 %v569
      %609 = vmatprep.subr.bf16.mxu0 %v568
      %610 = vmatpush1.bf16.msra.mxu0 %v567
      %611 = vmatprep.subr.bf16.mxu0 %v566
      %612 = vmatpush1.bf16.msra.mxu0 %v565
      %613 = vmatprep.subr.bf16.mxu0 0
      %614 = vmatpush2.bf16.msra.mxu0 0
      %615 = vmatprep.subr.bf16.mxu0 0
      %616 = vmatpush2.bf16.msra.mxu0 0
      %617 = vmatprep.subr.bf16.mxu0 0
      %618 = vmatpush2.bf16.msra.mxu0 0
      %619 = vmatprep.subr.bf16.mxu0 0
      %620 = vmatpush2.bf16.msra.mxu0 0
      %621 = vmatprep.subr.bf16.mxu0 0
      %622 = vmatpush2.bf16.msra.mxu0 0
      %623 = vmatprep.subr.bf16.mxu0 0
      %624 = vmatpush2.bf16.msra.mxu0 0
      %625 = vmatprep.subr.bf16.mxu0 0
      %626 = vmatpush2.bf16.msra.mxu0 0
      %627 = vmatprep.subr.bf16.mxu0 0
      %628 = vmatpush2.bf16.msra.mxu0 0
      %629 = vmatprep.mubr.bf16.mxu0 0
      %630 = vmatmul.mubr.bf16.gmra.mxu0 %v487
      %v631 = vpop.f32.mrf.mxu0
      %v632 = vadd.f32 %v510, %v631
      %v633 = vpop.f32.mrf.mxu0
      %v634 = vadd.f32 %v514, %v633
      %v635 = vpop.f32.mrf.mxu0
      %v636 = vadd.f32 %v510, %v635
      %v637 = vpop.f32.mrf.mxu0
      %v638 = vadd.f32 %v514, %v637
      %639 = vmatprep.mubr.bf16.mxu0 0
      %640 = vmatmul.mubr.bf16.gmra.mxu0 %v488
      %v641 = vpop.f32.mrf.mxu0
      %v642 = vadd.f32 %v510, %v641
      %v643 = vpop.f32.mrf.mxu0
      %v644 = vadd.f32 %v514, %v643
      %v645 = vpop.f32.mrf.mxu0
      %v646 = vpop.f32.mrf.mxu0
      %647 = vdwg.mxu0
      %648 = vst [vmem:[%s318] sm:$0xff] %v632
      %649 = vst [vmem:[%s318 + $0x8] sm:$0xff] %v634
      %650 = vst [vmem:[%s318 + $0x10] sm:$0xff] %v636
      %651 = vst [vmem:[%s318 + $0x18] sm:$0xff] %v638
      %652 = vst [vmem:[%s318 + $0x20] sm:$0xf] %v642
      %653 = vst [vmem:[%s318 + $0x28] sm:$0xf] %v644
      %p654 = scmp.lt.s32.totalorder %s20, 1
      %s655 = scalar_select %p654, %s20, 1
      %s656 = smul.addr %s655, 3
      %s657 = smul.addr %s656, 4
      %s658 = scalar_lea.vmem %s7, %s657
      %p659 = scmp.lt.s32.totalorder %s20, 1
      %s660 = scalar_select %p659, %s20, 1
      %s661 = smul.addr %s660, 6
      %s662 = smul.addr %s661, 8
      %s663 = scalar_lea.vmem %s8, %s662
      // Predicated region
      $region49: #{deepace_forward.3} parent=47 // pred_check
        %p664 = pneg %p190
      $region50: #{deepace_forward.3} parent=47 // pred_check_branch
        %666 = sbr.rel (%p664) target = $region52
      $region51: #{deepace_forward.3} parent=47 // pred_region
        _
      $region52: #{deepace_forward.3} parent=47 // pred_fallthru
        _
      // Predicated region
      $region53: #{deepace_forward.3} parent=47 // pred_check
        %p667 = pneg %p216
      $region54: #{deepace_forward.3} parent=47 // pred_check_branch
        %669 = sbr.rel (%p667) target = $region56
      $region55: #{deepace_forward.3} parent=47 // pred_region
        _
      $region56: #{deepace_forward.3} parent=47 // pred_fallthru
        _
    $region48: #{deepace_forward.3} parent=5 // pred_fallthru
      _
    %p670 = scmp.le.s32.totalorder 2, %s15
    // Predicated region
    $region57: #{deepace_forward.3} parent=5 // pred_check
      %p671 = pneg %p670
    $region58: #{deepace_forward.3} parent=5 // pred_check_branch
      %673 = sbr.rel (%p671) target = $region60
    $region59: #{deepace_forward.3} parent=5 // pred_region
      %s674 = ssub.s32 %s15, 2
      // Predicated region
      $region61: #{deepace_forward.3} parent=59 // pred_check
        %p675 = pneg %p196
      $region62: #{deepace_forward.3} parent=59 // pred_check_branch
        %677 = sbr.rel (%p675) target = $region64
      $region63: #{deepace_forward.3} parent=59 // pred_region
        %p678 = scmp.lt.s32.totalorder %s21, 1
        %s679 = scalar_select %p678, %s21, 1
        %s680 = smul.addr %s679, 3
        %s681 = smul.addr %s680, 4
        %s682 = scalar_lea.vmem %s7, %s681
      $region64: #{deepace_forward.3} parent=59 // pred_fallthru
        _
      // Predicated region
      $region65: #{deepace_forward.3} parent=59 // pred_check
        %p683 = pneg %p222
      $region66: #{deepace_forward.3} parent=59 // pred_check_branch
        %685 = sbr.rel (%p683) target = $region68
      $region67: #{deepace_forward.3} parent=59 // pred_region
        %p686 = scmp.lt.s32.totalorder %s21, 1
        %s687 = scalar_select %p686, %s21, 1
        %s688 = smul.addr %s687, 6
        %s689 = smul.addr %s688, 8
        %s690 = scalar_lea.vmem %s8, %s689
      $region68: #{deepace_forward.3} parent=59 // pred_fallthru
        _
    $region60: #{deepace_forward.3} parent=5 // pred_fallthru
      _
  $region6: #{deepace_forward.3} parent=0 // loop_footer
    %s19 = sadd.s32 1, %s15
  $region7: #{deepace_forward.3} parent=0 // loop_footer_branch
    %14 = sbr.rel target = $region3
  $region8: #{deepace_forward.3} parent=0 // loop_exit
    _

// kernel: deepace_forward.4
$region0: #{deepace_forward.4}
  #allocation0 [shape = 'u32[]', space=smem, size = 0x4, offset = 0x4, fixed_abs, tag = 'smem constant byte address 0x4 - core index']
  #allocation1 [shape = 'u32[144,128]{1,0:T(1,128)}', space=vmem, size = 0x12000, scoped, tag = 'internal scratch']
  #allocation2 [shape = 'f32[36,128]{1,0:T(8,128)}', space=vmem, size = 0x5000, scoped, tag = 'scratch operand']
  #allocation3 [shape = 's32[1]{0}', space=sflag, size = 0x4, scoped, tag = 'scoped memory for deepace_forward.4']
  #allocation4 [shape = 'u8[512]{0}', space=smem, size = 0x200, scoped, tag = 'prefetched SMEM operand 0']
  #allocation5 [shape = 'u8[512]{0}', space=smem, size = 0x200, scoped, tag = 'prefetched SMEM operand 1']
  %s0 = inlined_call_operand.hbm [shape: s32[4], index: 0, kind: input, shape index: {}]
  %s1 = inlined_call_operand.hbm [shape: s32[4], index: 1, kind: input, shape index: {}]
  %s2 = inlined_call_operand.vmem [shape: f32[2,20,256], index: 2, kind: input, shape index: {}]
  %s3 = inlined_call_operand.vmem [shape: bf16[4,128,128], index: 3, kind: input, shape index: {}]
  %s4 = inlined_call_operand.vmem [shape: f32[4,1,128], index: 4, kind: input, shape index: {}]
  %s5 = inlined_call_operand.vmem [shape: f32[4,1,128], index: 5, kind: input, shape index: {}]
  %s6 = inlined_call_operand.hbm [shape: f32[4,1,128], index: 6, kind: input, shape index: {}]
  %s7 = inlined_call_operand.hbm [shape: f32[4,1,128], index: 7, kind: input, shape index: {}]
  %s8 = inlined_call_operand.vmem [shape: f32[4,3,128], index: 8, kind: input, shape index: {}]
  %s9 = inlined_call_operand.hbm [shape: f32[4,1,128], index: 9, kind: input, shape index: {}]
  %s10 = inlined_call_operand.hbm [shape: f32[4,1,128], index: 10, kind: input, shape index: {}]
  %s11 = inlined_call_operand.hbm [shape: f32[4,1,128], index: 11, kind: input, shape index: {}]
  %s12 = inlined_call_operand.hbm [shape: f32[4,1,128], index: 12, kind: input, shape index: {}]
  %s13 = inlined_call_operand.vmem [shape: bf16[4,128,256], index: 13, kind: input, shape index: {}]
  %s14 = inlined_call_operand.vmem [shape: f32[4,1,256], index: 14, kind: input, shape index: {}]
  %s15 = inlined_call_operand.vmem [shape: f32[2,20,256], index: 15, kind: output, shape index: {}]
  %s16 = sld [smem:[#allocation0]]
  $region113: #{deepace_forward.4} parent=0
    _
  %s18 = ssub.s32 1, %s16
  %s19 = scalar_select 0, %s18, %s16
  %21 = dma.hbm_to_smem %s0, 16, [#allocation4], [#allocation3]
  %23 = dma.hbm_to_smem %s1, 16, [#allocation5], [#allocation3]
  %24 = dma.done [#allocation3], 32
  %25 = sfence
  $region1: #{deepace_forward.4} parent=0
    #allocation6 [shape = 'u8[1024]{0}', space=vmem, size = 0x400, scoped, tag = 'input window, operand 6']
    #allocation7 [shape = 's32[2]{0}', space=sflag, size = 0x8, scoped, tag = 'scoped memory for deepace_forward.4']
    #allocation8 [shape = 'u8[1024]{0}', space=vmem, size = 0x400, scoped, tag = 'input window, operand 7']
    #allocation9 [shape = 's32[2]{0}', space=sflag, size = 0x8, scoped, tag = 'scoped memory for deepace_forward.4']
    #allocation10 [shape = 'u8[1024]{0}', space=vmem, size = 0x400, scoped, tag = 'input window, operand 9']
    #allocation11 [shape = 'u8[1024]{0}', space=vmem, size = 0x400, scoped, tag = 'input window, operand 10']
    #allocation12 [shape = 's32[2]{0}', space=sflag, size = 0x8, scoped, tag = 'scoped memory for deepace_forward.4']
    #allocation13 [shape = 'u8[1024]{0}', space=vmem, size = 0x400, scoped, tag = 'input window, operand 11']
    #allocation14 [shape = 'u8[1024]{0}', space=vmem, size = 0x400, scoped, tag = 'input window, operand 12']
    #allocation15 [shape = 's32[2]{0}', space=sflag, size = 0x8, scoped, tag = 'scoped memory for deepace_forward.4']
    %26 = vsyncpa [#allocation7], 0
    %s27 = scalar_lea.sflag [#allocation7], 1
    %28 = vsyncpa %s27, 0
    %29 = vsyncpa [#allocation9], 0
    %s30 = scalar_lea.sflag [#allocation9], 1
    %31 = vsyncpa %s30, 0
    %32 = vsyncpa [#allocation12], 0
    %s33 = scalar_lea.sflag [#allocation12], 1
    %34 = vsyncpa %s33, 0
    %35 = vsyncpa [#allocation15], 0
    %s36 = scalar_lea.sflag [#allocation15], 1
    %37 = vsyncpa %s36, 0
    loop: start=0, step=1, limit=10
    $region2: #{deepace_forward.4} parent=1 // loop_pre_header
      _
    $region3: #{deepace_forward.4} parent=1 // loop_header
      %s39 = sphi 0, %s43
      %p40 = scmp.ge.s32.totalorder %s39, 10
      %s46 = sphi 0, %s58
      %s47 = sphi 0, %s54
      %s48 = sphi 0, %s46
      %s49 = sphi 0, %s47
      %s50 = sphi 0, %s48
      %s51 = sphi 0, %s49
      %s61 = sphi 0, %s63
      %s64 = sphi 0, %s61
      %s65 = sphi 0, %s64
      %s81 = sphi 0, %s65
      %s87 = sphi 0, %s89
      %s90 = sphi 0, %s87
      %s91 = sphi 0, %s90
      %s107 = sphi 0, %s91
      %s113 = sphi 0, %s115
      %s116 = sphi 0, %s113
      %s117 = sphi 0, %s116
      %s133 = sphi 0, %s117
      %s139 = sphi 0, %s141
      %s142 = sphi 0, %s139
      %s143 = sphi 0, %s142
      %s159 = sphi 0, %s143
      %s165 = sphi 0, %s167
      %s168 = sphi 0, %s165
      %s169 = sphi 0, %s168
      %s185 = sphi 0, %s169
      %s191 = sphi 0, %s193
      %s194 = sphi 0, %s191
      %s195 = sphi 0, %s194
      %s211 = sphi 0, %s195
      %s217 = sphi 0, %s219
      %s220 = sphi 0, %s217
      %s221 = sphi 0, %s220
      %s237 = sphi 0, %s221
      %s243 = sphi 0, %s245
      %s246 = sphi 0, %s243
      %s247 = sphi 0, %s246
      %s263 = sphi 0, %s247
      %s269 = sphi 0, %s271
      %s272 = sphi 0, %s269
      %s273 = sphi 0, %s272
      %s289 = sphi 0, %s273
      %s295 = sphi 0, %s297
      %s298 = sphi 0, %s295
      %s299 = sphi 0, %s298
      %s315 = sphi 0, %s299
      %s321 = sphi 0, %s323
      %s324 = sphi 0, %s321
      %s325 = sphi 0, %s324
      %s341 = sphi 0, %s325
      %s347 = sphi 0, %s349
      %s350 = sphi 0, %s347
      %s351 = sphi 0, %s350
      %s367 = sphi 0, %s351
      %s373 = sphi 0, %s375
      %s376 = sphi 0, %s373
      %s377 = sphi 0, %s376
      %s393 = sphi 0, %s377
      %s399 = sphi 0, %s401
      %s402 = sphi 0, %s399
      %s403 = sphi 0, %s402
      %s419 = sphi 0, %s403
    $region4: #{deepace_forward.4} parent=1 // loop_header_branch
      %42 = sbr.rel (%p40) target = $region8
    $region5: #{deepace_forward.4} parent=1 // loop_body
      %s44 = ssub.s32 %s39, 1
      %s45 = ssub.s32 %s39, 2
      %s52 = sadd.s32 1, %s47
      %p53 = scmp.ge.s32.totalorder %s52, 4
      %s54 = scalar_select %p53, 0, %s52
      %s55 = sadd.s32 1, %s46
      %s56 = scalar_select %p53, %s55, %s46
      %p57 = scmp.ge.s32.totalorder %s56, 2
      %s58 = scalar_select %p57, 0, %s56
      %s59 = ssub.s32 %s46, %s58
      %p60 = scmp.eq.s32.totalorder %s59, 0
      %s62 = sadd.s32 %s61, 1
      %s63 = scalar_select %p60, %s61, %s62
      %p66 = pneg %p60
      %p67 = scmp.eq.s32.totalorder %s39, 7
      %p68 = por %p66, %p67
      %p69 = scmp.ne.s32.totalorder %s61, %s64
      %p70 = scmp.eq.s32.totalorder %s39, 0
      %p71 = por %p69, %p70
      %p72 = scmp.ne.s32.totalorder %s61, %s64
      %p73 = scmp.eq.s32.totalorder %s44, 7
      %p74 = por %p72, %p73
      %p75 = scmp.ne.s32.totalorder %s64, %s65
      %p76 = scmp.eq.s32.totalorder %s44, 0
      %p77 = por %p75, %p76
      %p78 = scmp.ne.s32.totalorder %s64, %s65
      %p79 = scmp.eq.s32.totalorder %s45, 7
      %p80 = por %p78, %p79
      %p82 = scmp.ne.s32.totalorder %s65, %s81
      %p83 = scmp.eq.s32.totalorder %s45, 0
      %p84 = por %p82, %p83
      %s85 = ssub.s32 %s47, %s54
      %p86 = scmp.eq.s32.totalorder %s85, 0
      %s88 = sadd.s32 %s87, 1
      %s89 = scalar_select %p86, %s87, %s88
      %p92 = pneg %p86
      %p93 = scmp.eq.s32.totalorder %s39, 7
      %p94 = por %p92, %p93
      %p95 = scmp.ne.s32.totalorder %s87, %s90
      %p96 = scmp.eq.s32.totalorder %s39, 0
      %p97 = por %p95, %p96
      %p98 = scmp.ne.s32.totalorder %s87, %s90
      %p99 = scmp.eq.s32.totalorder %s44, 7
      %p100 = por %p98, %p99
      %p101 = scmp.ne.s32.totalorder %s90, %s91
      %p102 = scmp.eq.s32.totalorder %s44, 0
      %p103 = por %p101, %p102
      %p104 = scmp.ne.s32.totalorder %s90, %s91
      %p105 = scmp.eq.s32.totalorder %s45, 7
      %p106 = por %p104, %p105
      %p108 = scmp.ne.s32.totalorder %s91, %s107
      %p109 = scmp.eq.s32.totalorder %s45, 0
      %p110 = por %p108, %p109
      %s111 = ssub.s32 %s47, %s54
      %p112 = scmp.eq.s32.totalorder %s111, 0
      %s114 = sadd.s32 %s113, 1
      %s115 = scalar_select %p112, %s113, %s114
      %p118 = pneg %p112
      %p119 = scmp.eq.s32.totalorder %s39, 7
      %p120 = por %p118, %p119
      %p121 = scmp.ne.s32.totalorder %s113, %s116
      %p122 = scmp.eq.s32.totalorder %s39, 0
      %p123 = por %p121, %p122
      %p124 = scmp.ne.s32.totalorder %s113, %s116
      %p125 = scmp.eq.s32.totalorder %s44, 7
      %p126 = por %p124, %p125
      %p127 = scmp.ne.s32.totalorder %s116, %s117
      %p128 = scmp.eq.s32.totalorder %s44, 0
      %p129 = por %p127, %p128
      %p130 = scmp.ne.s32.totalorder %s116, %s117
      %p131 = scmp.eq.s32.totalorder %s45, 7
      %p132 = por %p130, %p131
      %p134 = scmp.ne.s32.totalorder %s117, %s133
      %p135 = scmp.eq.s32.totalorder %s45, 0
      %p136 = por %p134, %p135
      %s137 = ssub.s32 %s47, %s54
      %p138 = scmp.eq.s32.totalorder %s137, 0
      %s140 = sadd.s32 %s139, 1
      %s141 = scalar_select %p138, %s139, %s140
      %p144 = pneg %p138
      %p145 = scmp.eq.s32.totalorder %s39, 7
      %p146 = por %p144, %p145
      %p147 = scmp.ne.s32.totalorder %s139, %s142
      %p148 = scmp.eq.s32.totalorder %s39, 0
      %p149 = por %p147, %p148
      %p150 = scmp.ne.s32.totalorder %s139, %s142
      %p151 = scmp.eq.s32.totalorder %s44, 7
      %p152 = por %p150, %p151
      %p153 = scmp.ne.s32.totalorder %s142, %s143
      %p154 = scmp.eq.s32.totalorder %s44, 0
      %p155 = por %p153, %p154
      %p156 = scmp.ne.s32.totalorder %s142, %s143
      %p157 = scmp.eq.s32.totalorder %s45, 7
      %p158 = por %p156, %p157
      %p160 = scmp.ne.s32.totalorder %s143, %s159
      %p161 = scmp.eq.s32.totalorder %s45, 0
      %p162 = por %p160, %p161
      %s163 = ssub.s32 %s47, %s54
      %p164 = scmp.eq.s32.totalorder %s163, 0
      %s166 = sadd.s32 %s165, 1
      %s167 = scalar_select %p164, %s165, %s166
      %p170 = pneg %p164
      %p171 = scmp.eq.s32.totalorder %s39, 7
      %p172 = por %p170, %p171
      %p173 = scmp.ne.s32.totalorder %s165, %s168
      %p174 = scmp.eq.s32.totalorder %s39, 0
      %p175 = por %p173, %p174
      %p176 = scmp.ne.s32.totalorder %s165, %s168
      %p177 = scmp.eq.s32.totalorder %s44, 7
      %p178 = por %p176, %p177
      %p179 = scmp.ne.s32.totalorder %s168, %s169
      %p180 = scmp.eq.s32.totalorder %s44, 0
      %p181 = por %p179, %p180
      %p182 = scmp.ne.s32.totalorder %s168, %s169
      %p183 = scmp.eq.s32.totalorder %s45, 7
      %p184 = por %p182, %p183
      %p186 = scmp.ne.s32.totalorder %s169, %s185
      %p187 = scmp.eq.s32.totalorder %s45, 0
      %p188 = por %p186, %p187
      %s189 = ssub.s32 %s47, %s54
      %p190 = scmp.eq.s32.totalorder %s189, 0
      %s192 = sadd.s32 %s191, 1
      %s193 = scalar_select %p190, %s191, %s192
      %p196 = pneg %p190
      %p197 = scmp.eq.s32.totalorder %s39, 7
      %p198 = por %p196, %p197
      %p199 = scmp.ne.s32.totalorder %s191, %s194
      %p200 = scmp.eq.s32.totalorder %s39, 0
      %p201 = por %p199, %p200
      %p202 = scmp.ne.s32.totalorder %s191, %s194
      %p203 = scmp.eq.s32.totalorder %s44, 7
      %p204 = por %p202, %p203
      %p205 = scmp.ne.s32.totalorder %s194, %s195
      %p206 = scmp.eq.s32.totalorder %s44, 0
      %p207 = por %p205, %p206
      %p208 = scmp.ne.s32.totalorder %s194, %s195
      %p209 = scmp.eq.s32.totalorder %s45, 7
      %p210 = por %p208, %p209
      %p212 = scmp.ne.s32.totalorder %s195, %s211
      %p213 = scmp.eq.s32.totalorder %s45, 0
      %p214 = por %p212, %p213
      %s215 = ssub.s32 %s47, %s54
      %p216 = scmp.eq.s32.totalorder %s215, 0
      %s218 = sadd.s32 %s217, 1
      %s219 = scalar_select %p216, %s217, %s218
      %p222 = pneg %p216
      %p223 = scmp.eq.s32.totalorder %s39, 7
      %p224 = por %p222, %p223
      %p225 = scmp.ne.s32.totalorder %s217, %s220
      %p226 = scmp.eq.s32.totalorder %s39, 0
      %p227 = por %p225, %p226
      %p228 = scmp.ne.s32.totalorder %s217, %s220
      %p229 = scmp.eq.s32.totalorder %s44, 7
      %p230 = por %p228, %p229
      %p231 = scmp.ne.s32.totalorder %s220, %s221
      %p232 = scmp.eq.s32.totalorder %s44, 0
      %p233 = por %p231, %p232
      %p234 = scmp.ne.s32.totalorder %s220, %s221
      %p235 = scmp.eq.s32.totalorder %s45, 7
      %p236 = por %p234, %p235
      %p238 = scmp.ne.s32.totalorder %s221, %s237
      %p239 = scmp.eq.s32.totalorder %s45, 0
      %p240 = por %p238, %p239
      %s241 = ssub.s32 %s47, %s54
      %p242 = scmp.eq.s32.totalorder %s241, 0
      %s244 = sadd.s32 %s243, 1
      %s245 = scalar_select %p242, %s243, %s244
      %p248 = pneg %p242
      %p249 = scmp.eq.s32.totalorder %s39, 7
      %p250 = por %p248, %p249
      %p251 = scmp.ne.s32.totalorder %s243, %s246
      %p252 = scmp.eq.s32.totalorder %s39, 0
      %p253 = por %p251, %p252
      %p254 = scmp.ne.s32.totalorder %s243, %s246
      %p255 = scmp.eq.s32.totalorder %s44, 7
      %p256 = por %p254, %p255
      %p257 = scmp.ne.s32.totalorder %s246, %s247
      %p258 = scmp.eq.s32.totalorder %s44, 0
      %p259 = por %p257, %p258
      %p260 = scmp.ne.s32.totalorder %s246, %s247
      %p261 = scmp.eq.s32.totalorder %s45, 7
      %p262 = por %p260, %p261
      %p264 = scmp.ne.s32.totalorder %s247, %s263
      %p265 = scmp.eq.s32.totalorder %s45, 0
      %p266 = por %p264, %p265
      %s267 = ssub.s32 %s47, %s54
      %p268 = scmp.eq.s32.totalorder %s267, 0
      %s270 = sadd.s32 %s269, 1
      %s271 = scalar_select %p268, %s269, %s270
      %p274 = pneg %p268
      %p275 = scmp.eq.s32.totalorder %s39, 7
      %p276 = por %p274, %p275
      %p277 = scmp.ne.s32.totalorder %s269, %s272
      %p278 = scmp.eq.s32.totalorder %s39, 0
      %p279 = por %p277, %p278
      %p280 = scmp.ne.s32.totalorder %s269, %s272
      %p281 = scmp.eq.s32.totalorder %s44, 7
      %p282 = por %p280, %p281
      %p283 = scmp.ne.s32.totalorder %s272, %s273
      %p284 = scmp.eq.s32.totalorder %s44, 0
      %p285 = por %p283, %p284
      %p286 = scmp.ne.s32.totalorder %s272, %s273
      %p287 = scmp.eq.s32.totalorder %s45, 7
      %p288 = por %p286, %p287
      %p290 = scmp.ne.s32.totalorder %s273, %s289
      %p291 = scmp.eq.s32.totalorder %s45, 0
      %p292 = por %p290, %p291
      %s293 = ssub.s32 %s47, %s54
      %p294 = scmp.eq.s32.totalorder %s293, 0
      %s296 = sadd.s32 %s295, 1
      %s297 = scalar_select %p294, %s295, %s296
      %p300 = pneg %p294
      %p301 = scmp.eq.s32.totalorder %s39, 7
      %p302 = por %p300, %p301
      %p303 = scmp.ne.s32.totalorder %s295, %s298
      %p304 = scmp.eq.s32.totalorder %s39, 0
      %p305 = por %p303, %p304
      %p306 = scmp.ne.s32.totalorder %s295, %s298
      %p307 = scmp.eq.s32.totalorder %s44, 7
      %p308 = por %p306, %p307
      %p309 = scmp.ne.s32.totalorder %s298, %s299
      %p310 = scmp.eq.s32.totalorder %s44, 0
      %p311 = por %p309, %p310
      %p312 = scmp.ne.s32.totalorder %s298, %s299
      %p313 = scmp.eq.s32.totalorder %s45, 7
      %p314 = por %p312, %p313
      %p316 = scmp.ne.s32.totalorder %s299, %s315
      %p317 = scmp.eq.s32.totalorder %s45, 0
      %p318 = por %p316, %p317
      %s319 = ssub.s32 %s47, %s54
      %p320 = scmp.eq.s32.totalorder %s319, 0
      %s322 = sadd.s32 %s321, 1
      %s323 = scalar_select %p320, %s321, %s322
      %p326 = pneg %p320
      %p327 = scmp.eq.s32.totalorder %s39, 7
      %p328 = por %p326, %p327
      %p329 = scmp.ne.s32.totalorder %s321, %s324
      %p330 = scmp.eq.s32.totalorder %s39, 0
      %p331 = por %p329, %p330
      %p332 = scmp.ne.s32.totalorder %s321, %s324
      %p333 = scmp.eq.s32.totalorder %s44, 7
      %p334 = por %p332, %p333
      %p335 = scmp.ne.s32.totalorder %s324, %s325
      %p336 = scmp.eq.s32.totalorder %s44, 0
      %p337 = por %p335, %p336
      %p338 = scmp.ne.s32.totalorder %s324, %s325
      %p339 = scmp.eq.s32.totalorder %s45, 7
      %p340 = por %p338, %p339
      %p342 = scmp.ne.s32.totalorder %s325, %s341
      %p343 = scmp.eq.s32.totalorder %s45, 0
      %p344 = por %p342, %p343
      %s345 = ssub.s32 %s47, %s54
      %p346 = scmp.eq.s32.totalorder %s345, 0
      %s348 = sadd.s32 %s347, 1
      %s349 = scalar_select %p346, %s347, %s348
      %p352 = pneg %p346
      %p353 = scmp.eq.s32.totalorder %s39, 7
      %p354 = por %p352, %p353
      %p355 = scmp.ne.s32.totalorder %s347, %s350
      %p356 = scmp.eq.s32.totalorder %s39, 0
      %p357 = por %p355, %p356
      %p358 = scmp.ne.s32.totalorder %s347, %s350
      %p359 = scmp.eq.s32.totalorder %s44, 7
      %p360 = por %p358, %p359
      %p361 = scmp.ne.s32.totalorder %s350, %s351
      %p362 = scmp.eq.s32.totalorder %s44, 0
      %p363 = por %p361, %p362
      %p364 = scmp.ne.s32.totalorder %s350, %s351
      %p365 = scmp.eq.s32.totalorder %s45, 7
      %p366 = por %p364, %p365
      %p368 = scmp.ne.s32.totalorder %s351, %s367
      %p369 = scmp.eq.s32.totalorder %s45, 0
      %p370 = por %p368, %p369
      %s371 = ssub.s32 %s47, %s54
      %p372 = scmp.eq.s32.totalorder %s371, 0
      %s374 = sadd.s32 %s373, 1
      %s375 = scalar_select %p372, %s373, %s374
      %p378 = pneg %p372
      %p379 = scmp.eq.s32.totalorder %s39, 7
      %p380 = por %p378, %p379
      %p381 = scmp.ne.s32.totalorder %s373, %s376
      %p382 = scmp.eq.s32.totalorder %s39, 0
      %p383 = por %p381, %p382
      %p384 = scmp.ne.s32.totalorder %s373, %s376
      %p385 = scmp.eq.s32.totalorder %s44, 7
      %p386 = por %p384, %p385
      %p387 = scmp.ne.s32.totalorder %s376, %s377
      %p388 = scmp.eq.s32.totalorder %s44, 0
      %p389 = por %p387, %p388
      %p390 = scmp.ne.s32.totalorder %s376, %s377
      %p391 = scmp.eq.s32.totalorder %s45, 7
      %p392 = por %p390, %p391
      %p394 = scmp.ne.s32.totalorder %s377, %s393
      %p395 = scmp.eq.s32.totalorder %s45, 0
      %p396 = por %p394, %p395
      %s397 = ssub.s32 %s46, %s58
      %p398 = scmp.eq.s32.totalorder %s397, 0
      %s400 = sadd.s32 %s399, 1
      %s401 = scalar_select %p398, %s399, %s400
      %p404 = pneg %p398
      %p405 = scmp.eq.s32.totalorder %s39, 7
      %p406 = por %p404, %p405
      %p407 = scmp.ne.s32.totalorder %s399, %s402
      %p408 = scmp.eq.s32.totalorder %s39, 0
      %p409 = por %p407, %p408
      %p410 = scmp.ne.s32.totalorder %s399, %s402
      %p411 = scmp.eq.s32.totalorder %s44, 7
      %p412 = por %p410, %p411
      %p413 = scmp.ne.s32.totalorder %s402, %s403
      %p414 = scmp.eq.s32.totalorder %s44, 0
      %p415 = por %p413, %p414
      %p416 = scmp.ne.s32.totalorder %s402, %s403
      %p417 = scmp.eq.s32.totalorder %s45, 7
      %p418 = por %p416, %p417
      %p420 = scmp.ne.s32.totalorder %s403, %s419
      %p421 = scmp.eq.s32.totalorder %s45, 0
      %p422 = por %p420, %p421
      %p423 = scmp.le.s32.totalorder 1, %s39
      %p424 = scmp.lt.s32.totalorder %s39, 9
      %p425 = pnand %p423, %p424
      %p426 = pneg %p425
      // Predicated region
      $region9: #{deepace_forward.4} parent=5 // pred_check
        _
      $region10: #{deepace_forward.4} parent=5 // pred_check_branch
        %428 = sbr.rel (%p425) target = $region12
      $region11: #{deepace_forward.4} parent=5 // pred_region
        %s429 = ssub.s32 %s39, 1
      $region12: #{deepace_forward.4} parent=5 // pred_fallthru
        _
      %p430 = scmp.lt.s32.totalorder %s39, 8
      // Predicated region
      $region13: #{deepace_forward.4} parent=5 // pred_check
        %p431 = pneg %p430
      $region14: #{deepace_forward.4} parent=5 // pred_check_branch
        %433 = sbr.rel (%p431) target = $region16
      $region15: #{deepace_forward.4} parent=5 // pred_region
        // Predicated region
        $region17: #{deepace_forward.4} parent=15 // pred_check
          %p434 = pneg %p71
        $region18: #{deepace_forward.4} parent=15 // pred_check_branch
          %436 = sbr.rel (%p434) target = $region20
        $region19: #{deepace_forward.4} parent=15 // pred_region
          %p437 = scmp.lt.s32.totalorder %s46, 1
          %s438 = scalar_select %p437, %s46, 1
          %s439 = smul.addr %s438, 6
          %s440 = smul.addr %s439, 8
          %s441 = scalar_lea.vmem %s2, %s440
        $region20: #{deepace_forward.4} parent=15 // pred_fallthru
          _
        // Predicated region
        $region21: #{deepace_forward.4} parent=15 // pred_check
          %p442 = pneg %p97
        $region22: #{deepace_forward.4} parent=15 // pred_check_branch
          %444 = sbr.rel (%p442) target = $region24
        $region23: #{deepace_forward.4} parent=15 // pred_region
          %p445 = scmp.lt.s32.totalorder %s47, 3
          %s446 = scalar_select %p445, %s47, 3
          %s447 = smul.addr %s446, 16
          %s448 = smul.addr %s447, 4
          %s449 = scalar_lea.vmem %s3, %s448
        $region24: #{deepace_forward.4} parent=15 // pred_fallthru
          _
        // Predicated region
        $region25: #{deepace_forward.4} parent=15 // pred_check
          %p450 = pneg %p123
        $region26: #{deepace_forward.4} parent=15 // pred_check_branch
          %452 = sbr.rel (%p450) target = $region28
        $region27: #{deepace_forward.4} parent=15 // pred_region
          %p453 = scmp.lt.s32.totalorder %s47, 3
          %s454 = scalar_select %p453, %s47, 3
          %s455 = scalar_lea.vmem %s4, %s454
        $region28: #{deepace_forward.4} parent=15 // pred_fallthru
          _
        // Predicated region
        $region29: #{deepace_forward.4} parent=15 // pred_check
          %p456 = pneg %p149
        $region30: #{deepace_forward.4} parent=15 // pred_check_branch
          %458 = sbr.rel (%p456) target = $region32
        $region31: #{deepace_forward.4} parent=15 // pred_region
          %p459 = scmp.lt.s32.totalorder %s47, 3
          %s460 = scalar_select %p459, %s47, 3
          %s461 = scalar_lea.vmem %s5, %s460
        $region32: #{deepace_forward.4} parent=15 // pred_fallthru
          _
        // Predicated region
        $region33: #{deepace_forward.4} parent=15 // pred_check
          %p462 = pneg %p175
        $region34: #{deepace_forward.4} parent=15 // pred_check_branch
          %464 = sbr.rel (%p462) target = $region36
        $region35: #{deepace_forward.4} parent=15 // pred_region
          %s465 = sand.u32 %s165, 1
          %s466 = scalar_lea.sflag [#allocation7], %s465
          %s467 = sand.u32 %s165, 1
          %s468 = scalar_lea.vmem [#allocation6], %s467
          %s470 = ssub.s32 16, 16
          %471 = vsyncadd %s466, %s470
          %s472 = smul.addr %s47, 16
          %s473 = scalar_lea.hbm %s6, %s472
          %s475 = sshll.u32 %s468, 4
          %s476 = int_to_ptr.vmem [resolvable:$true] %s475
          %478 = dma.hbm_to_vmem [thread:$0]  %s473, 16, %s476, %s466
        $region36: #{deepace_forward.4} parent=15 // pred_fallthru
          _
        // Predicated region
        $region37: #{deepace_forward.4} parent=15 // pred_check
          %p479 = pneg %p201
        $region38: #{deepace_forward.4} parent=15 // pred_check_branch
          %481 = sbr.rel (%p479) target = $region40
        $region39: #{deepace_forward.4} parent=15 // pred_region
          %s482 = sand.u32 %s39, 1
          %s483 = scalar_lea.sflag [#allocation9], %s482
          %s484 = sand.u32 %s191, 1
          %s485 = scalar_lea.vmem [#allocation8], %s484
          %s487 = ssub.s32 16, 16
          %488 = vsyncadd %s483, %s487
          %s489 = smul.addr %s47, 16
          %s490 = scalar_lea.hbm %s7, %s489
          %s492 = sshll.u32 %s485, 4
          %s493 = int_to_ptr.vmem [resolvable:$true] %s492
          %495 = dma.hbm_to_vmem [thread:$0]  %s490, 16, %s493, %s483
        $region40: #{deepace_forward.4} parent=15 // pred_fallthru
          _
        // Predicated region
        $region41: #{deepace_forward.4} parent=15 // pred_check
          %p496 = pneg %p227
        $region42: #{deepace_forward.4} parent=15 // pred_check_branch
          %498 = sbr.rel (%p496) target = $region44
        $region43: #{deepace_forward.4} parent=15 // pred_region
          %p499 = scmp.lt.s32.totalorder %s47, 3
          %s500 = scalar_select %p499, %s47, 3
          %s501 = smul.addr %s500, 4
          %s502 = scalar_lea.vmem %s8, %s501
        $region44: #{deepace_forward.4} parent=15 // pred_fallthru
          _
        // Predicated region
        $region45: #{deepace_forward.4} parent=15 // pred_check
          %p503 = pneg %p253
        $region46: #{deepace_forward.4} parent=15 // pred_check_branch
          %505 = sbr.rel (%p503) target = $region48
        $region47: #{deepace_forward.4} parent=15 // pred_region
          %s506 = sand.u32 %s39, 1
          %s507 = scalar_lea.sflag [#allocation9], %s506
          %s508 = sand.u32 %s243, 1
          %s509 = scalar_lea.vmem [#allocation10], %s508
          %s511 = ssub.s32 16, 16
          %512 = vsyncadd %s507, %s511
          %s513 = smul.addr %s47, 16
          %s514 = scalar_lea.hbm %s9, %s513
          %s516 = sshll.u32 %s509, 4
          %s517 = int_to_ptr.vmem [resolvable:$true] %s516
          %519 = dma.hbm_to_vmem [thread:$0]  %s514, 16, %s517, %s507
        $region48: #{deepace_forward.4} parent=15 // pred_fallthru
          _
        // Predicated region
        $region49: #{deepace_forward.4} parent=15 // pred_check
          %p520 = pneg %p279
        $region50: #{deepace_forward.4} parent=15 // pred_check_branch
          %522 = sbr.rel (%p520) target = $region52
        $region51: #{deepace_forward.4} parent=15 // pred_region
          %s523 = sand.u32 %s39, 1
          %s524 = scalar_lea.sflag [#allocation12], %s523
          %s525 = sand.u32 %s269, 1
          %s526 = scalar_lea.vmem [#allocation11], %s525
          %s528 = ssub.s32 16, 16
          %529 = vsyncadd %s524, %s528
          %s530 = smul.addr %s47, 16
          %s531 = scalar_lea.hbm %s10, %s530
          %s533 = sshll.u32 %s526, 4
          %s534 = int_to_ptr.vmem [resolvable:$true] %s533
          %536 = dma.hbm_to_vmem [thread:$0]  %s531, 16, %s534, %s524
        $region52: #{deepace_forward.4} parent=15 // pred_fallthru
          _
        // Predicated region
        $region53: #{deepace_forward.4} parent=15 // pred_check
          %p537 = pneg %p305
        $region54: #{deepace_forward.4} parent=15 // pred_check_branch
          %539 = sbr.rel (%p537) target = $region56
        $region55: #{deepace_forward.4} parent=15 // pred_region
          %s540 = sand.u32 %s39, 1
          %s541 = scalar_lea.sflag [#allocation12], %s540
          %s542 = sand.u32 %s295, 1
          %s543 = scalar_lea.vmem [#allocation13], %s542
          %s545 = ssub.s32 16, 16
          %546 = vsyncadd %s541, %s545
          %s547 = smul.addr %s47, 16
          %s548 = scalar_lea.hbm %s11, %s547
          %s550 = sshll.u32 %s543, 4
          %s551 = int_to_ptr.vmem [resolvable:$true] %s550
          %553 = dma.hbm_to_vmem [thread:$0]  %s548, 16, %s551, %s541
        $region56: #{deepace_forward.4} parent=15 // pred_fallthru
          _
        // Predicated region
        $region57: #{deepace_forward.4} parent=15 // pred_check
          %p554 = pneg %p331
        $region58: #{deepace_forward.4} parent=15 // pred_check_branch
          %556 = sbr.rel (%p554) target = $region60
        $region59: #{deepace_forward.4} parent=15 // pred_region
          %s557 = sand.u32 %s321, 1
          %s558 = scalar_lea.sflag [#allocation15], %s557
          %s559 = sand.u32 %s321, 1
          %s560 = scalar_lea.vmem [#allocation14], %s559
          %s562 = ssub.s32 16, 16
          %563 = vsyncadd %s558, %s562
          %s564 = smul.addr %s47, 16
          %s565 = scalar_lea.hbm %s12, %s564
          %s567 = sshll.u32 %s560, 4
          %s568 = int_to_ptr.vmem [resolvable:$true] %s567
          %570 = dma.hbm_to_vmem [thread:$0]  %s565, 16, %s568, %s558
        $region60: #{deepace_forward.4} parent=15 // pred_fallthru
          _
        // Predicated region
        $region61: #{deepace_forward.4} parent=15 // pred_check
          %p571 = pneg %p357
        $region62: #{deepace_forward.4} parent=15 // pred_check_branch
          %573 = sbr.rel (%p571) target = $region64
        $region63: #{deepace_forward.4} parent=15 // pred_region
          %p574 = scmp.lt.s32.totalorder %s47, 3
          %s575 = scalar_select %p574, %s47, 3
          %s576 = smul.addr %s575, 32
          %s577 = smul.addr %s576, 4
          %s578 = scalar_lea.vmem %s13, %s577
        $region64: #{deepace_forward.4} parent=15 // pred_fallthru
          _
        // Predicated region
        $region65: #{deepace_forward.4} parent=15 // pred_check
          %p579 = pneg %p383
        $region66: #{deepace_forward.4} parent=15 // pred_check_branch
          %581 = sbr.rel (%p579) target = $region68
        $region67: #{deepace_forward.4} parent=15 // pred_region
          %p582 = scmp.lt.s32.totalorder %s47, 3
          %s583 = scalar_select %p582, %s47, 3
          %s584 = smul.addr %s583, 2
          %s585 = scalar_lea.vmem %s14, %s584
        $region68: #{deepace_forward.4} parent=15 // pred_fallthru
          _
      $region16: #{deepace_forward.4} parent=5 // pred_fallthru
        _
      %p586 = scmp.le.s32.totalorder 1, %s39
      %p587 = scmp.lt.s32.totalorder %s39, 9
      %p588 = pnand %p586, %p587
      %p589 = pneg %p588
      // Predicated region
      $region69: #{deepace_forward.4} parent=5 // pred_check
        _
      $region70: #{deepace_forward.4} parent=5 // pred_check_branch
        %591 = sbr.rel (%p588) target = $region72
      $region71: #{deepace_forward.4} parent=5 // pred_region
        %s592 = ssub.s32 %s39, 1
        %s593 = sand.u32 %s168, 1
        %s594 = scalar_lea.sflag [#allocation7], %s593
        %s595 = sand.u32 %s168, 1
        %s596 = scalar_lea.vmem [#allocation6], %s595
        // Predicated region
        $region73: #{deepace_forward.4} parent=71 // pred_check
          %p597 = pneg %p181
        $region74: #{deepace_forward.4} parent=71 // pred_check_branch
          %599 = sbr.rel (%p597) target = $region76
        $region75: #{deepace_forward.4} parent=71 // pred_region
          %600 = dma.done %s594, 16
        $region76: #{deepace_forward.4} parent=71 // pred_fallthru
          _
        %s601 = sand.u32 %s44, 1
        %s602 = scalar_lea.sflag [#allocation9], %s601
        %s603 = sand.u32 %s194, 1
        %s604 = scalar_lea.vmem [#allocation8], %s603
        // Predicated region
        $region77: #{deepace_forward.4} parent=71 // pred_check
          %p605 = pneg %p207
        $region78: #{deepace_forward.4} parent=71 // pred_check_branch
          %607 = sbr.rel (%p605) target = $region80
        $region79: #{deepace_forward.4} parent=71 // pred_region
          %608 = dma.done %s602, 16
        $region80: #{deepace_forward.4} parent=71 // pred_fallthru
          _
        %s609 = sand.u32 %s44, 1
        %s610 = scalar_lea.sflag [#allocation9], %s609
        %s611 = sand.u32 %s246, 1
        %s612 = scalar_lea.vmem [#allocation10], %s611
        // Predicated region
        $region81: #{deepace_forward.4} parent=71 // pred_check
          %p613 = pneg %p259
        $region82: #{deepace_forward.4} parent=71 // pred_check_branch
          %615 = sbr.rel (%p613) target = $region84
        $region83: #{deepace_forward.4} parent=71 // pred_region
          %616 = dma.done %s610, 16
        $region84: #{deepace_forward.4} parent=71 // pred_fallthru
          _
        %s617 = sand.u32 %s44, 1
        %s618 = scalar_lea.sflag [#allocation12], %s617
        %s619 = sand.u32 %s272, 1
        %s620 = scalar_lea.vmem [#allocation11], %s619
        // Predicated region
        $region85: #{deepace_forward.4} parent=71 // pred_check
          %p621 = pneg %p285
        $region86: #{deepace_forward.4} parent=71 // pred_check_branch
          %623 = sbr.rel (%p621) target = $region88
        $region87: #{deepace_forward.4} parent=71 // pred_region
          %624 = dma.done %s618, 16
        $region88: #{deepace_forward.4} parent=71 // pred_fallthru
          _
        %s625 = sand.u32 %s44, 1
        %s626 = scalar_lea.sflag [#allocation12], %s625
        %s627 = sand.u32 %s298, 1
        %s628 = scalar_lea.vmem [#allocation13], %s627
        // Predicated region
        $region89: #{deepace_forward.4} parent=71 // pred_check
          %p629 = pneg %p311
        $region90: #{deepace_forward.4} parent=71 // pred_check_branch
          %631 = sbr.rel (%p629) target = $region92
        $region91: #{deepace_forward.4} parent=71 // pred_region
          %632 = dma.done %s626, 16
        $region92: #{deepace_forward.4} parent=71 // pred_fallthru
          _
        %s633 = sand.u32 %s324, 1
        %s634 = scalar_lea.sflag [#allocation15], %s633
        %s635 = sand.u32 %s324, 1
        %s636 = scalar_lea.vmem [#allocation14], %s635
        // Predicated region
        $region93: #{deepace_forward.4} parent=71 // pred_check
          %p637 = pneg %p337
        $region94: #{deepace_forward.4} parent=71 // pred_check_branch
          %639 = sbr.rel (%p637) target = $region96
        $region95: #{deepace_forward.4} parent=71 // pred_region
          %640 = dma.done %s634, 16
        $region96: #{deepace_forward.4} parent=71 // pred_fallthru
          _
        %p641 = scmp.lt.s32.totalorder %s48, 1
        %s642 = scalar_select %p641, %s48, 1
        %s643 = smul.addr %s642, 6
        %s644 = smul.addr %s643, 8
        %s645 = scalar_lea.vmem %s2, %s644
        %p646 = pneg %p77
        %p647 = pneg %p74
        %p648 = scmp.lt.s32.totalorder %s49, 3
        %s649 = scalar_select %p648, %s49, 3
        %s650 = smul.addr %s649, 16
        %s651 = smul.addr %s650, 4
        %s652 = scalar_lea.vmem %s3, %s651
        %p653 = pneg %p103
        %p654 = pneg %p100
        %p655 = scmp.lt.s32.totalorder %s49, 3
        %s656 = scalar_select %p655, %s49, 3
        %s657 = scalar_lea.vmem %s4, %s656
        %p658 = pneg %p129
        %p659 = pneg %p126
        %p660 = scmp.lt.s32.totalorder %s49, 3
        %s661 = scalar_select %p660, %s49, 3
        %s662 = scalar_lea.vmem %s5, %s661
        %p663 = pneg %p155
        %p664 = pneg %p152
        %s665 = sand.u32 %s168, 1
        %s666 = scalar_lea.sflag [#allocation7], %s665
        %s667 = sand.u32 %s168, 1
        %s668 = scalar_lea.vmem [#allocation6], %s667
        %p669 = pneg %p181
        %p670 = pneg %p178
        %s671 = sand.u32 %s44, 1
        %s672 = scalar_lea.sflag [#allocation9], %s671
        %s673 = sand.u32 %s194, 1
        %s674 = scalar_lea.vmem [#allocation8], %s673
        %p675 = pneg %p207
        %p676 = pneg %p204
        %p677 = scmp.lt.s32.totalorder %s49, 3
        %s678 = scalar_select %p677, %s49, 3
        %s679 = smul.addr %s678, 4
        %s680 = scalar_lea.vmem %s8, %s679
        %p681 = pneg %p233
        %p682 = pneg %p230
        %s683 = sand.u32 %s44, 1
        %s684 = scalar_lea.sflag [#allocation9], %s683
        %s685 = sand.u32 %s246, 1
        %s686 = scalar_lea.vmem [#allocation10], %s685
        %p687 = pneg %p259
        %p688 = pneg %p256
        %s689 = sand.u32 %s44, 1
        %s690 = scalar_lea.sflag [#allocation12], %s689
        %s691 = sand.u32 %s272, 1
        %s692 = scalar_lea.vmem [#allocation11], %s691
        %p693 = pneg %p285
        %p694 = pneg %p282
        %s695 = sand.u32 %s44, 1
        %s696 = scalar_lea.sflag [#allocation12], %s695
        %s697 = sand.u32 %s298, 1
        %s698 = scalar_lea.vmem [#allocation13], %s697
        %p699 = pneg %p311
        %p700 = pneg %p308
        %s701 = sand.u32 %s324, 1
        %s702 = scalar_lea.sflag [#allocation15], %s701
        %s703 = sand.u32 %s324, 1
        %s704 = scalar_lea.vmem [#allocation14], %s703
        %p705 = pneg %p337
        %p706 = pneg %p334
        %p707 = scmp.lt.s32.totalorder %s49, 3
        %s708 = scalar_select %p707, %s49, 3
        %s709 = smul.addr %s708, 32
        %s710 = smul.addr %s709, 4
        %s711 = scalar_lea.vmem %s13, %s710
        %p712 = pneg %p363
        %p713 = pneg %p360
        %p714 = scmp.lt.s32.totalorder %s49, 3
        %s715 = scalar_select %p714, %s49, 3
        %s716 = smul.addr %s715, 2
        %s717 = scalar_lea.vmem %s14, %s716
        %p718 = pneg %p389
        %p719 = pneg %p386
        %p720 = pneg %p415
        %p721 = pneg %p412
        %p722 = scmp.lt.s32.totalorder %s48, 1
        %s723 = scalar_select %p722, %s48, 1
        %s724 = smul.addr %s723, 6
        %s725 = smul.addr %s724, 8
        %s726 = scalar_lea.vmem %s15, %s725
        %p727 = scmp.lt.s32.totalorder %s48, 1
        %s728 = scalar_select %p727, %s48, 1
        %s729 = smul.addr %s728, 6
        %s730 = smul.addr %s729, 8
        %s731 = scalar_lea.vmem %s2, %s730
        %p732 = scmp.lt.s32.totalorder %s49, 3
        %s733 = scalar_select %p732, %s49, 3
        %s734 = smul.addr %s733, 16
        %s735 = smul.addr %s734, 4
        %s736 = scalar_lea.vmem %s3, %s735
        %p737 = scmp.lt.s32.totalorder %s49, 3
        %s738 = scalar_select %p737, %s49, 3
        %s739 = scalar_lea.vmem %s4, %s738
        %p740 = scmp.lt.s32.totalorder %s49, 3
        %s741 = scalar_select %p740, %s49, 3
        %s742 = scalar_lea.vmem %s5, %s741
        %p743 = scmp.lt.s32.totalorder %s49, 3
        %s744 = scalar_select %p743, %s49, 3
        %s745 = smul.addr %s744, 4
        %s746 = scalar_lea.vmem %s8, %s745
        %p747 = scmp.lt.s32.totalorder %s49, 3
        %s748 = scalar_select %p747, %s49, 3
        %s749 = smul.addr %s748, 32
        %s750 = smul.addr %s749, 4
        %s751 = scalar_lea.vmem %s13, %s750
        %p752 = scmp.lt.s32.totalorder %s49, 3
        %s753 = scalar_select %p752, %s49, 3
        %s754 = smul.addr %s753, 2
        %s755 = scalar_lea.vmem %s14, %s754
        %p756 = scmp.lt.s32.totalorder %s48, 1
        %s757 = scalar_select %p756, %s48, 1
        %s758 = smul.addr %s757, 6
        %s759 = smul.addr %s758, 8
        %s760 = scalar_lea.vmem %s15, %s759
        %p762 = scmp.eq.s32.totalorder %s49, 0
        // Predicated region
        $region97: #{deepace_forward.4} parent=71 // pred_check
          %p763 = pneg %p762
        $region98: #{deepace_forward.4} parent=71 // pred_check_branch
          %765 = sbr.rel (%p763) target = $region100
        $region99: #{deepace_forward.4} parent=71 // pred_region
          %v766 = vld [vmem:[%s731] sm:$0xff]
          %v767 = vld [vmem:[%s731 + $0x8] sm:$0xff]
          %v768 = vld [vmem:[%s731 + $0x10] sm:$0xff]
          %v769 = vld [vmem:[%s731 + $0x18] sm:$0xff]
          %v770 = vld [vmem:[%s731 + $0x20] sm:$0xf]
          %v771 = vld [vmem:[%s731 + $0x28] sm:$0xf]
          %772 = vst [vmem:[%s760] sm:$0xff] %v766
          %773 = vst [vmem:[%s760 + $0x8] sm:$0xff] %v767
          %774 = vst [vmem:[%s760 + $0x10] sm:$0xff] %v768
          %775 = vst [vmem:[%s760 + $0x18] sm:$0xff] %v769
          %776 = vst [vmem:[%s760 + $0x20] sm:$0xf] %v770
          %777 = vst [vmem:[%s760 + $0x28] sm:$0xf] %v771
          %778 = vst [vmem:[#allocation2] sm:$0xff] 0.0
          %779 = vst [vmem:[#allocation2 + $0x1c] sm:$0xff] 0.0
        $region100: #{deepace_forward.4} parent=71 // pred_fallthru
          _
        %v780 = vld [vmem:[%s760] sm:$0xff]
        %v781 = vld [vmem:[%s760 + $0x8] sm:$0xff]
        %v782 = vld [vmem:[%s760 + $0x10] sm:$0xff]
        %v783 = vld [vmem:[%s760 + $0x18] sm:$0xff]
        %v784 = vld [vmem:[%s760 + $0x20] sm:$0xf]
        %v785 = vld [vmem:[%s760 + $0x28] sm:$0xf]
        %v786 = vpack.c.bf16 %v782, %v780
        %v787 = vpack.c.bf16 %v784, %v784
        %v788 = vld [vmem:[%s736] sm:$0xf]
        %v789 = vld [vmem:[%s736 + $0x4] sm:$0xf]
        %v790 = vld [vmem:[%s736 + $0x8] sm:$0xf]
        %v791 = vld [vmem:[%s736 + $0xc] sm:$0xf]
        %v792 = vld [vmem:[%s736 + $0x10] sm:$0xf]
        %v793 = vld [vmem:[%s736 + $0x14] sm:$0xf]
        %v794 = vld [vmem:[%s736 + $0x18] sm:$0xf]
        %v795 = vld [vmem:[%s736 + $0x1c] sm:$0xf]
        %v796 = vld [vmem:[%s736 + $0x20] sm:$0xf]
        %v797 = vld [vmem:[%s736 + $0x24] sm:$0xf]
        %v798 = vld [vmem:[%s736 + $0x28] sm:$0xf]
        %v799 = vld [vmem:[%s736 + $0x2c] sm:$0xf]
        %v800 = vld [vmem:[%s736 + $0x30] sm:$0xf]
        %v801 = vld [vmem:[%s736 + $0x34] sm:$0xf]
        %v802 = vld [vmem:[%s736 + $0x38] sm:$0xf]
        %v803 = vld [vmem:[%s736 + $0x3c] sm:$0xf]
        %v804 = vld [vmem:[%s739] sm:$0x1]
        %v806 = vlaneseq
        %v807 = vshrl.u32 %v806, 7
        %v808 = vsub.s32 0, %v807
        %v809 = vrot.slane %v804, %v808
        %v827 = vunpack.c.l.b16 %v788
        %v828 = vunpack.c.l.b16 %v789
        %v829 = vunpack.c.l.b16 %v790
        %v830 = vunpack.c.l.b16 %v791
        %v831 = vunpack.c.l.b16 %v792
        %v832 = vunpack.c.l.b16 %v793
        %v833 = vunpack.c.l.b16 %v794
        %v834 = vunpack.c.l.b16 %v795
        %v835 = vunpack.c.l.b16 %v796
        %v836 = vunpack.c.l.b16 %v797
        %v837 = vunpack.c.l.b16 %v798
        %v838 = vunpack.c.l.b16 %v799
        %v839 = vunpack.c.l.b16 %v800
        %v840 = vunpack.c.l.b16 %v801
        %v841 = vunpack.c.l.b16 %v802
        %v842 = vunpack.c.l.b16 %v803
        %v843 = vpack.c.b16 %v828, %v827
        %v844 = vpack.c.b16 %v830, %v829
        %v845 = vpack.c.b16 %v832, %v831
        %v846 = vpack.c.b16 %v834, %v833
        %v847 = vpack.c.b16 %v836, %v835
        %v848 = vpack.c.b16 %v838, %v837
        %v849 = vpack.c.b16 %v840, %v839
        %v850 = vpack.c.b16 %v842, %v841
        %859 = vmatprep.subr.bf16.mxu0 0
        %860 = vmatpush1.bf16.msra.mxu0 %v850
        %861 = vmatprep.subr.bf16.mxu0 0
        %862 = vmatpush1.bf16.msra.mxu0 %v849
        %863 = vmatprep.subr.bf16.mxu0 0
        %864 = vmatpush1.bf16.msra.mxu0 %v848
        %865 = vmatprep.subr.bf16.mxu0 0
        %866 = vmatpush1.bf16.msra.mxu0 %v847
        %867 = vmatprep.subr.bf16.mxu0 0
        %868 = vmatpush1.bf16.msra.mxu0 %v846
        %869 = vmatprep.subr.bf16.mxu0 0
        %870 = vmatpush1.bf16.msra.mxu0 %v845
        %871 = vmatprep.subr.bf16.mxu0 0
        %872 = vmatpush1.bf16.msra.mxu0 %v844
        %873 = vmatprep.subr.bf16.mxu0 0
        %874 = vmatpush1.bf16.msra.mxu0 %v843
        %875 = vmatprep.subr.bf16.mxu0 0
        %876 = vmatpush2.bf16.msra.mxu0 0
        %877 = vmatprep.subr.bf16.mxu0 0
        %878 = vmatpush2.bf16.msra.mxu0 0
        %879 = vmatprep.subr.bf16.mxu0 0
        %880 = vmatpush2.bf16.msra.mxu0 0
        %881 = vmatprep.subr.bf16.mxu0 0
        %882 = vmatpush2.bf16.msra.mxu0 0
        %883 = vmatprep.subr.bf16.mxu0 0
        %884 = vmatpush2.bf16.msra.mxu0 0
        %885 = vmatprep.subr.bf16.mxu0 0
        %886 = vmatpush2.bf16.msra.mxu0 0
        %887 = vmatprep.subr.bf16.mxu0 0
        %888 = vmatpush2.bf16.msra.mxu0 0
        %889 = vmatprep.subr.bf16.mxu0 0
        %890 = vmatpush2.bf16.msra.mxu0 0
        %891 = vmatprep.mubr.bf16.mxu0 0
        %892 = vmatmul.mubr.bf16.gmra.mxu0 %v786
        %v893 = vpop.f32.mrf.mxu0
        %v894 = vadd.f32 %v809, %v893
        %v895 = vpop.f32.mrf.mxu0
        %v896 = vpop.f32.mrf.mxu0
        %v897 = vadd.f32 %v809, %v896
        %v898 = vpop.f32.mrf.mxu0
        %899 = vmatprep.mubr.bf16.mxu0 0
        %900 = vmatmul.mubr.bf16.gmra.mxu0 %v787
        %v901 = vpop.f32.mrf.mxu0
        %v902 = vadd.f32 %v809, %v901
        %v903 = vpop.f32.mrf.mxu0
        %v904 = vpop.f32.mrf.mxu0
        %v905 = vpop.f32.mrf.mxu0
        %906 = vdwg.mxu0
        %v907 = vld [vmem:[%s742] sm:$0x1]
        %vm908 = vcmp.ge.f32.partialorder %v894, 0.0
        %vm909 = vcmp.ge.f32.partialorder %v897, 0.0
        %vm910 = vcmp.ge.f32.partialorder %v902, 0.0
        %v912 = vlaneseq
        %v913 = vshrl.u32 %v912, 7
        %v914 = vsub.s32 0, %v913
        %v915 = vrot.slane %v907, %v914
        %v917 = vmul.f32 %v894, %v915
        %v918 = vmul.f32 %v897, %v915
        %v919 = vmul.f32 %v902, %v915
        %v920 = vsel %vm908, %v894, %v917
        %v921 = vsel %vm909, %v897, %v918
        %v922 = vsel %vm910, %v902, %v919
        %v923 = vld [vmem:[%s596] sm:$0x1]
        %v924 = vld [vmem:[%s604] sm:$0x1]
        %v925 = vadd.f32 %v920, %v921
        %vm926 = vcmask 1043456
        %v927 = vsel %vm926, %v922, 0.0
        %v928 = vadd.f32 %v925, %v927
        %929 = vadd.xlane.f32.xlu0 %v928
        %v930 = vpop.xlane.xlu0 %929
        %v931 = vrot.slane %v930, 4
        %v932 = vadd.f32 %v930, %v931
        %v933 = vrot.slane %v932, 2
        %v934 = vadd.f32 %v932, %v933
        %v935 = vrot.slane %v934, 1
        %v936 = vadd.f32 %v934, %v935
        %s937 = vtos %v936
        %v938 = vstv %s937
        %v939 = vmul.f32 %v920, %v920
        %v940 = vmul.f32 %v921, %v921
        %v941 = vmul.f32 %v922, %v922
        %v942 = vadd.f32 %v939, %v940
        %v943 = vsel %vm926, %v941, 0.0
        %v944 = vadd.f32 %v942, %v943
        %945 = vadd.xlane.f32.xlu0 %v944
        %v946 = vpop.xlane.xlu0 %945
        %v947 = vrot.slane %v946, 4
        %v948 = vadd.f32 %v946, %v947
        %v949 = vrot.slane %v948, 2
        %v950 = vadd.f32 %v948, %v949
        %v951 = vrot.slane %v950, 1
        %v952 = vadd.f32 %v950, %v951
        %s953 = vtos %v952
        %v954 = vstv %s953
        %v955 = vrcp.pop 1280.0
        %v956 = vmul.f32 %v938, %v955
        %v957 = vmul.f32 %v954, %v955
        %v958 = vmul.f32 %v956, %v956
        %v959 = vsub.f32 %v957, %v958
        %v960 = vmax.f32 %v959, 0.0
        %v961 = vadd.f32 %v960, 1e-08
        %v962 = vrsqrt.pop %v961
        %v963 = vmul.f32 %v962, %v923
        %v964 = vmul.f32 %v956, %v963
        %v965 = vsub.f32 %v924, %v964
        %v967 = vlaneseq
        %v968 = vshrl.u32 %v967, 7
        %v969 = vsub.s32 0, %v968
        %v970 = vrot.slane %v963, %v969
        %v972 = vmul.f32 %v920, %v970
        %v973 = vmul.f32 %v921, %v970
        %v974 = vmul.f32 %v922, %v970
        %v976 = vlaneseq
        %v977 = vshrl.u32 %v976, 7
        %v978 = vsub.s32 0, %v977
        %v979 = vrot.slane %v965, %v978
        %v981 = vadd.f32 %v972, %v979
        %v982 = vadd.f32 %v973, %v979
        %v983 = vadd.f32 %v974, %v979
        %984 = vst [vmem:[#allocation2 + $0x8] sm:$0xff] %v981
        %985 = vst [vmem:[#allocation2 + $0x10] sm:$0xff] %v982
        %986 = vst [vmem:[#allocation2 + $0x18] sm:$0xf] %v983
        %s987 = sld [smem:[#allocation4 + %s49]]
        %s988 = sld [smem:[#allocation5 + %s49]]
        %s989 = ssub.s32 8, %s988
        %s990 = scalar_lea.vmem [#allocation2], %s989
        %v991 = vld [vmem:[%s990] sm:$0xff]
        %v992 = vld [vmem:[%s990 + $0x8] sm:$0xff]
        %v993 = vld [vmem:[%s990 + $0x10] sm:$0xf]
        %v994 = vld [vmem:[%s746] sm:$0x1]
        %v995 = vlaneseq
        %v996 = vshrl.u32 %v995, 7
        %v997 = vsub.s32 0, %v996
        %v998 = vrot.slane %v994, %v997
        %v999 = vmul.f32 %v991, %v998
        %v1000 = vmul.f32 %v992, %v998
        %v1001 = vmul.f32 %v993, %v998
        %v1002 = vadd.f32 %v999, 0.0
        %v1003 = vadd.f32 %v1000, 0.0
        %v1004 = vadd.f32 %v1001, 0.0
        %s1005 = sadd.s32 %s989, %s987
        %s1006 = scalar_lea.vmem [#allocation2], %s1005
        %v1007 = vld [vmem:[%s1006] sm:$0xff]
        %v1008 = vld [vmem:[%s1006 + $0x8] sm:$0xff]
        %v1009 = vld [vmem:[%s1006 + $0x10] sm:$0xf]
        %v1010 = vld [vmem:[%s746 + $0x1] sm:$0x1]
        %v1011 = vlaneseq
        %v1012 = vshrl.u32 %v1011, 7
        %v1013 = vsub.s32 0, %v1012
        %v1014 = vrot.slane %v1010, %v1013
        %v1015 = vmul.f32 %v1007, %v1014
        %v1016 = vmul.f32 %v1008, %v1014
        %v1017 = vmul.f32 %v1009, %v1014
        %v1018 = vadd.f32 %v1002, %v1015
        %v1019 = vadd.f32 %v1003, %v1016
        %v1020 = vadd.f32 %v1004, %v1017
        %s1021 = smul.u32 %s987, 2
        %s1022 = sadd.s32 %s989, %s1021
        %s1023 = scalar_lea.vmem [#allocation2], %s1022
        %v1024 = vld [vmem:[%s1023] sm:$0xff]
        %v1025 = vld [vmem:[%s1023 + $0x8] sm:$0xff]
        %v1026 = vld [vmem:[%s1023 + $0x10] sm:$0xf]
        %v1027 = vld [vmem:[%s746 + $0x2] sm:$0x1]
        %v1028 = vlaneseq
        %v1029 = vshrl.u32 %v1028, 7
        %v1030 = vsub.s32 0, %v1029
        %v1031 = vrot.slane %v1027, %v1030
        %v1032 = vmul.f32 %v1024, %v1031
        %v1033 = vmul.f32 %v1025, %v1031
        %v1034 = vmul.f32 %v1026, %v1031
        %v1035 = vadd.f32 %v1018, %v1032
        %v1036 = vadd.f32 %v1019, %v1033
        %v1037 = vadd.f32 %v1020, %v1034
        %v1038 = vld [vmem:[%s612] sm:$0x1]
        %v1040 = vlaneseq
        %v1041 = vshrl.u32 %v1040, 7
        %v1042 = vsub.s32 0, %v1041
        %v1043 = vrot.slane %v1038, %v1042
        %v1045 = vadd.f32 %v1035, %v1043
        %v1046 = vadd.f32 %v1036, %v1043
        %v1047 = vadd.f32 %v1037, %v1043
        %v1048 = vld [vmem:[%s620] sm:$0x1]
        %vm1049 = vcmp.ge.f32.partialorder %v1045, 0.0
        %vm1050 = vcmp.ge.f32.partialorder %v1046, 0.0
        %vm1051 = vcmp.ge.f32.partialorder %v1047, 0.0
        %v1053 = vlaneseq
        %v1054 = vshrl.u32 %v1053, 7
        %v1055 = vsub.s32 0, %v1054
        %v1056 = vrot.slane %v1048, %v1055
        %v1058 = vmul.f32 %v1045, %v1056
        %v1059 = vmul.f32 %v1046, %v1056
        %v1060 = vmul.f32 %v1047, %v1056
        %v1061 = vsel %vm1049, %v1045, %v1058
        %v1062 = vsel %vm1050, %v1046, %v1059
        %v1063 = vsel %vm1051, %v1047, %v1060
        %v1064 = vld [vmem:[%s628] sm:$0x1]
        %v1065 = vld [vmem:[%s636] sm:$0x1]
        %v1066 = vadd.f32 %v1061, %v1062
        %v1067 = vsel %vm926, %v1063, 0.0
        %v1068 = vadd.f32 %v1066, %v1067
        %1069 = vadd.xlane.f32.xlu0 %v1068
        %v1070 = vpop.xlane.xlu0 %1069
        %v1071 = vrot.slane %v1070, 4
        %v1072 = vadd.f32 %v1070, %v1071
        %v1073 = vrot.slane %v1072, 2
        %v1074 = vadd.f32 %v1072, %v1073
        %v1075 = vrot.slane %v1074, 1
        %v1076 = vadd.f32 %v1074, %v1075
        %s1077 = vtos %v1076
        %v1078 = vstv %s1077
        %v1079 = vmul.f32 %v1061, %v1061
        %v1080 = vmul.f32 %v1062, %v1062
        %v1081 = vmul.f32 %v1063, %v1063
        %v1082 = vadd.f32 %v1079, %v1080
        %v1083 = vsel %vm926, %v1081, 0.0
        %v1084 = vadd.f32 %v1082, %v1083
        %1085 = vadd.xlane.f32.xlu0 %v1084
        %v1086 = vpop.xlane.xlu0 %1085
        %v1087 = vrot.slane %v1086, 4
        %v1088 = vadd.f32 %v1086, %v1087
        %v1089 = vrot.slane %v1088, 2
        %v1090 = vadd.f32 %v1088, %v1089
        %v1091 = vrot.slane %v1090, 1
        %v1092 = vadd.f32 %v1090, %v1091
        %s1093 = vtos %v1092
        %v1094 = vstv %s1093
        %v1095 = vmul.f32 %v1078, %v955
        %v1096 = vmul.f32 %v1094, %v955
        %v1097 = vmul.f32 %v1095, %v1095
        %v1098 = vsub.f32 %v1096, %v1097
        %v1099 = vmax.f32 %v1098, 0.0
        %v1100 = vadd.f32 %v1099, 1e-08
        %v1101 = vrsqrt.pop %v1100
        %v1102 = vmul.f32 %v1101, %v1064
        %v1103 = vmul.f32 %v1095, %v1102
        %v1104 = vsub.f32 %v1065, %v1103
        %v1106 = vlaneseq
        %v1107 = vshrl.u32 %v1106, 7
        %v1108 = vsub.s32 0, %v1107
        %v1109 = vrot.slane %v1102, %v1108
        %v1111 = vmul.f32 %v1061, %v1109
        %v1112 = vmul.f32 %v1062, %v1109
        %v1113 = vmul.f32 %v1063, %v1109
        %v1115 = vlaneseq
        %v1116 = vshrl.u32 %v1115, 7
        %v1117 = vsub.s32 0, %v1116
        %v1118 = vrot.slane %v1104, %v1117
        %v1120 = vadd.f32 %v1111, %v1118
        %v1121 = vadd.f32 %v1112, %v1118
        %v1122 = vadd.f32 %v1113, %v1118
        %v1123 = vpack.c.bf16 %v1121, %v1120
        %v1124 = vpack.c.bf16 %v1122, %v1122
        %v1125 = vld [vmem:[%s751] sm:$0xff]
        %v1126 = vld [vmem:[%s751 + $0x8] sm:$0xff]
        %v1127 = vld [vmem:[%s751 + $0x10] sm:$0xff]
        %v1128 = vld [vmem:[%s751 + $0x18] sm:$0xff]
        %v1129 = vld [vmem:[%s751 + $0x20] sm:$0xff]
        %v1130 = vld [vmem:[%s751 + $0x28] sm:$0xff]
        %v1131 = vld [vmem:[%s751 + $0x30] sm:$0xff]
        %v1132 = vld [vmem:[%s751 + $0x38] sm:$0xff]
        %v1133 = vld [vmem:[%s751 + $0x40] sm:$0xff]
        %v1134 = vld [vmem:[%s751 + $0x48] sm:$0xff]
        %v1135 = vld [vmem:[%s751 + $0x50] sm:$0xff]
        %v1136 = vld [vmem:[%s751 + $0x58] sm:$0xff]
        %v1137 = vld [vmem:[%s751 + $0x60] sm:$0xff]
        %v1138 = vld [vmem:[%s751 + $0x68] sm:$0xff]
        %v1139 = vld [vmem:[%s751 + $0x70] sm:$0xff]
        %v1140 = vld [vmem:[%s751 + $0x78] sm:$0xff]
        %v1141 = vld [vmem:[%s755] sm:$0x3]
        %v1143 = vlaneseq
        %v1144 = vshrl.u32 %v1143, 7
        %v1145 = vsub.s32 0, %v1144
        %v1146 = vrot.slane %v1141, %v1145
        %v1147 = vlaneseq
        %v1148 = vshrl.u32 %v1147, 7
        %v1149 = vsub.s32 1, %v1148
        %v1150 = vrot.slane %v1141, %v1149
        %v1169 = vunpack.c.l.b16 %v1125
        %v1170 = vunpack.c.h.b16 %v1125
        %v1171 = vunpack.c.l.b16 %v1126
        %v1172 = vunpack.c.h.b16 %v1126
        %v1173 = vunpack.c.l.b16 %v1127
        %v1174 = vunpack.c.h.b16 %v1127
        %v1175 = vunpack.c.l.b16 %v1128
        %v1176 = vunpack.c.h.b16 %v1128
        %v1177 = vunpack.c.l.b16 %v1129
        %v1178 = vunpack.c.h.b16 %v1129
        %v1179 = vunpack.c.l.b16 %v1130
        %v1180 = vunpack.c.h.b16 %v1130
        %v1181 = vunpack.c.l.b16 %v1131
        %v1182 = vunpack.c.h.b16 %v1131
        %v1183 = vunpack.c.l.b16 %v1132
        %v1184 = vunpack.c.h.b16 %v1132
        %v1185 = vunpack.c.l.b16 %v1133
        %v1186 = vunpack.c.h.b16 %v1133
        %v1187 = vunpack.c.l.b16 %v1134
        %v1188 = vunpack.c.h.b16 %v1134
        %v1189 = vunpack.c.l.b16 %v1135
        %v1190 = vunpack.c.h.b16 %v1135
        %v1191 = vunpack.c.l.b16 %v1136
        %v1192 = vunpack.c.h.b16 %v1136
        %v1193 = vunpack.c.l.b16 %v1137
        %v1194 = vunpack.c.h.b16 %v1137
        %v1195 = vunpack.c.l.b16 %v1138
        %v1196 = vunpack.c.h.b16 %v1138
        %v1197 = vunpack.c.l.b16 %v1139
        %v1198 = vunpack.c.h.b16 %v1139
        %v1199 = vunpack.c.l.b16 %v1140
        %v1200 = vunpack.c.h.b16 %v1140
        %v1201 = vpack.c.b16 %v1171, %v1169
        %v1202 = vpack.c.b16 %v1172, %v1170
        %v1203 = vpack.c.b16 %v1175, %v1173
        %v1204 = vpack.c.b16 %v1176, %v1174
        %v1205 = vpack.c.b16 %v1179, %v1177
        %v1206 = vpack.c.b16 %v1180, %v1178
        %v1207 = vpack.c.b16 %v1183, %v1181
        %v1208 = vpack.c.b16 %v1184, %v1182
        %v1209 = vpack.c.b16 %v1187, %v1185
        %v1210 = vpack.c.b16 %v1188, %v1186
        %v1211 = vpack.c.b16 %v1191, %v1189
        %v1212 = vpack.c.b16 %v1192, %v1190
        %v1213 = vpack.c.b16 %v1195, %v1193
        %v1214 = vpack.c.b16 %v1196, %v1194
        %v1215 = vpack.c.b16 %v1199, %v1197
        %v1216 = vpack.c.b16 %v1200, %v1198
        %1233 = vmatprep.subr.bf16.mxu0 %v1216
        %1234 = vmatpush1.bf16.msra.mxu0 %v1215
        %1235 = vmatprep.subr.bf16.mxu0 %v1214
        %1236 = vmatpush1.bf16.msra.mxu0 %v1213
        %1237 = vmatprep.subr.bf16.mxu0 %v1212
        %1238 = vmatpush1.bf16.msra.mxu0 %v1211
        %1239 = vmatprep.subr.bf16.mxu0 %v1210
        %1240 = vmatpush1.bf16.msra.mxu0 %v1209
        %1241 = vmatprep.subr.bf16.mxu0 %v1208
        %1242 = vmatpush1.bf16.msra.mxu0 %v1207
        %1243 = vmatprep.subr.bf16.mxu0 %v1206
        %1244 = vmatpush1.bf16.msra.mxu0 %v1205
        %1245 = vmatprep.subr.bf16.mxu0 %v1204
        %1246 = vmatpush1.bf16.msra.mxu0 %v1203
        %1247 = vmatprep.subr.bf16.mxu0 %v1202
        %1248 = vmatpush1.bf16.msra.mxu0 %v1201
        %1249 = vmatprep.subr.bf16.mxu0 0
        %1250 = vmatpush2.bf16.msra.mxu0 0
        %1251 = vmatprep.subr.bf16.mxu0 0
        %1252 = vmatpush2.bf16.msra.mxu0 0
        %1253 = vmatprep.subr.bf16.mxu0 0
        %1254 = vmatpush2.bf16.msra.mxu0 0
        %1255 = vmatprep.subr.bf16.mxu0 0
        %1256 = vmatpush2.bf16.msra.mxu0 0
        %1257 = vmatprep.subr.bf16.mxu0 0
        %1258 = vmatpush2.bf16.msra.mxu0 0
        %1259 = vmatprep.subr.bf16.mxu0 0
        %1260 = vmatpush2.bf16.msra.mxu0 0
        %1261 = vmatprep.subr.bf16.mxu0 0
        %1262 = vmatpush2.bf16.msra.mxu0 0
        %1263 = vmatprep.subr.bf16.mxu0 0
        %1264 = vmatpush2.bf16.msra.mxu0 0
        %1265 = vmatprep.mubr.bf16.mxu0 0
        %1266 = vmatmul.mubr.bf16.gmra.mxu0 %v1123
        %v1267 = vpop.f32.mrf.mxu0
        %v1268 = vadd.f32 %v1146, %v1267
        %v1269 = vpop.f32.mrf.mxu0
        %v1270 = vadd.f32 %v1150, %v1269
        %v1271 = vpop.f32.mrf.mxu0
        %v1272 = vadd.f32 %v1146, %v1271
        %v1273 = vpop.f32.mrf.mxu0
        %v1274 = vadd.f32 %v1150, %v1273
        %1275 = vmatprep.mubr.bf16.mxu0 0
        %1276 = vmatmul.mubr.bf16.gmra.mxu0 %v1124
        %v1277 = vpop.f32.mrf.mxu0
        %v1278 = vadd.f32 %v1146, %v1277
        %v1279 = vpop.f32.mrf.mxu0
        %v1280 = vadd.f32 %v1150, %v1279
        %v1281 = vpop.f32.mrf.mxu0
        %v1282 = vpop.f32.mrf.mxu0
        %1283 = vdwg.mxu0
        %v1284 = vadd.f32 %v780, %v1268
        %v1285 = vadd.f32 %v781, %v1270
        %v1286 = vadd.f32 %v782, %v1272
        %v1287 = vadd.f32 %v783, %v1274
        %v1288 = vadd.f32 %v784, %v1278
        %v1289 = vadd.f32 %v785, %v1280
        %1290 = vst [vmem:[%s760] sm:$0xff] %v1284
        %1291 = vst [vmem:[%s760 + $0x8] sm:$0xff] %v1285
        %1292 = vst [vmem:[%s760 + $0x10] sm:$0xff] %v1286
        %1293 = vst [vmem:[%s760 + $0x18] sm:$0xff] %v1287
        %1294 = vst [vmem:[%s760 + $0x20] sm:$0xf] %v1288
        %1295 = vst [vmem:[%s760 + $0x28] sm:$0xf] %v1289
        %p1296 = scmp.lt.s32.totalorder %s48, 1
        %s1297 = scalar_select %p1296, %s48, 1
        %s1298 = smul.addr %s1297, 6
        %s1299 = smul.addr %s1298, 8
        %s1300 = scalar_lea.vmem %s15, %s1299
        // Predicated region
        $region101: #{deepace_forward.4} parent=71 // pred_check
          %p1301 = pneg %p412
        $region102: #{deepace_forward.4} parent=71 // pred_check_branch
          %1303 = sbr.rel (%p1301) target = $region104
        $region103: #{deepace_forward.4} parent=71 // pred_region
          _
        $region104: #{deepace_forward.4} parent=71 // pred_fallthru
          _
      $region72: #{deepace_forward.4} parent=5 // pred_fallthru
        _
      %p1304 = scmp.le.s32.totalorder 2, %s39
      // Predicated region
      $region105: #{deepace_forward.4} parent=5 // pred_check
        %p1305 = pneg %p1304
      $region106: #{deepace_forward.4} parent=5 // pred_check_branch
        %1307 = sbr.rel (%p1305) target = $region108
      $region107: #{deepace_forward.4} parent=5 // pred_region
        %s1308 = ssub.s32 %s39, 2
        // Predicated region
        $region109: #{deepace_forward.4} parent=107 // pred_check
          %p1309 = pneg %p418
        $region110: #{deepace_forward.4} parent=107 // pred_check_branch
          %1311 = sbr.rel (%p1309) target = $region112
        $region111: #{deepace_forward.4} parent=107 // pred_region
          %p1312 = scmp.lt.s32.totalorder %s50, 1
          %s1313 = scalar_select %p1312, %s50, 1
          %s1314 = smul.addr %s1313, 6
          %s1315 = smul.addr %s1314, 8
          %s1316 = scalar_lea.vmem %s15, %s1315
        $region112: #{deepace_forward.4} parent=107 // pred_fallthru
          _
      $region108: #{deepace_forward.4} parent=5 // pred_fallthru
        _
    $region6: #{deepace_forward.4} parent=1 // loop_footer
      %s43 = sadd.s32 1, %s39
    $region7: #{deepace_forward.4} parent=1 // loop_footer_branch
      %38 = sbr.rel target = $region3
    $region8: #{deepace_forward.4} parent=1 // loop_exit
      _
    %1317 = vsyncpa [#allocation7], 1
    %s1318 = scalar_lea.sflag [#allocation7], 1
    %1319 = vsyncpa %s1318, 1
    %1320 = vsyncpa [#allocation9], 1
    %s1321 = scalar_lea.sflag [#allocation9], 1
    %1322 = vsyncpa %s1321, 1
    %1323 = vsyncpa [#allocation12], 1
    %s1324 = scalar_lea.sflag [#allocation12], 1
    %1325 = vsyncpa %s1324, 1
    %1326 = vsyncpa [#allocation15], 1
    %s1327 = scalar_lea.sflag [#allocation15], 1
    %1328 = vsyncpa %s1327, 1

// kernel: deepace_forward.5
$region0: #{deepace_forward.5}
  #allocation0 [shape = 'u32[]', space=smem, size = 0x4, offset = 0x4, fixed_abs, tag = 'smem constant byte address 0x4 - core index']
  #allocation1 [shape = 'u32[144,128]{1,0:T(1,128)}', space=vmem, size = 0x12000, scoped, tag = 'internal scratch']
  %s0 = inlined_call_operand.vmem [shape: f32[2,20,256], index: 0, kind: input, shape index: {}]
  %s1 = inlined_call_operand.vmem [shape: bf16[2,20,128], index: 1, kind: input, shape index: {}]
  %s2 = inlined_call_operand.vmem [shape: f32[1,128], index: 2, kind: input, shape index: {}]
  %s3 = inlined_call_operand.vmem [shape: bf16[128,128], index: 3, kind: input, shape index: {}]
  %s4 = inlined_call_operand.vmem [shape: f32[1,128], index: 4, kind: input, shape index: {}]
  %s5 = inlined_call_operand.vmem [shape: bf16[128,128], index: 5, kind: input, shape index: {}]
  %s6 = inlined_call_operand.vmem [shape: f32[1,128], index: 6, kind: input, shape index: {}]
  %s7 = inlined_call_operand.vmem [shape: f32[2,20,128], index: 7, kind: output, shape index: {}]
  %s8 = sld [smem:[#allocation0]]
  $region61: #{deepace_forward.5} parent=0
    _
  %s10 = ssub.s32 1, %s8
  %s11 = scalar_select 0, %s10, %s8
  loop: start=0, step=1, limit=4
  $region2: #{deepace_forward.5} parent=0 // loop_pre_header
    _
  $region3: #{deepace_forward.5} parent=0 // loop_header
    %s13 = sphi 0, %s17
    %p14 = scmp.ge.s32.totalorder %s13, 4
    %s23 = sphi 0, %s25
    %s26 = sphi 0, %s23
    %s27 = sphi 0, %s26
    %s43 = sphi 0, %s27
    %s49 = sphi 0, %s51
    %s52 = sphi 0, %s49
    %s53 = sphi 0, %s52
    %s69 = sphi 0, %s53
    %s73 = sphi 0, %s73
    %s75 = sphi 0, %s73
    %s76 = sphi 0, %s75
    %s90 = sphi 0, %s76
    %s94 = sphi 0, %s94
    %s96 = sphi 0, %s94
    %s97 = sphi 0, %s96
    %s111 = sphi 0, %s97
    %s115 = sphi 0, %s115
    %s117 = sphi 0, %s115
    %s118 = sphi 0, %s117
    %s132 = sphi 0, %s118
    %s136 = sphi 0, %s136
    %s138 = sphi 0, %s136
    %s139 = sphi 0, %s138
    %s153 = sphi 0, %s139
    %s157 = sphi 0, %s157
    %s159 = sphi 0, %s157
    %s160 = sphi 0, %s159
    %s174 = sphi 0, %s160
    %s180 = sphi 0, %s182
    %s183 = sphi 0, %s180
    %s184 = sphi 0, %s183
    %s200 = sphi 0, %s184
  $region4: #{deepace_forward.5} parent=0 // loop_header_branch
    %16 = sbr.rel (%p14) target = $region8
  $region5: #{deepace_forward.5} parent=0 // loop_body
    %s18 = ssub.s32 %s13, 1
    %s19 = ssub.s32 %s13, 2
    %s20 = sadd.s32 %s13, 1
    %s21 = ssub.s32 %s13, %s20
    %p22 = scmp.eq.s32.totalorder %s21, 0
    %s24 = sadd.s32 %s23, 1
    %s25 = scalar_select %p22, %s23, %s24
    %p28 = pneg %p22
    %p29 = scmp.eq.s32.totalorder %s13, 1
    %p30 = por %p28, %p29
    %p31 = scmp.ne.s32.totalorder %s23, %s26
    %p32 = scmp.eq.s32.totalorder %s13, 0
    %p33 = por %p31, %p32
    %p34 = scmp.ne.s32.totalorder %s23, %s26
    %p35 = scmp.eq.s32.totalorder %s18, 1
    %p36 = por %p34, %p35
    %p37 = scmp.ne.s32.totalorder %s26, %s27
    %p38 = scmp.eq.s32.totalorder %s18, 0
    %p39 = por %p37, %p38
    %p40 = scmp.ne.s32.totalorder %s26, %s27
    %p41 = scmp.eq.s32.totalorder %s19, 1
    %p42 = por %p40, %p41
    %p44 = scmp.ne.s32.totalorder %s27, %s43
    %p45 = scmp.eq.s32.totalorder %s19, 0
    %p46 = por %p44, %p45
    %s47 = ssub.s32 %s13, %s20
    %p48 = scmp.eq.s32.totalorder %s47, 0
    %s50 = sadd.s32 %s49, 1
    %s51 = scalar_select %p48, %s49, %s50
    %p54 = pneg %p48
    %p55 = scmp.eq.s32.totalorder %s13, 1
    %p56 = por %p54, %p55
    %p57 = scmp.ne.s32.totalorder %s49, %s52
    %p58 = scmp.eq.s32.totalorder %s13, 0
    %p59 = por %p57, %p58
    %p60 = scmp.ne.s32.totalorder %s49, %s52
    %p61 = scmp.eq.s32.totalorder %s18, 1
    %p62 = por %p60, %p61
    %p63 = scmp.ne.s32.totalorder %s52, %s53
    %p64 = scmp.eq.s32.totalorder %s18, 0
    %p65 = por %p63, %p64
    %p66 = scmp.ne.s32.totalorder %s52, %s53
    %p67 = scmp.eq.s32.totalorder %s19, 1
    %p68 = por %p66, %p67
    %p70 = scmp.ne.s32.totalorder %s53, %s69
    %p71 = scmp.eq.s32.totalorder %s19, 0
    %p72 = por %p70, %p71
    %s74 = sadd.s32 %s73, 1
    %p77 = scmp.eq.s32.totalorder %s13, 1
    %p78 = scmp.ne.s32.totalorder %s73, %s75
    %p79 = scmp.eq.s32.totalorder %s13, 0
    %p80 = por %p78, %p79
    %p81 = scmp.ne.s32.totalorder %s73, %s75
    %p82 = scmp.eq.s32.totalorder %s18, 1
    %p83 = por %p81, %p82
    %p84 = scmp.ne.s32.totalorder %s75, %s76
    %p85 = scmp.eq.s32.totalorder %s18, 0
    %p86 = por %p84, %p85
    %p87 = scmp.ne.s32.totalorder %s75, %s76
    %p88 = scmp.eq.s32.totalorder %s19, 1
    %p89 = por %p87, %p88
    %p91 = scmp.ne.s32.totalorder %s76, %s90
    %p92 = scmp.eq.s32.totalorder %s19, 0
    %p93 = por %p91, %p92
    %s95 = sadd.s32 %s94, 1
    %p98 = scmp.eq.s32.totalorder %s13, 1
    %p99 = scmp.ne.s32.totalorder %s94, %s96
    %p100 = scmp.eq.s32.totalorder %s13, 0
    %p101 = por %p99, %p100
    %p102 = scmp.ne.s32.totalorder %s94, %s96
    %p103 = scmp.eq.s32.totalorder %s18, 1
    %p104 = por %p102, %p103
    %p105 = scmp.ne.s32.totalorder %s96, %s97
    %p106 = scmp.eq.s32.totalorder %s18, 0
    %p107 = por %p105, %p106
    %p108 = scmp.ne.s32.totalorder %s96, %s97
    %p109 = scmp.eq.s32.totalorder %s19, 1
    %p110 = por %p108, %p109
    %p112 = scmp.ne.s32.totalorder %s97, %s111
    %p113 = scmp.eq.s32.totalorder %s19, 0
    %p114 = por %p112, %p113
    %s116 = sadd.s32 %s115, 1
    %p119 = scmp.eq.s32.totalorder %s13, 1
    %p120 = scmp.ne.s32.totalorder %s115, %s117
    %p121 = scmp.eq.s32.totalorder %s13, 0
    %p122 = por %p120, %p121
    %p123 = scmp.ne.s32.totalorder %s115, %s117
    %p124 = scmp.eq.s32.totalorder %s18, 1
    %p125 = por %p123, %p124
    %p126 = scmp.ne.s32.totalorder %s117, %s118
    %p127 = scmp.eq.s32.totalorder %s18, 0
    %p128 = por %p126, %p127
    %p129 = scmp.ne.s32.totalorder %s117, %s118
    %p130 = scmp.eq.s32.totalorder %s19, 1
    %p131 = por %p129, %p130
    %p133 = scmp.ne.s32.totalorder %s118, %s132
    %p134 = scmp.eq.s32.totalorder %s19, 0
    %p135 = por %p133, %p134
    %s137 = sadd.s32 %s136, 1
    %p140 = scmp.eq.s32.totalorder %s13, 1
    %p141 = scmp.ne.s32.totalorder %s136, %s138
    %p142 = scmp.eq.s32.totalorder %s13, 0
    %p143 = por %p141, %p142
    %p144 = scmp.ne.s32.totalorder %s136, %s138
    %p145 = scmp.eq.s32.totalorder %s18, 1
    %p146 = por %p144, %p145
    %p147 = scmp.ne.s32.totalorder %s138, %s139
    %p148 = scmp.eq.s32.totalorder %s18, 0
    %p149 = por %p147, %p148
    %p150 = scmp.ne.s32.totalorder %s138, %s139
    %p151 = scmp.eq.s32.totalorder %s19, 1
    %p152 = por %p150, %p151
    %p154 = scmp.ne.s32.totalorder %s139, %s153
    %p155 = scmp.eq.s32.totalorder %s19, 0
    %p156 = por %p154, %p155
    %s158 = sadd.s32 %s157, 1
    %p161 = scmp.eq.s32.totalorder %s13, 1
    %p162 = scmp.ne.s32.totalorder %s157, %s159
    %p163 = scmp.eq.s32.totalorder %s13, 0
    %p164 = por %p162, %p163
    %p165 = scmp.ne.s32.totalorder %s157, %s159
    %p166 = scmp.eq.s32.totalorder %s18, 1
    %p167 = por %p165, %p166
    %p168 = scmp.ne.s32.totalorder %s159, %s160
    %p169 = scmp.eq.s32.totalorder %s18, 0
    %p170 = por %p168, %p169
    %p171 = scmp.ne.s32.totalorder %s159, %s160
    %p172 = scmp.eq.s32.totalorder %s19, 1
    %p173 = por %p171, %p172
    %p175 = scmp.ne.s32.totalorder %s160, %s174
    %p176 = scmp.eq.s32.totalorder %s19, 0
    %p177 = por %p175, %p176
    %s178 = ssub.s32 %s13, %s20
    %p179 = scmp.eq.s32.totalorder %s178, 0
    %s181 = sadd.s32 %s180, 1
    %s182 = scalar_select %p179, %s180, %s181
    %p185 = pneg %p179
    %p186 = scmp.eq.s32.totalorder %s13, 1
    %p187 = por %p185, %p186
    %p188 = scmp.ne.s32.totalorder %s180, %s183
    %p189 = scmp.eq.s32.totalorder %s13, 0
    %p190 = por %p188, %p189
    %p191 = scmp.ne.s32.totalorder %s180, %s183
    %p192 = scmp.eq.s32.totalorder %s18, 1
    %p193 = por %p191, %p192
    %p194 = scmp.ne.s32.totalorder %s183, %s184
    %p195 = scmp.eq.s32.totalorder %s18, 0
    %p196 = por %p194, %p195
    %p197 = scmp.ne.s32.totalorder %s183, %s184
    %p198 = scmp.eq.s32.totalorder %s19, 1
    %p199 = por %p197, %p198
    %p201 = scmp.ne.s32.totalorder %s184, %s200
    %p202 = scmp.eq.s32.totalorder %s19, 0
    %p203 = por %p201, %p202
    %p204 = scmp.le.s32.totalorder 1, %s13
    %p205 = scmp.lt.s32.totalorder %s13, 3
    %p206 = pnand %p204, %p205
    %p207 = pneg %p206
    // Predicated region
    $region9: #{deepace_forward.5} parent=5 // pred_check
      _
    $region10: #{deepace_forward.5} parent=5 // pred_check_branch
      %209 = sbr.rel (%p206) target = $region12
    $region11: #{deepace_forward.5} parent=5 // pred_region
      %s210 = ssub.s32 %s13, 1
      // Predicated region
      $region13: #{deepace_forward.5} parent=11 // pred_check
        %p211 = pneg %p86
      $region14: #{deepace_forward.5} parent=11 // pred_check_branch
        %213 = sbr.rel (%p211) target = $region16
      $region15: #{deepace_forward.5} parent=11 // pred_region
        _
      $region16: #{deepace_forward.5} parent=11 // pred_fallthru
        _
      // Predicated region
      $region17: #{deepace_forward.5} parent=11 // pred_check
        %p214 = pneg %p107
      $region18: #{deepace_forward.5} parent=11 // pred_check_branch
        %216 = sbr.rel (%p214) target = $region20
      $region19: #{deepace_forward.5} parent=11 // pred_region
        _
      $region20: #{deepace_forward.5} parent=11 // pred_fallthru
        _
      // Predicated region
      $region21: #{deepace_forward.5} parent=11 // pred_check
        %p217 = pneg %p128
      $region22: #{deepace_forward.5} parent=11 // pred_check_branch
        %219 = sbr.rel (%p217) target = $region24
      $region23: #{deepace_forward.5} parent=11 // pred_region
        _
      $region24: #{deepace_forward.5} parent=11 // pred_fallthru
        _
      // Predicated region
      $region25: #{deepace_forward.5} parent=11 // pred_check
        %p220 = pneg %p149
      $region26: #{deepace_forward.5} parent=11 // pred_check_branch
        %222 = sbr.rel (%p220) target = $region28
      $region27: #{deepace_forward.5} parent=11 // pred_region
        _
      $region28: #{deepace_forward.5} parent=11 // pred_fallthru
        _
      // Predicated region
      $region29: #{deepace_forward.5} parent=11 // pred_check
        %p223 = pneg %p170
      $region30: #{deepace_forward.5} parent=11 // pred_check_branch
        %225 = sbr.rel (%p223) target = $region32
      $region31: #{deepace_forward.5} parent=11 // pred_region
        _
      $region32: #{deepace_forward.5} parent=11 // pred_fallthru
        _
    $region12: #{deepace_forward.5} parent=5 // pred_fallthru
      _
    %p226 = scmp.lt.s32.totalorder %s13, 2
    // Predicated region
    $region33: #{deepace_forward.5} parent=5 // pred_check
      %p227 = pneg %p226
    $region34: #{deepace_forward.5} parent=5 // pred_check_branch
      %229 = sbr.rel (%p227) target = $region36
    $region35: #{deepace_forward.5} parent=5 // pred_region
      // Predicated region
      $region37: #{deepace_forward.5} parent=35 // pred_check
        %p230 = pneg %p33
      $region38: #{deepace_forward.5} parent=35 // pred_check_branch
        %232 = sbr.rel (%p230) target = $region40
      $region39: #{deepace_forward.5} parent=35 // pred_region
        %p233 = scmp.lt.s32.totalorder %s13, 1
        %s234 = scalar_select %p233, %s13, 1
        %s235 = smul.addr %s234, 6
        %s236 = smul.addr %s235, 8
        %s237 = scalar_lea.vmem %s0, %s236
      $region40: #{deepace_forward.5} parent=35 // pred_fallthru
        _
      // Predicated region
      $region41: #{deepace_forward.5} parent=35 // pred_check
        %p238 = pneg %p59
      $region42: #{deepace_forward.5} parent=35 // pred_check_branch
        %240 = sbr.rel (%p238) target = $region44
      $region43: #{deepace_forward.5} parent=35 // pred_region
        %p241 = scmp.lt.s32.totalorder %s13, 1
        %s242 = scalar_select %p241, %s13, 1
        %s243 = smul.addr %s242, 3
        %s244 = smul.addr %s243, 4
        %s245 = scalar_lea.vmem %s1, %s244
      $region44: #{deepace_forward.5} parent=35 // pred_fallthru
        _
    $region36: #{deepace_forward.5} parent=5 // pred_fallthru
      _
    %p246 = scmp.le.s32.totalorder 1, %s13
    %p247 = scmp.lt.s32.totalorder %s13, 3
    %p248 = pnand %p246, %p247
    %p249 = pneg %p248
    // Predicated region
    $region45: #{deepace_forward.5} parent=5 // pred_check
      _
    $region46: #{deepace_forward.5} parent=5 // pred_check_branch
      %251 = sbr.rel (%p248) target = $region48
    $region47: #{deepace_forward.5} parent=5 // pred_region
      %s252 = ssub.s32 %s13, 1
      %p253 = scmp.lt.s32.totalorder %s18, 1
      %s254 = scalar_select %p253, %s18, 1
      %s255 = smul.addr %s254, 6
      %s256 = smul.addr %s255, 8
      %s257 = scalar_lea.vmem %s0, %s256
      %p258 = pneg %p39
      %p259 = pneg %p36
      %p260 = scmp.lt.s32.totalorder %s18, 1
      %s261 = scalar_select %p260, %s18, 1
      %s262 = smul.addr %s261, 3
      %s263 = smul.addr %s262, 4
      %s264 = scalar_lea.vmem %s1, %s263
      %p265 = pneg %p65
      %p266 = pneg %p62
      %p267 = pneg %p86
      %p268 = pneg %p83
      %p269 = pneg %p107
      %p270 = pneg %p104
      %p271 = pneg %p128
      %p272 = pneg %p125
      %p273 = pneg %p149
      %p274 = pneg %p146
      %p275 = pneg %p170
      %p276 = pneg %p167
      %p277 = pneg %p196
      %p278 = pneg %p193
      %p279 = scmp.lt.s32.totalorder %s18, 1
      %s280 = scalar_select %p279, %s18, 1
      %s281 = smul.addr %s280, 3
      %s282 = smul.addr %s281, 8
      %s283 = scalar_lea.vmem %s7, %s282
      %p284 = scmp.lt.s32.totalorder %s18, 1
      %s285 = scalar_select %p284, %s18, 1
      %s286 = smul.addr %s285, 6
      %s287 = smul.addr %s286, 8
      %s288 = scalar_lea.vmem %s0, %s287
      %p289 = scmp.lt.s32.totalorder %s18, 1
      %s290 = scalar_select %p289, %s18, 1
      %s291 = smul.addr %s290, 3
      %s292 = smul.addr %s291, 4
      %s293 = scalar_lea.vmem %s1, %s292
      %p294 = scmp.lt.s32.totalorder %s18, 1
      %s295 = scalar_select %p294, %s18, 1
      %s296 = smul.addr %s295, 3
      %s297 = smul.addr %s296, 8
      %s298 = scalar_lea.vmem %s7, %s297
      %v300 = vld [vmem:[%s288 + $0x8] sm:$0xff]
      %v301 = vld [vmem:[%s288 + $0x18] sm:$0xff]
      %v302 = vld [vmem:[%s288 + $0x28] sm:$0xf]
      %v303 = vld [vmem:[%s2] sm:$0x1]
      %vm304 = vcmp.ge.f32.partialorder %v300, 0.0
      %vm305 = vcmp.ge.f32.partialorder %v301, 0.0
      %vm306 = vcmp.ge.f32.partialorder %v302, 0.0
      %v308 = vlaneseq
      %v309 = vshrl.u32 %v308, 7
      %v310 = vsub.s32 0, %v309
      %v311 = vrot.slane %v303, %v310
      %v313 = vmul.f32 %v300, %v311
      %v314 = vmul.f32 %v301, %v311
      %v315 = vmul.f32 %v302, %v311
      %v316 = vsel %vm304, %v300, %v313
      %v317 = vsel %vm305, %v301, %v314
      %v318 = vsel %vm306, %v302, %v315
      %v319 = vpack.c.bf16 %v317, %v316
      %v320 = vpack.c.bf16 %v318, %v318
      %v321 = vld [vmem:[%s3] sm:$0xf]
      %v322 = vld [vmem:[%s3 + $0x4] sm:$0xf]
      %v323 = vld [vmem:[%s3 + $0x8] sm:$0xf]
      %v324 = vld [vmem:[%s3 + $0xc] sm:$0xf]
      %v325 = vld [vmem:[%s3 + $0x10] sm:$0xf]
      %v326 = vld [vmem:[%s3 + $0x14] sm:$0xf]
      %v327 = vld [vmem:[%s3 + $0x18] sm:$0xf]
      %v328 = vld [vmem:[%s3 + $0x1c] sm:$0xf]
      %v329 = vld [vmem:[%s3 + $0x20] sm:$0xf]
      %v330 = vld [vmem:[%s3 + $0x24] sm:$0xf]
      %v331 = vld [vmem:[%s3 + $0x28] sm:$0xf]
      %v332 = vld [vmem:[%s3 + $0x2c] sm:$0xf]
      %v333 = vld [vmem:[%s3 + $0x30] sm:$0xf]
      %v334 = vld [vmem:[%s3 + $0x34] sm:$0xf]
      %v335 = vld [vmem:[%s3 + $0x38] sm:$0xf]
      %v336 = vld [vmem:[%s3 + $0x3c] sm:$0xf]
      %v337 = vld [vmem:[%s4] sm:$0x1]
      %v339 = vlaneseq
      %v340 = vshrl.u32 %v339, 7
      %v341 = vsub.s32 0, %v340
      %v342 = vrot.slane %v337, %v341
      %v360 = vunpack.c.l.b16 %v321
      %v361 = vunpack.c.l.b16 %v322
      %v362 = vunpack.c.l.b16 %v323
      %v363 = vunpack.c.l.b16 %v324
      %v364 = vunpack.c.l.b16 %v325
      %v365 = vunpack.c.l.b16 %v326
      %v366 = vunpack.c.l.b16 %v327
      %v367 = vunpack.c.l.b16 %v328
      %v368 = vunpack.c.l.b16 %v329
      %v369 = vunpack.c.l.b16 %v330
      %v370 = vunpack.c.l.b16 %v331
      %v371 = vunpack.c.l.b16 %v332
      %v372 = vunpack.c.l.b16 %v333
      %v373 = vunpack.c.l.b16 %v334
      %v374 = vunpack.c.l.b16 %v335
      %v375 = vunpack.c.l.b16 %v336
      %v376 = vpack.c.b16 %v361, %v360
      %v377 = vpack.c.b16 %v363, %v362
      %v378 = vpack.c.b16 %v365, %v364
      %v379 = vpack.c.b16 %v367, %v366
      %v380 = vpack.c.b16 %v369, %v368
      %v381 = vpack.c.b16 %v371, %v370
      %v382 = vpack.c.b16 %v373, %v372
      %v383 = vpack.c.b16 %v375, %v374
      %392 = vmatprep.subr.bf16.mxu0 0
      %393 = vmatpush1.bf16.msra.mxu0 %v383
      %394 = vmatprep.subr.bf16.mxu0 0
      %395 = vmatpush1.bf16.msra.mxu0 %v382
      %396 = vmatprep.subr.bf16.mxu0 0
      %397 = vmatpush1.bf16.msra.mxu0 %v381
      %398 = vmatprep.subr.bf16.mxu0 0
      %399 = vmatpush1.bf16.msra.mxu0 %v380
      %400 = vmatprep.subr.bf16.mxu0 0
      %401 = vmatpush1.bf16.msra.mxu0 %v379
      %402 = vmatprep.subr.bf16.mxu0 0
      %403 = vmatpush1.bf16.msra.mxu0 %v378
      %404 = vmatprep.subr.bf16.mxu0 0
      %405 = vmatpush1.bf16.msra.mxu0 %v377
      %406 = vmatprep.subr.bf16.mxu0 0
      %407 = vmatpush1.bf16.msra.mxu0 %v376
      %408 = vmatprep.subr.bf16.mxu0 0
      %409 = vmatpush2.bf16.msra.mxu0 0
      %410 = vmatprep.subr.bf16.mxu0 0
      %411 = vmatpush2.bf16.msra.mxu0 0
      %412 = vmatprep.subr.bf16.mxu0 0
      %413 = vmatpush2.bf16.msra.mxu0 0
      %414 = vmatprep.subr.bf16.mxu0 0
      %415 = vmatpush2.bf16.msra.mxu0 0
      %416 = vmatprep.subr.bf16.mxu0 0
      %417 = vmatpush2.bf16.msra.mxu0 0
      %418 = vmatprep.subr.bf16.mxu0 0
      %419 = vmatpush2.bf16.msra.mxu0 0
      %420 = vmatprep.subr.bf16.mxu0 0
      %421 = vmatpush2.bf16.msra.mxu0 0
      %422 = vmatprep.subr.bf16.mxu0 0
      %423 = vmatpush2.bf16.msra.mxu0 0
      %424 = vmatprep.mubr.bf16.mxu0 0
      %425 = vmatmul.mubr.bf16.gmra.mxu0 %v319
      %v426 = vpop.f32.mrf.mxu0
      %v427 = vadd.f32 %v342, %v426
      %v428 = vpop.f32.mrf.mxu0
      %v429 = vpop.f32.mrf.mxu0
      %v430 = vadd.f32 %v342, %v429
      %v431 = vpop.f32.mrf.mxu0
      %432 = vmatprep.mubr.bf16.mxu0 0
      %433 = vmatmul.mubr.bf16.gmra.mxu0 %v320
      %v434 = vpop.f32.mrf.mxu0
      %v435 = vadd.f32 %v342, %v434
      %v436 = vpop.f32.mrf.mxu0
      %v437 = vpop.f32.mrf.mxu0
      %v438 = vpop.f32.mrf.mxu0
      %439 = vdwg.mxu0
      %v440 = vxor.u32 %v427, 2147483648
      %v441 = vxor.u32 %v430, 2147483648
      %v442 = vxor.u32 %v435, 2147483648
      %v443 = vmul.f32 %v440, 1.442695
      %v444 = vpow.pop %v443
      %v445 = vmul.f32 %v441, 1.442695
      %v446 = vpow.pop %v445
      %v447 = vmul.f32 %v442, 1.442695
      %v448 = vpow.pop %v447
      %v449 = vadd.f32 %v444, 1.0
      %v450 = vadd.f32 %v446, 1.0
      %v451 = vadd.f32 %v448, 1.0
      %v452 = vrcp.pop %v449
      %v453 = vmul.f32 1.0, %v452
      %v454 = vrcp.pop %v450
      %v455 = vmul.f32 1.0, %v454
      %v456 = vrcp.pop %v451
      %v457 = vmul.f32 1.0, %v456
      %v458 = vld [vmem:[%s293] sm:$0xf]
      %v459 = vld [vmem:[%s293 + $0x4] sm:$0xf]
      %v460 = vld [vmem:[%s293 + $0x8] sm:$0x3]
      %v461 = vunpack.c.l.bf16 %v458
      %v462 = vunpack.c.l.bf16 %v459
      %v463 = vunpack.c.l.bf16 %v460
      %v464 = vmul.f32 %v461, %v453
      %v465 = vmul.f32 %v462, %v455
      %v466 = vmul.f32 %v463, %v457
      %v467 = vpack.c.bf16 %v465, %v464
      %v468 = vpack.c.bf16 %v466, %v466
      %v469 = vld [vmem:[%s5] sm:$0xf]
      %v470 = vld [vmem:[%s5 + $0x4] sm:$0xf]
      %v471 = vld [vmem:[%s5 + $0x8] sm:$0xf]
      %v472 = vld [vmem:[%s5 + $0xc] sm:$0xf]
      %v473 = vld [vmem:[%s5 + $0x10] sm:$0xf]
      %v474 = vld [vmem:[%s5 + $0x14] sm:$0xf]
      %v475 = vld [vmem:[%s5 + $0x18] sm:$0xf]
      %v476 = vld [vmem:[%s5 + $0x1c] sm:$0xf]
      %v477 = vld [vmem:[%s5 + $0x20] sm:$0xf]
      %v478 = vld [vmem:[%s5 + $0x24] sm:$0xf]
      %v479 = vld [vmem:[%s5 + $0x28] sm:$0xf]
      %v480 = vld [vmem:[%s5 + $0x2c] sm:$0xf]
      %v481 = vld [vmem:[%s5 + $0x30] sm:$0xf]
      %v482 = vld [vmem:[%s5 + $0x34] sm:$0xf]
      %v483 = vld [vmem:[%s5 + $0x38] sm:$0xf]
      %v484 = vld [vmem:[%s5 + $0x3c] sm:$0xf]
      %v501 = vunpack.c.l.b16 %v469
      %v502 = vunpack.c.l.b16 %v470
      %v503 = vunpack.c.l.b16 %v471
      %v504 = vunpack.c.l.b16 %v472
      %v505 = vunpack.c.l.b16 %v473
      %v506 = vunpack.c.l.b16 %v474
      %v507 = vunpack.c.l.b16 %v475
      %v508 = vunpack.c.l.b16 %v476
      %v509 = vunpack.c.l.b16 %v477
      %v510 = vunpack.c.l.b16 %v478
      %v511 = vunpack.c.l.b16 %v479
      %v512 = vunpack.c.l.b16 %v480
      %v513 = vunpack.c.l.b16 %v481
      %v514 = vunpack.c.l.b16 %v482
      %v515 = vunpack.c.l.b16 %v483
      %v516 = vunpack.c.l.b16 %v484
      %v517 = vpack.c.b16 %v502, %v501
      %v518 = vpack.c.b16 %v504, %v503
      %v519 = vpack.c.b16 %v506, %v505
      %v520 = vpack.c.b16 %v508, %v507
      %v521 = vpack.c.b16 %v510, %v509
      %v522 = vpack.c.b16 %v512, %v511
      %v523 = vpack.c.b16 %v514, %v513
      %v524 = vpack.c.b16 %v516, %v515
      %533 = vmatprep.subr.bf16.mxu0 0
      %534 = vmatpush1.bf16.msra.mxu0 %v524
      %535 = vmatprep.subr.bf16.mxu0 0
      %536 = vmatpush1.bf16.msra.mxu0 %v523
      %537 = vmatprep.subr.bf16.mxu0 0
      %538 = vmatpush1.bf16.msra.mxu0 %v522
      %539 = vmatprep.subr.bf16.mxu0 0
      %540 = vmatpush1.bf16.msra.mxu0 %v521
      %541 = vmatprep.subr.bf16.mxu0 0
      %542 = vmatpush1.bf16.msra.mxu0 %v520
      %543 = vmatprep.subr.bf16.mxu0 0
      %544 = vmatpush1.bf16.msra.mxu0 %v519
      %545 = vmatprep.subr.bf16.mxu0 0
      %546 = vmatpush1.bf16.msra.mxu0 %v518
      %547 = vmatprep.subr.bf16.mxu0 0
      %548 = vmatpush1.bf16.msra.mxu0 %v517
      %549 = vmatprep.subr.bf16.mxu0 0
      %550 = vmatpush2.bf16.msra.mxu0 0
      %551 = vmatprep.subr.bf16.mxu0 0
      %552 = vmatpush2.bf16.msra.mxu0 0
      %553 = vmatprep.subr.bf16.mxu0 0
      %554 = vmatpush2.bf16.msra.mxu0 0
      %555 = vmatprep.subr.bf16.mxu0 0
      %556 = vmatpush2.bf16.msra.mxu0 0
      %557 = vmatprep.subr.bf16.mxu0 0
      %558 = vmatpush2.bf16.msra.mxu0 0
      %559 = vmatprep.subr.bf16.mxu0 0
      %560 = vmatpush2.bf16.msra.mxu0 0
      %561 = vmatprep.subr.bf16.mxu0 0
      %562 = vmatpush2.bf16.msra.mxu0 0
      %563 = vmatprep.subr.bf16.mxu0 0
      %564 = vmatpush2.bf16.msra.mxu0 0
      %565 = vmatprep.mubr.bf16.mxu0 0
      %566 = vmatmul.mubr.bf16.gmra.mxu0 %v467
      %v567 = vpop.f32.mrf.mxu0
      %v568 = vadd.f32 0.0, %v567
      %v569 = vpop.f32.mrf.mxu0
      %v570 = vpop.f32.mrf.mxu0
      %v571 = vadd.f32 0.0, %v570
      %v572 = vpop.f32.mrf.mxu0
      %573 = vmatprep.mubr.bf16.mxu0 0
      %574 = vmatmul.mubr.bf16.gmra.mxu0 %v468
      %v575 = vpop.f32.mrf.mxu0
      %v576 = vadd.f32 0.0, %v575
      %v577 = vpop.f32.mrf.mxu0
      %v578 = vpop.f32.mrf.mxu0
      %v579 = vpop.f32.mrf.mxu0
      %580 = vdwg.mxu0
      %v581 = vld [vmem:[%s6] sm:$0x1]
      %v583 = vlaneseq
      %v584 = vshrl.u32 %v583, 7
      %v585 = vsub.s32 0, %v584
      %v586 = vrot.slane %v581, %v585
      %v588 = vmul.f32 %v568, %v586
      %v589 = vmul.f32 %v571, %v586
      %v590 = vmul.f32 %v576, %v586
      %v591 = vmax.f32 %v588, 1e-06
      %v592 = vmax.f32 %v589, 1e-06
      %v593 = vmax.f32 %v590, 1e-06
      %v594 = vmin.f32 %v591, 1.0
      %v595 = vmin.f32 %v592, 1.0
      %v596 = vmin.f32 %v593, 1.0
      %597 = vst [vmem:[%s298] sm:$0xff] %v594
      %598 = vst [vmem:[%s298 + $0x8] sm:$0xff] %v595
      %599 = vst [vmem:[%s298 + $0x10] sm:$0xf] %v596
      %p600 = scmp.lt.s32.totalorder %s18, 1
      %s601 = scalar_select %p600, %s18, 1
      %s602 = smul.addr %s601, 3
      %s603 = smul.addr %s602, 8
      %s604 = scalar_lea.vmem %s7, %s603
      // Predicated region
      $region49: #{deepace_forward.5} parent=47 // pred_check
        %p605 = pneg %p193
      $region50: #{deepace_forward.5} parent=47 // pred_check_branch
        %607 = sbr.rel (%p605) target = $region52
      $region51: #{deepace_forward.5} parent=47 // pred_region
        _
      $region52: #{deepace_forward.5} parent=47 // pred_fallthru
        _
    $region48: #{deepace_forward.5} parent=5 // pred_fallthru
      _
    %p608 = scmp.le.s32.totalorder 2, %s13
    // Predicated region
    $region53: #{deepace_forward.5} parent=5 // pred_check
      %p609 = pneg %p608
    $region54: #{deepace_forward.5} parent=5 // pred_check_branch
      %611 = sbr.rel (%p609) target = $region56
    $region55: #{deepace_forward.5} parent=5 // pred_region
      %s612 = ssub.s32 %s13, 2
      // Predicated region
      $region57: #{deepace_forward.5} parent=55 // pred_check
        %p613 = pneg %p199
      $region58: #{deepace_forward.5} parent=55 // pred_check_branch
        %615 = sbr.rel (%p613) target = $region60
      $region59: #{deepace_forward.5} parent=55 // pred_region
        %p616 = scmp.lt.s32.totalorder %s19, 1
        %s617 = scalar_select %p616, %s19, 1
        %s618 = smul.addr %s617, 3
        %s619 = smul.addr %s618, 8
        %s620 = scalar_lea.vmem %s7, %s619
      $region60: #{deepace_forward.5} parent=55 // pred_fallthru
        _
    $region56: #{deepace_forward.5} parent=5 // pred_fallthru
      _
  $region6: #{deepace_forward.5} parent=0 // loop_footer
    %s17 = sadd.s32 1, %s13
  $region7: #{deepace_forward.5} parent=0 // loop_footer_branch
    %12 = sbr.rel target = $region3
  $region8: #{deepace_forward.5} parent=0 // loop_exit
    _

</llo_original>
